<compile_context>
chip_gen: v7x
topology: tpu7x:2x2x1
jax: 0.10.0
libtpu: 0.0.40
codegen_flags: <defaults>
</compile_context>

<pallas_src>
import functools
import math

import numpy as np
import jax
import jax.numpy as jnp
from jax import lax
from jax.experimental import pallas as pl
from jax.experimental.pallas import tpu as pltpu


# ----------------------------------------------------------------------------
# Autoregressive conv masks (numpy ports of channel_mask / create_conv_mask)
# ----------------------------------------------------------------------------
def _channel_mask(c_in, g_in, c_out, zero_diag):
    assert c_in % c_out == 0 or c_out % c_in == 0, "%d - %d" % (c_in, c_out)
    assert g_in == 1 or g_in == c_in
    if g_in == 1:
        mask = np.ones((c_out, c_in), np.float32)
        if c_out >= c_in:
            ratio = c_out // c_in
            for i in range(c_in):
                mask[i * ratio:(i + 1) * ratio, i + 1:] = 0
                if zero_diag:
                    mask[i * ratio:(i + 1) * ratio, i:i + 1] = 0
        else:
            ratio = c_in // c_out
            for i in range(c_out):
                mask[i:i + 1, (i + 1) * ratio:] = 0
                if zero_diag:
                    mask[i:i + 1, i * ratio:(i + 1) * ratio] = 0
    else:  # g_in == c_in (depthwise)
        mask = np.ones((c_out, c_in // g_in), np.float32)
        if zero_diag:
            mask = 0.0 * mask
    return mask


def _create_conv_mask(kernel_size, c_in, g_in, c_out, zero_diag, mirror):
    m = (kernel_size - 1) // 2
    mask = np.ones((c_out, c_in // g_in, kernel_size, kernel_size), np.float32)
    mask[:, :, m:, :] = 0
    mask[:, :, m, :m] = 1
    mask[:, :, m, m] = _channel_mask(c_in, g_in, c_out, zero_diag)
    if mirror:
        mask = mask[:, :, ::-1, ::-1].copy()
    return mask


def _normalize_weight(weight, mask, coeff=1.0):
    """ARConv2d weight-norm at init: log_weight_norm = log(||W*mask|| + 0.01)
    (ELUConv additionally adds log(weight_init_coeff))."""
    wm = weight * mask
    wn = jnp.sqrt(jnp.sum(wm * wm, axis=(1, 2, 3), keepdims=True))
    log_wn = jnp.log(wn + 0.01) + math.log(coeff)
    return jnp.exp(log_wn) * wm / (wn + 1e-5)


# ----------------------------------------------------------------------------
# One-time weight packing (host-side numpy; amortized outside the hot path)
# ----------------------------------------------------------------------------
def pack_params(params, *, B, W, dil=1, k=5, mirror=False):
    """Turn the masked convs into kernel-ready block-Toeplitz / banded / block-
    diagonal matmul operands for the batch-on-lanes (H, B*W*C) layout."""
    w1 = np.asarray(params["w1"], np.float32)    # (3, 3, Cz, Hd)  HWIO, masked
    w2 = np.asarray(params["w2"], np.float32)    # (k, k, 1,  Hd)  HWIO, masked
    wmu = np.asarray(params["wmu"], np.float32)  # (1, 1, Hd, Cz)  HWIO, masked
    bmu = np.asarray(params["bmu"], np.float32)  # (Cz,)
    Cz, Hd = w1.shape[2], w1.shape[3]
    pad2 = dil * (k - 1) // 2

    # Static AR-mask structure: pruning all-zero kernel rows is exact because
    # the weights are already multiplied by the mask.
    mask1 = _create_conv_mask(3, Cz, 1, Hd, zero_diag=True, mirror=mirror)
    mask2 = _create_conv_mask(k, Hd, Hd, Hd, zero_diag=False, mirror=mirror)
    dys1 = tuple(d for d in range(3) if mask1[:, :, d, :].any())
    dys2 = tuple(d for d in range(k) if mask2[:, :, d, :].any())
    if not dys1 or not dys2:
        raise ValueError("degenerate AR mask: no active kernel rows")

    # conv1 (masked 3x3, pad=1): block-Toeplitz, batch-block-diagonal, with the
    # active kernel rows stacked along K so the kernel does ONE matmul.
    blocks = []
    for dy in dys1:
        blk = np.zeros((W, Cz, W, Hd), np.float32)
        for wout in range(W):
            for dx in range(3):
                win = wout + dx - 1
                if 0 <= win < W:
                    blk[win, :, wout, :] += w1[dy, dx]
        blocks.append(np.kron(np.eye(B, dtype=np.float32),
                              blk.reshape(W * Cz, W * Hd)))
    t_mat = np.concatenate(blocks, axis=0)        # (len(dys1)*B*W*Cz, B*W*Hd)

    # depthwise kxk (masked, dilated): banded matrices shared across the batch,
    # one per active kernel row (horizontal zero-padding absorbed).
    eye_hd = np.eye(Hd, dtype=np.float32)
    dmats = []
    for dy in dys2:
        blk = np.zeros((W, Hd, W, Hd), np.float32)
        for wout in range(W):
            for dx in range(k):
                win = wout + dx * dil - pad2
                if 0 <= win < W:
                    blk[win, :, wout, :] += eye_hd * w2[dy, dx, 0][None, :]
        dmats.append(blk.reshape(W * Hd, W * Hd))
    d_mat = np.stack(dmats)                       # (len(dys2), W*Hd, W*Hd)

    # mu head (masked 1x1 + bias): block-diagonal over (batch, width).
    wmu_mat = np.kron(np.eye(B * W, dtype=np.float32), wmu[0, 0])  # (B*W*Hd, B*W*Cz)
    bmu_row = np.tile(bmu, B * W)[None, :]                          # (1, B*W*Cz)

    return {
        "t_mat": jnp.asarray(t_mat, jnp.bfloat16),
        "d_mat": jnp.asarray(d_mat, jnp.bfloat16),
        "wmu_mat": jnp.asarray(wmu_mat, jnp.bfloat16),
        "bmu_row": jnp.asarray(bmu_row, jnp.float32),
        "dys1": dys1, "dys2": dys2,
        "B": B, "W": W, "Cz": Cz, "Hd": Hd, "dil": dil, "pad2": pad2,
    }


# ----------------------------------------------------------------------------
# Fused Pallas kernel
# ----------------------------------------------------------------------------
def _elu(x):
    # nn.ELU(alpha=1): x if x > 0 else exp(x) - 1
    return jnp.where(x > 0, x, jnp.exp(jnp.minimum(x, 0.0)) - 1.0)


def _cellar_fused_kernel(z_ref, t_ref, d_ref, wmu_ref, bmu_ref, o_ref,
                         xp_ref, hp_ref, *,
                         H, B, WH, dil, pad2, dys1, dys2):
    f32, bf16 = jnp.float32, jnp.bfloat16

    # --- conv1 input raster: zero only the 2 halo rows, interior = z ---------
    zrow = jnp.zeros((1, xp_ref.shape[1]), xp_ref.dtype)
    xp_ref[pl.ds(0, 1), :] = zrow
    xp_ref[pl.ds(H + 1, 1), :] = zrow
    xp_ref[pl.ds(1, H), :] = z_ref[...]

    # --- conv1 (masked 3x3, pad=1): ONE MXU matmul, dy rows stacked along K --
    lhs1 = jnp.concatenate([xp_ref[pl.ds(dy, H), :] for dy in dys1],
                           axis=-1).astype(bf16)                       # (H, n1*B*W*Cz)
    h1 = _elu(jnp.dot(lhs1, t_ref[...], preferred_element_type=f32))   # (H, B*W*Hd)

    # --- padded hidden raster (bf16): zero only the 2*pad2 halo rows ---------
    zrows = jnp.zeros((pad2, hp_ref.shape[1]), hp_ref.dtype)
    hp_ref[pl.ds(0, pad2), :] = zrows
    hp_ref[pl.ds(H + pad2, pad2), :] = zrows
    hp_ref[pl.ds(pad2, H), :] = h1.astype(bf16)

    # --- masked dilated depthwise conv as banded MXU matmuls -----------------
    # Per-batch lane slices start at multiples of WH (= W*Hd, a multiple of 128
    # at these sizes), so no unaligned lane slicing / relayouts.
    halves = []
    for b in range(B):
        acc = None
        for i, dy in enumerate(dys2):
            sub = hp_ref[pl.ds(dy * dil, H), pl.ds(b * WH, WH)]        # (H, WH) bf16
            term = jnp.dot(sub, d_ref[i], preferred_element_type=f32)
            acc = term if acc is None else acc + term
        # ELU (end of ARInvertedResidual) then ELU (inside ELUConv mu head)
        halves.append(_elu(_elu(acc)).astype(bf16))
    s = jnp.concatenate(halves, axis=-1)                               # (H, B*W*Hd)

    # --- mu head: masked 1x1 conv (+bias); new_z = z - mu --------------------
    mu = jnp.dot(s, wmu_ref[...], preferred_element_type=f32) + bmu_ref[...]
    o_ref[...] = (z_ref[...] - mu).astype(o_ref.dtype)


# ----------------------------------------------------------------------------
# Wrapper
# ----------------------------------------------------------------------------
@functools.partial(
    jax.jit,
    static_argnames=("H", "B", "W", "Cz", "Hd", "dil", "pad2", "dys1", "dys2"))
def _cell_ar_call(z, t_mat, d_mat, wmu_mat, bmu_row, *,
                  H, B, W, Cz, Hd, dil, pad2, dys1, dys2):
    BWC, BWH, WH = B * W * Cz, B * W * Hd, W * Hd
    n1, n2 = len(dys1), len(dys2)

    # NCHW -> batch-on-lanes packed layout (H, B*W*Cz); 128 lanes for the test
    # sizes, so every kernel load/store is a full (unmasked) vreg.
    zp = jnp.transpose(z.astype(jnp.float32), (2, 0, 3, 1)).reshape(H, BWC)

    kern = functools.partial(_cellar_fused_kernel, H=H, B=B, WH=WH,
                             dil=dil, pad2=pad2, dys1=dys1, dys2=dys2)

    op = pl.pallas_call(
        kern,
        out_shape=jax.ShapeDtypeStruct((H, BWC), jnp.float32),
        grid=(1,),
        in_specs=[
            pl.BlockSpec((H, BWC), lambda i: (0, 0)),           # z (packed)
            pl.BlockSpec((n1 * BWC, BWH), lambda i: (0, 0)),    # conv1 Toeplitz
            pl.BlockSpec((n2, WH, WH), lambda i: (0, 0, 0)),    # depthwise bands
            pl.BlockSpec((BWH, BWC), lambda i: (0, 0)),         # mu block-diag
            pl.BlockSpec((1, BWC), lambda i: (0, 0)),           # mu bias
        ],
        out_specs=pl.BlockSpec((H, BWC), lambda i: (0, 0)),
        scratch_shapes=[
            pltpu.VMEM((H + 2, BWC), jnp.float32),              # conv1 row-padded z
            pltpu.VMEM((H + 2 * pad2, BWH), jnp.bfloat16),      # row-padded hidden
        ],
        compiler_params=pltpu.CompilerParams(
            dimension_semantics=("arbitrary",)),
    )(zp, t_mat, d_mat, wmu_mat, bmu_row)

    new_z = jnp.transpose(op.reshape(H, B, W, Cz), (1, 3, 0, 2)).astype(z.dtype)
    return new_z, jnp.zeros_like(new_z)


def cell_ar_forward(z, ftr, packed):
    """CellAR.forward(z, ftr) -> (new_z, log_det).  NCHW in, NCHW out."""
    del ftr  # CellAR hands ftr to ARInvertedResidual, which ignores it.
    B, Cz, H, W = z.shape
    assert B == packed["B"] and W == packed["W"] and Cz == packed["Cz"]
    return _cell_ar_call(
        z, packed["t_mat"], packed["d_mat"], packed["wmu_mat"], packed["bmu_row"],
        H=H, B=B, W=W, Cz=Cz, Hd=packed["Hd"], dil=packed["dil"],
        pad2=packed["pad2"], dys1=packed["dys1"], dys2=packed["dys2"])


# ----------------------------------------------------------------------------
# Deterministic parameter construction (matches CellAR / ARConv2d shapes)
# ----------------------------------------------------------------------------
def init_params(key, num_z, *, ex=6, k=5, mirror=False):
    hidden = int(round(num_z * ex))
    k1, k2, k3, k4 = jax.random.split(key, 4)

    # conv1: ARConv2d(num_z, hidden, 3, padding=1, masked=True, zero_diag=True)
    b1 = 1.0 / math.sqrt(num_z * 9)
    w1_raw = jax.random.uniform(k1, (hidden, num_z, 3, 3), jnp.float32, -b1, b1)
    m1 = jnp.asarray(_create_conv_mask(3, num_z, 1, hidden, True, mirror))
    w1 = _normalize_weight(w1_raw, m1)

    # conv2: ARConv2d(hidden, hidden, k, groups=hidden, masked=True, zero_diag=False)
    b2 = 1.0 / math.sqrt(k * k)
    w2_raw = jax.random.uniform(k2, (hidden, 1, k, k), jnp.float32, -b2, b2)
    m2 = jnp.asarray(_create_conv_mask(k, hidden, hidden, hidden, False, mirror))
    w2 = _normalize_weight(w2_raw, m2)

    # mu head: ELUConv -> ARConv2d(hidden, num_z, 1, bias=True, masked=True,
    #          zero_diag=False), log_weight_norm += log(0.1)
    b3 = 1.0 / math.sqrt(hidden)
    wmu_raw = jax.random.uniform(k3, (num_z, hidden, 1, 1), jnp.float32, -b3, b3)
    m3 = jnp.asarray(_create_conv_mask(1, hidden, 1, num_z, False, mirror))
    wmu = _normalize_weight(wmu_raw, m3, coeff=0.1)
    bmu = jax.random.uniform(k4, (num_z,), jnp.float32, -b3, b3)

    # PyTorch OIHW -> HWIO
    return {
        "w1": jnp.transpose(w1, (2, 3, 1, 0)),
        "w2": jnp.transpose(w2, (2, 3, 1, 0)),
        "wmu": jnp.transpose(wmu, (2, 3, 1, 0)),
        "bmu": bmu,
    }


# ----------------------------------------------------------------------------
# Pure-JAX reference (for correctness check)
# ----------------------------------------------------------------------------
def _reference(z, params, *, dil, k):
    w1, w2, wmu, bmu = params["w1"], params["w2"], params["wmu"], params["bmu"]
    Hd = w2.shape[-1]
    x = jnp.transpose(z.astype(jnp.float32), (0, 2, 3, 1))
    h1 = jax.nn.elu(lax.conv_general_dilated(
        x, w1, (1, 1), ((1, 1), (1, 1)),
        dimension_numbers=("NHWC", "HWIO", "NHWC")))
    pad = dil * (k - 1) // 2
    h2 = jax.nn.elu(lax.conv_general_dilated(
        h1, w2, (1, 1), ((pad, pad), (pad, pad)), rhs_dilation=(dil, dil),
        dimension_numbers=("NHWC", "HWIO", "NHWC"), feature_group_count=Hd))
    s = jax.nn.elu(h2)
    mu = lax.conv_general_dilated(
        s, wmu, (1, 1), ((0, 0), (0, 0)),
        dimension_numbers=("NHWC", "HWIO", "NHWC")) + bmu
    new_z = z - jnp.transpose(mu, (0, 3, 1, 2))
    return new_z, jnp.zeros_like(new_z)


if __name__ == "__main__":
    key = jax.random.PRNGKey(0)
    num_z, num_ftr, num_c = 4, 8, 8          # CellAR(num_z, num_ftr, num_c, ...)
    B, H, W = 2, 16, 16
    k, dil, mirror = 5, 1, False

    kp, kz, kf = jax.random.split(key, 3)
    params = init_params(kp, num_z, ex=6, k=k, mirror=mirror)

    z = jax.random.normal(kz, (B, num_z, H, W), jnp.float32)       # NCHW like PyTorch
    ftr = jax.random.normal(kf, (B, num_ftr, H, W), jnp.float32)   # unused by forward

    packed = pack_params(params, B=B, W=W, dil=dil, k=k, mirror=mirror)

    new_z, log_det = cell_ar_forward(z, ftr, packed)
    new_z = jax.block_until_ready(new_z)

    assert new_z.shape == (B, num_z, H, W), new_z.shape
    assert log_det.shape == (B, num_z, H, W), log_det.shape

    ref_z, ref_ld = _reference(z, params, dil=dil, k=k)
    # bf16 MXU operands (f32 accumulation) -> loosen tolerance vs f32 reference.
    np.testing.assert_allclose(np.asarray(new_z), np.asarray(ref_z),
                               rtol=2e-2, atol=2e-2)
    np.testing.assert_allclose(np.asarray(log_det), np.asarray(ref_ld))

    print("KERNEL_OK")
</pallas_src>

<mosaic_0001>
module attributes {stable_mosaic.version = 11 : i64} {
  func.func @_cellar_fused_kernel(%arg0: i32, %arg1: memref<16x128xf32, #tpu.memory_space<vmem>>, %arg2: memref<256x768xbf16, #tpu.memory_space<vmem>>, %arg3: memref<3x384x384xbf16, #tpu.memory_space<vmem>>, %arg4: memref<768x128xbf16, #tpu.memory_space<vmem>>, %arg5: memref<1x128xf32, #tpu.memory_space<vmem>>, %arg6: memref<16x128xf32, #tpu.memory_space<vmem>>, %arg7: memref<18x128xf32, #tpu.memory_space<vmem>>, %arg8: memref<20x768xbf16, #tpu.memory_space<vmem>>) attributes {dimension_semantics = [#tpu.dimension_semantics<arbitrary>], iteration_bounds = array<i64: 1>, scalar_prefetch = 0 : i64, scratch_operands = 2 : i64, tpu.core_type = #tpu.core_type<tc>, window_params = [{pipeline_mode = #tpu.pipeline_mode<synchronous>, transform_indices = @transform_0, window_bounds = array<i64: 16, 128>}, {pipeline_mode = #tpu.pipeline_mode<synchronous>, transform_indices = @transform_1, window_bounds = array<i64: 256, 768>}, {pipeline_mode = #tpu.pipeline_mode<synchronous>, transform_indices = @transform_2, window_bounds = array<i64: 3, 384, 384>}, {pipeline_mode = #tpu.pipeline_mode<synchronous>, transform_indices = @transform_3, window_bounds = array<i64: 768, 128>}, {pipeline_mode = #tpu.pipeline_mode<synchronous>, transform_indices = @transform_4, window_bounds = array<i64: 1, 128>}, {pipeline_mode = #tpu.pipeline_mode<synchronous>, transform_indices = @transform_5, window_bounds = array<i64: 16, 128>}]} {
    %cst = arith.constant 0.000000e+00 : f32
    %0 = vector.broadcast %cst : f32 to vector<1x128xf32>
    %c0 = arith.constant 0 : index
    %c0_0 = arith.constant 0 : index
    %1 = vector.load %arg7[%c0, %c0_0] : memref<18x128xf32, #tpu.memory_space<vmem>>, vector<1x128xf32>
    tpu.vector_store %arg7[%c0, %c0_0], %0 {strides = array<i32>} : memref<18x128xf32, #tpu.memory_space<vmem>>, vector<1x128xf32>,
    %c17 = arith.constant 17 : index
    %c0_1 = arith.constant 0 : index
    %2 = vector.load %arg7[%c17, %c0_1] : memref<18x128xf32, #tpu.memory_space<vmem>>, vector<1x128xf32>
    tpu.vector_store %arg7[%c17, %c0_1], %0 {strides = array<i32>} : memref<18x128xf32, #tpu.memory_space<vmem>>, vector<1x128xf32>,
    %c0_2 = arith.constant 0 : index
    %c0_3 = arith.constant 0 : index
    %3 = vector.load %arg1[%c0_2, %c0_3] : memref<16x128xf32, #tpu.memory_space<vmem>>, vector<16x128xf32>
    %c1 = arith.constant 1 : index
    %c0_4 = arith.constant 0 : index
    %4 = vector.load %arg7[%c1, %c0_4] : memref<18x128xf32, #tpu.memory_space<vmem>>, vector<16x128xf32>
    tpu.vector_store %arg7[%c1, %c0_4], %3 {strides = array<i32>} : memref<18x128xf32, #tpu.memory_space<vmem>>, vector<16x128xf32>,
    %c0_5 = arith.constant 0 : index
    %c0_6 = arith.constant 0 : index
    %5 = vector.load %arg7[%c0_5, %c0_6] : memref<18x128xf32, #tpu.memory_space<vmem>>, vector<16x128xf32>
    %c1_7 = arith.constant 1 : index
    %c0_8 = arith.constant 0 : index
    %6 = vector.load %arg7[%c1_7, %c0_8] : memref<18x128xf32, #tpu.memory_space<vmem>>, vector<16x128xf32>
    %7 = tpu.concatenate %5, %6 in 1 : vector<16x128xf32>, vector<16x128xf32> -> vector<16x256xf32>
    %8 = arith.truncf %7 : vector<16x256xf32> to vector<16x256xbf16>
    %c0_9 = arith.constant 0 : index
    %c0_10 = arith.constant 0 : index
    %9 = vector.load %arg2[%c0_9, %c0_10] : memref<256x768xbf16, #tpu.memory_space<vmem>>, vector<256x768xbf16>
    %cst_11 = arith.constant dense<0.000000e+00> : vector<16x768xf32>
    %10 = tpu.matmul %8, %9, %cst_11 {dimension_numbers = #tpu.dot_dimension_numbers<[1], [0], [0], [1], [0, 0, 1, 1], [], []>} : vector<16x256xbf16>, vector<256x768xbf16>, vector<16x768xf32> -> vector<16x768xf32>
    %cst_12 = arith.constant 0.000000e+00 : f32
    %11 = vector.broadcast %cst_12 : f32 to vector<16x768xf32>
    %12 = arith.cmpf ogt, %10, %11 : vector<16x768xf32>
    %cst_13 = arith.constant 0.000000e+00 : f32
    %13 = vector.broadcast %cst_13 : f32 to vector<16x768xf32>
    %14 = arith.minimumf %10, %13 : vector<16x768xf32>
    %15 = math.exp %14 : vector<16x768xf32>
    %cst_14 = arith.constant 1.000000e+00 : f32
    %16 = vector.broadcast %cst_14 : f32 to vector<16x768xf32>
    %17 = arith.subf %15, %16 : vector<16x768xf32>
    %18 = arith.select %12, %10, %17 : vector<16x768xi1>, vector<16x768xf32>
    %cst_15 = arith.constant 0.000000e+00 : bf16
    %19 = vector.broadcast %cst_15 : bf16 to vector<2x768xbf16>
    %c0_16 = arith.constant 0 : index
    %c0_17 = arith.constant 0 : index
    %20 = vector.load %arg8[%c0_16, %c0_17] : memref<20x768xbf16, #tpu.memory_space<vmem>>, vector<2x768xbf16>
    tpu.vector_store %arg8[%c0_16, %c0_17], %19 {strides = array<i32>} : memref<20x768xbf16, #tpu.memory_space<vmem>>, vector<2x768xbf16>,
    %c18 = arith.constant 18 : index
    %c0_18 = arith.constant 0 : index
    %21 = vector.load %arg8[%c18, %c0_18] : memref<20x768xbf16, #tpu.memory_space<vmem>>, vector<2x768xbf16>
    tpu.vector_store %arg8[%c18, %c0_18], %19 {strides = array<i32>} : memref<20x768xbf16, #tpu.memory_space<vmem>>, vector<2x768xbf16>,
    %22 = arith.truncf %18 : vector<16x768xf32> to vector<16x768xbf16>
    %c2 = arith.constant 2 : index
    %c0_19 = arith.constant 0 : index
    %23 = vector.load %arg8[%c2, %c0_19] : memref<20x768xbf16, #tpu.memory_space<vmem>>, vector<16x768xbf16>
    tpu.vector_store %arg8[%c2, %c0_19], %22 {strides = array<i32>} : memref<20x768xbf16, #tpu.memory_space<vmem>>, vector<16x768xbf16>,
    %c0_20 = arith.constant 0 : index
    %c0_21 = arith.constant 0 : index
    %24 = vector.load %arg8[%c0_20, %c0_21] : memref<20x768xbf16, #tpu.memory_space<vmem>>, vector<16x384xbf16>
    %c0_22 = arith.constant 0 : index
    %c0_23 = arith.constant 0 : index
    %c0_24 = arith.constant 0 : index
    %25 = vector.load %arg3[%c0_22, %c0_23, %c0_24] : memref<3x384x384xbf16, #tpu.memory_space<vmem>>, vector<1x384x384xbf16>
    %26 = vector.shape_cast %25 : vector<1x384x384xbf16> to vector<384x384xbf16>
    %cst_25 = arith.constant dense<0.000000e+00> : vector<16x384xf32>
    %27 = tpu.matmul %24, %26, %cst_25 {dimension_numbers = #tpu.dot_dimension_numbers<[1], [0], [0], [1], [0, 0, 1, 1], [], []>} : vector<16x384xbf16>, vector<384x384xbf16>, vector<16x384xf32> -> vector<16x384xf32>
    %c1_26 = arith.constant 1 : index
    %c0_27 = arith.constant 0 : index
    %28 = vector.load %arg8[%c1_26, %c0_27] : memref<20x768xbf16, #tpu.memory_space<vmem>>, vector<16x384xbf16>
    %c1_28 = arith.constant 1 : index
    %c0_29 = arith.constant 0 : index
    %c0_30 = arith.constant 0 : index
    %29 = vector.load %arg3[%c1_28, %c0_29, %c0_30] : memref<3x384x384xbf16, #tpu.memory_space<vmem>>, vector<1x384x384xbf16>
    %30 = vector.shape_cast %29 : vector<1x384x384xbf16> to vector<384x384xbf16>
    %cst_31 = arith.constant dense<0.000000e+00> : vector<16x384xf32>
    %31 = tpu.matmul %28, %30, %cst_31 {dimension_numbers = #tpu.dot_dimension_numbers<[1], [0], [0], [1], [0, 0, 1, 1], [], []>} : vector<16x384xbf16>, vector<384x384xbf16>, vector<16x384xf32> -> vector<16x384xf32>
    %32 = arith.addf %27, %31 : vector<16x384xf32>
    %c2_32 = arith.constant 2 : index
    %c0_33 = arith.constant 0 : index
    %33 = vector.load %arg8[%c2_32, %c0_33] : memref<20x768xbf16, #tpu.memory_space<vmem>>, vector<16x384xbf16>
    %c2_34 = arith.constant 2 : index
    %c0_35 = arith.constant 0 : index
    %c0_36 = arith.constant 0 : index
    %34 = vector.load %arg3[%c2_34, %c0_35, %c0_36] : memref<3x384x384xbf16, #tpu.memory_space<vmem>>, vector<1x384x384xbf16>
    %35 = vector.shape_cast %34 : vector<1x384x384xbf16> to vector<384x384xbf16>
    %cst_37 = arith.constant dense<0.000000e+00> : vector<16x384xf32>
    %36 = tpu.matmul %33, %35, %cst_37 {dimension_numbers = #tpu.dot_dimension_numbers<[1], [0], [0], [1], [0, 0, 1, 1], [], []>} : vector<16x384xbf16>, vector<384x384xbf16>, vector<16x384xf32> -> vector<16x384xf32>
    %37 = arith.addf %32, %36 : vector<16x384xf32>
    %cst_38 = arith.constant 0.000000e+00 : f32
    %38 = vector.broadcast %cst_38 : f32 to vector<16x384xf32>
    %39 = arith.cmpf ogt, %37, %38 : vector<16x384xf32>
    %cst_39 = arith.constant 0.000000e+00 : f32
    %40 = vector.broadcast %cst_39 : f32 to vector<16x384xf32>
    %41 = arith.minimumf %37, %40 : vector<16x384xf32>
    %42 = math.exp %41 : vector<16x384xf32>
    %cst_40 = arith.constant 1.000000e+00 : f32
    %43 = vector.broadcast %cst_40 : f32 to vector<16x384xf32>
    %44 = arith.subf %42, %43 : vector<16x384xf32>
    %45 = arith.select %39, %37, %44 : vector<16x384xi1>, vector<16x384xf32>
    %cst_41 = arith.constant 0.000000e+00 : f32
    %46 = vector.broadcast %cst_41 : f32 to vector<16x384xf32>
    %47 = arith.cmpf ogt, %45, %46 : vector<16x384xf32>
    %cst_42 = arith.constant 0.000000e+00 : f32
    %48 = vector.broadcast %cst_42 : f32 to vector<16x384xf32>
    %49 = arith.minimumf %45, %48 : vector<16x384xf32>
    %50 = math.exp %49 : vector<16x384xf32>
    %cst_43 = arith.constant 1.000000e+00 : f32
    %51 = vector.broadcast %cst_43 : f32 to vector<16x384xf32>
    %52 = arith.subf %50, %51 : vector<16x384xf32>
    %53 = arith.select %47, %45, %52 : vector<16x384xi1>, vector<16x384xf32>
    %54 = arith.truncf %53 : vector<16x384xf32> to vector<16x384xbf16>
    %c0_44 = arith.constant 0 : index
    %c384 = arith.constant 384 : index
    %55 = vector.load %arg8[%c0_44, %c384] : memref<20x768xbf16, #tpu.memory_space<vmem>>, vector<16x384xbf16>
    %c0_45 = arith.constant 0 : index
    %c0_46 = arith.constant 0 : index
    %c0_47 = arith.constant 0 : index
    %56 = vector.load %arg3[%c0_45, %c0_46, %c0_47] : memref<3x384x384xbf16, #tpu.memory_space<vmem>>, vector<1x384x384xbf16>
    %57 = vector.shape_cast %56 : vector<1x384x384xbf16> to vector<384x384xbf16>
    %cst_48 = arith.constant dense<0.000000e+00> : vector<16x384xf32>
    %58 = tpu.matmul %55, %57, %cst_48 {dimension_numbers = #tpu.dot_dimension_numbers<[1], [0], [0], [1], [0, 0, 1, 1], [], []>} : vector<16x384xbf16>, vector<384x384xbf16>, vector<16x384xf32> -> vector<16x384xf32>
    %c1_49 = arith.constant 1 : index
    %c384_50 = arith.constant 384 : index
    %59 = vector.load %arg8[%c1_49, %c384_50] : memref<20x768xbf16, #tpu.memory_space<vmem>>, vector<16x384xbf16>
    %c1_51 = arith.constant 1 : index
    %c0_52 = arith.constant 0 : index
    %c0_53 = arith.constant 0 : index
    %60 = vector.load %arg3[%c1_51, %c0_52, %c0_53] : memref<3x384x384xbf16, #tpu.memory_space<vmem>>, vector<1x384x384xbf16>
    %61 = vector.shape_cast %60 : vector<1x384x384xbf16> to vector<384x384xbf16>
    %cst_54 = arith.constant dense<0.000000e+00> : vector<16x384xf32>
    %62 = tpu.matmul %59, %61, %cst_54 {dimension_numbers = #tpu.dot_dimension_numbers<[1], [0], [0], [1], [0, 0, 1, 1], [], []>} : vector<16x384xbf16>, vector<384x384xbf16>, vector<16x384xf32> -> vector<16x384xf32>
    %63 = arith.addf %58, %62 : vector<16x384xf32>
    %c2_55 = arith.constant 2 : index
    %c384_56 = arith.constant 384 : index
    %64 = vector.load %arg8[%c2_55, %c384_56] : memref<20x768xbf16, #tpu.memory_space<vmem>>, vector<16x384xbf16>
    %c2_57 = arith.constant 2 : index
    %c0_58 = arith.constant 0 : index
    %c0_59 = arith.constant 0 : index
    %65 = vector.load %arg3[%c2_57, %c0_58, %c0_59] : memref<3x384x384xbf16, #tpu.memory_space<vmem>>, vector<1x384x384xbf16>
    %66 = vector.shape_cast %65 : vector<1x384x384xbf16> to vector<384x384xbf16>
    %cst_60 = arith.constant dense<0.000000e+00> : vector<16x384xf32>
    %67 = tpu.matmul %64, %66, %cst_60 {dimension_numbers = #tpu.dot_dimension_numbers<[1], [0], [0], [1], [0, 0, 1, 1], [], []>} : vector<16x384xbf16>, vector<384x384xbf16>, vector<16x384xf32> -> vector<16x384xf32>
    %68 = arith.addf %63, %67 : vector<16x384xf32>
    %cst_61 = arith.constant 0.000000e+00 : f32
    %69 = vector.broadcast %cst_61 : f32 to vector<16x384xf32>
    %70 = arith.cmpf ogt, %68, %69 : vector<16x384xf32>
    %cst_62 = arith.constant 0.000000e+00 : f32
    %71 = vector.broadcast %cst_62 : f32 to vector<16x384xf32>
    %72 = arith.minimumf %68, %71 : vector<16x384xf32>
    %73 = math.exp %72 : vector<16x384xf32>
    %cst_63 = arith.constant 1.000000e+00 : f32
    %74 = vector.broadcast %cst_63 : f32 to vector<16x384xf32>
    %75 = arith.subf %73, %74 : vector<16x384xf32>
    %76 = arith.select %70, %68, %75 : vector<16x384xi1>, vector<16x384xf32>
    %cst_64 = arith.constant 0.000000e+00 : f32
    %77 = vector.broadcast %cst_64 : f32 to vector<16x384xf32>
    %78 = arith.cmpf ogt, %76, %77 : vector<16x384xf32>
    %cst_65 = arith.constant 0.000000e+00 : f32
    %79 = vector.broadcast %cst_65 : f32 to vector<16x384xf32>
    %80 = arith.minimumf %76, %79 : vector<16x384xf32>
    %81 = math.exp %80 : vector<16x384xf32>
    %cst_66 = arith.constant 1.000000e+00 : f32
    %82 = vector.broadcast %cst_66 : f32 to vector<16x384xf32>
    %83 = arith.subf %81, %82 : vector<16x384xf32>
    %84 = arith.select %78, %76, %83 : vector<16x384xi1>, vector<16x384xf32>
    %85 = arith.truncf %84 : vector<16x384xf32> to vector<16x384xbf16>
    %86 = tpu.concatenate %54, %85 in 1 : vector<16x384xbf16>, vector<16x384xbf16> -> vector<16x768xbf16>
    %c0_67 = arith.constant 0 : index
    %c0_68 = arith.constant 0 : index
    %87 = vector.load %arg4[%c0_67, %c0_68] : memref<768x128xbf16, #tpu.memory_space<vmem>>, vector<768x128xbf16>
    %cst_69 = arith.constant dense<0.000000e+00> : vector<16x128xf32>
    %88 = tpu.matmul %86, %87, %cst_69 {dimension_numbers = #tpu.dot_dimension_numbers<[1], [0], [0], [1], [0, 0, 1, 1], [], []>} : vector<16x768xbf16>, vector<768x128xbf16>, vector<16x128xf32> -> vector<16x128xf32>
    %c0_70 = arith.constant 0 : index
    %c0_71 = arith.constant 0 : index
    %89 = vector.load %arg5[%c0_70, %c0_71] : memref<1x128xf32, #tpu.memory_space<vmem>>, vector<1x128xf32>
    %90 = vector.broadcast %89 : vector<1x128xf32> to vector<16x128xf32>
    %91 = arith.addf %88, %90 : vector<16x128xf32>
    %c0_72 = arith.constant 0 : index
    %c0_73 = arith.constant 0 : index
    %92 = vector.load %arg1[%c0_72, %c0_73] : memref<16x128xf32, #tpu.memory_space<vmem>>, vector<16x128xf32>
    %93 = arith.subf %92, %91 : vector<16x128xf32>
    %c0_74 = arith.constant 0 : index
    %c0_75 = arith.constant 0 : index
    %94 = vector.load %arg6[%c0_74, %c0_75] : memref<16x128xf32, #tpu.memory_space<vmem>>, vector<16x128xf32>
    tpu.vector_store %arg6[%c0_74, %c0_75], %93 {strides = array<i32>} : memref<16x128xf32, #tpu.memory_space<vmem>>, vector<16x128xf32>,
    return
  }
  func.func @transform_0(%arg0: i32) -> (i32, i32) {
    %c0_i32 = arith.constant 0 : i32
    %c0_i32_0 = arith.constant 0 : i32
    %c0_i32_1 = arith.constant 0 : i32
    return %c0_i32, %c0_i32_0 : i32, i32
  }
  func.func @transform_1(%arg0: i32) -> (i32, i32) {
    %c0_i32 = arith.constant 0 : i32
    %c0_i32_0 = arith.constant 0 : i32
    %c0_i32_1 = arith.constant 0 : i32
    return %c0_i32, %c0_i32_0 : i32, i32
  }
  func.func @transform_2(%arg0: i32) -> (i32, i32, i32) {
    %c0_i32 = arith.constant 0 : i32
    %c0_i32_0 = arith.constant 0 : i32
    %c0_i32_1 = arith.constant 0 : i32
    %c0_i32_2 = arith.constant 0 : i32
    return %c0_i32, %c0_i32_0, %c0_i32_1 : i32, i32, i32
  }
  func.func @transform_3(%arg0: i32) -> (i32, i32) {
    %c0_i32 = arith.constant 0 : i32
    %c0_i32_0 = arith.constant 0 : i32
    %c0_i32_1 = arith.constant 0 : i32
    return %c0_i32, %c0_i32_0 : i32, i32
  }
  func.func @transform_4(%arg0: i32) -> (i32, i32) {
    %c0_i32 = arith.constant 0 : i32
    %c0_i32_0 = arith.constant 0 : i32
    %c0_i32_1 = arith.constant 0 : i32
    return %c0_i32, %c0_i32_0 : i32, i32
  }
  func.func @transform_5(%arg0: i32) -> (i32, i32) {
    %c0_i32 = arith.constant 0 : i32
    %c0_i32_0 = arith.constant 0 : i32
    %c0_i32_1 = arith.constant 0 : i32
    return %c0_i32, %c0_i32_0 : i32, i32
  }
}

</mosaic_0001>

<llo_original>
// kernel: _cell_ar_call.1
$region0: #{_cell_ar_call.1}
  #allocation0 [shape = 'u32[]', space=smem, size = 0x4, offset = 0x4, fixed_abs, tag = 'smem constant byte address 0x4 - core index']
  #allocation1 [shape = 'u32[144,128]{1,0:T(1,128)}', space=vmem, size = 0x12000, scoped, tag = 'internal scratch']
  #allocation2 [shape = 'f32[18,128]{1,0:T(8,128)}', space=vmem, size = 0x3000, scoped, tag = 'scratch operand']
  #allocation3 [shape = 'bf16[20,768]{1,0:T(8,128)(2,1)}', space=vmem, size = 0x9000, scoped, tag = 'scratch operand']
  %s0 = inlined_call_operand.vmem [shape: f32[16,128], index: 0, kind: input, shape index: {}]
  %s1 = inlined_call_operand.hbm [shape: bf16[256,768], index: 1, kind: input, shape index: {}]
  %s2 = inlined_call_operand.hbm [shape: bf16[3,384,384], index: 2, kind: input, shape index: {}]
  %s3 = inlined_call_operand.vmem [shape: bf16[768,128], index: 3, kind: input, shape index: {}]
  %s4 = inlined_call_operand.vmem [shape: f32[1,128], index: 4, kind: input, shape index: {}]
  %s5 = inlined_call_operand.vmem [shape: f32[16,128], index: 5, kind: output, shape index: {}]
  %s6 = sld [smem:[#allocation0]]
  $region38: #{_cell_ar_call.1} parent=0
    _
  %s8 = ssub.s32 1, %s6
  %s9 = scalar_select 0, %s8, %s6
  $region1: #{_cell_ar_call.1} parent=0
    #allocation4 [shape = 'u8[393216]{0}', space=vmem, size = 0x60000, scoped, tag = 'input window, operand 1, single buffered']
    #allocation5 [shape = 's32[1]{0}', space=sflag, size = 0x4, scoped, tag = 'scoped memory for _cell_ar_call.1']
    #allocation6 [shape = 'u8[884736]{0}', space=vmem, size = 0xd8000, scoped, tag = 'input window, operand 2, single buffered']
    #allocation7 [shape = 's32[1]{0}', space=sflag, size = 0x4, scoped, tag = 'scoped memory for _cell_ar_call.1']
    %10 = vsyncpa [#allocation5], 0
    %11 = vsyncpa [#allocation7], 0
    // Predicated region
    $region2: #{_cell_ar_call.1} parent=1 // pred_check
      _
    $region3: #{_cell_ar_call.1} parent=1 // pred_check_branch
      %13 = sbr.rel (0) target = $region5
    $region4: #{_cell_ar_call.1} parent=1 // pred_region
      _
    $region5: #{_cell_ar_call.1} parent=1 // pred_fallthru
      _
    // Predicated region
    $region6: #{_cell_ar_call.1} parent=1 // pred_check
      _
    $region7: #{_cell_ar_call.1} parent=1 // pred_check_branch
      %15 = sbr.rel (0) target = $region9
    $region8: #{_cell_ar_call.1} parent=1 // pred_region
      %s17 = ssub.s32 12288, 12288
      %18 = vsyncadd [#allocation5], %s17
      %s19 = sshll.u32 [#allocation4], 4
      %s20 = int_to_ptr.vmem [resolvable:$true] %s19
      %25 = dma.hbm_to_vmem [thread:$0]  %s1, 12288, %s20, [#allocation5], 384, 384, 24
    $region9: #{_cell_ar_call.1} parent=1 // pred_fallthru
      _
    // Predicated region
    $region10: #{_cell_ar_call.1} parent=1 // pred_check
      _
    $region11: #{_cell_ar_call.1} parent=1 // pred_check_branch
      %27 = sbr.rel (0) target = $region13
    $region12: #{_cell_ar_call.1} parent=1 // pred_region
      %s29 = ssub.s32 27648, 27648
      %30 = vsyncadd [#allocation7], %s29
      %s31 = sshll.u32 [#allocation6], 4
      %s32 = int_to_ptr.vmem [resolvable:$true] %s31
      %37 = dma.hbm_to_vmem [thread:$0]  %s2, 27648, %s32, [#allocation7], 192, 192, 12
    $region13: #{_cell_ar_call.1} parent=1 // pred_fallthru
      _
    // Predicated region
    $region14: #{_cell_ar_call.1} parent=1 // pred_check
      _
    $region15: #{_cell_ar_call.1} parent=1 // pred_check_branch
      %39 = sbr.rel (0) target = $region17
    $region16: #{_cell_ar_call.1} parent=1 // pred_region
      _
    $region17: #{_cell_ar_call.1} parent=1 // pred_fallthru
      _
    // Predicated region
    $region18: #{_cell_ar_call.1} parent=1 // pred_check
      _
    $region19: #{_cell_ar_call.1} parent=1 // pred_check_branch
      %41 = sbr.rel (0) target = $region21
    $region20: #{_cell_ar_call.1} parent=1 // pred_region
      _
    $region21: #{_cell_ar_call.1} parent=1 // pred_fallthru
      _
    // Predicated region
    $region22: #{_cell_ar_call.1} parent=1 // pred_check
      _
    $region23: #{_cell_ar_call.1} parent=1 // pred_check_branch
      %43 = sbr.rel (0) target = $region25
    $region24: #{_cell_ar_call.1} parent=1 // pred_region
      %44 = dma.done [#allocation5], 12288
    $region25: #{_cell_ar_call.1} parent=1 // pred_fallthru
      _
    // Predicated region
    $region26: #{_cell_ar_call.1} parent=1 // pred_check
      _
    $region27: #{_cell_ar_call.1} parent=1 // pred_check_branch
      %46 = sbr.rel (0) target = $region29
    $region28: #{_cell_ar_call.1} parent=1 // pred_region
      %47 = dma.done [#allocation7], 27648
    $region29: #{_cell_ar_call.1} parent=1 // pred_fallthru
      _
    %49 = vst [vmem:[#allocation2] sm:$0x1] 0.0
    %50 = vst [vmem:[#allocation2 + $0x11] sm:$0x1] 0.0
    %v51 = vld [vmem:[%s0] sm:$0xff]
    %v52 = vld [vmem:[%s0 + $0x8] sm:$0xff]
    %53 = vst [vmem:[#allocation2 + $0x1] sm:$0xff] %v51
    %54 = vst [vmem:[#allocation2 + $0x9] sm:$0xff] %v52
    %v55 = vld [vmem:[#allocation2] sm:$0xff]
    %v56 = vld [vmem:[#allocation2 + $0x8] sm:$0xff]
    %v57 = vld [vmem:[#allocation2 + $0x1] sm:$0xff]
    %v58 = vld [vmem:[#allocation2 + $0x9] sm:$0xff]
    %v59 = vpack.c.bf16 %v56, %v55
    %v60 = vpack.c.bf16 %v58, %v57
    %v61 = vld [vmem:[#allocation4] sm:$0xff]
    %v62 = vld [vmem:[#allocation4 + $0x8] sm:$0xff]
    %v63 = vld [vmem:[#allocation4 + $0x10] sm:$0xff]
    %v64 = vld [vmem:[#allocation4 + $0x18] sm:$0xff]
    %v65 = vld [vmem:[#allocation4 + $0x20] sm:$0xff]
    %v66 = vld [vmem:[#allocation4 + $0x28] sm:$0xff]
    %v67 = vld [vmem:[#allocation4 + $0x30] sm:$0xff]
    %v68 = vld [vmem:[#allocation4 + $0x38] sm:$0xff]
    %v69 = vld [vmem:[#allocation4 + $0x40] sm:$0xff]
    %v70 = vld [vmem:[#allocation4 + $0x48] sm:$0xff]
    %v71 = vld [vmem:[#allocation4 + $0x50] sm:$0xff]
    %v72 = vld [vmem:[#allocation4 + $0x58] sm:$0xff]
    %v73 = vld [vmem:[#allocation4 + $0x60] sm:$0xff]
    %v74 = vld [vmem:[#allocation4 + $0x68] sm:$0xff]
    %v75 = vld [vmem:[#allocation4 + $0x70] sm:$0xff]
    %v76 = vld [vmem:[#allocation4 + $0x78] sm:$0xff]
    %v77 = vld [vmem:[#allocation4 + $0x80] sm:$0xff]
    %v78 = vld [vmem:[#allocation4 + $0x88] sm:$0xff]
    %v79 = vld [vmem:[#allocation4 + $0x90] sm:$0xff]
    %v80 = vld [vmem:[#allocation4 + $0x98] sm:$0xff]
    %v81 = vld [vmem:[#allocation4 + $0xa0] sm:$0xff]
    %v82 = vld [vmem:[#allocation4 + $0xa8] sm:$0xff]
    %v83 = vld [vmem:[#allocation4 + $0xb0] sm:$0xff]
    %v84 = vld [vmem:[#allocation4 + $0xb8] sm:$0xff]
    %v85 = vld [vmem:[#allocation4 + $0xc0] sm:$0xff]
    %v86 = vld [vmem:[#allocation4 + $0xc8] sm:$0xff]
    %v87 = vld [vmem:[#allocation4 + $0xd0] sm:$0xff]
    %v88 = vld [vmem:[#allocation4 + $0xd8] sm:$0xff]
    %v89 = vld [vmem:[#allocation4 + $0xe0] sm:$0xff]
    %v90 = vld [vmem:[#allocation4 + $0xe8] sm:$0xff]
    %v91 = vld [vmem:[#allocation4 + $0xf0] sm:$0xff]
    %v92 = vld [vmem:[#allocation4 + $0xf8] sm:$0xff]
    %v93 = vld [vmem:[#allocation4 + $0x100] sm:$0xff]
    %v94 = vld [vmem:[#allocation4 + $0x108] sm:$0xff]
    %v95 = vld [vmem:[#allocation4 + $0x110] sm:$0xff]
    %v96 = vld [vmem:[#allocation4 + $0x118] sm:$0xff]
    %v97 = vld [vmem:[#allocation4 + $0x120] sm:$0xff]
    %v98 = vld [vmem:[#allocation4 + $0x128] sm:$0xff]
    %v99 = vld [vmem:[#allocation4 + $0x130] sm:$0xff]
    %v100 = vld [vmem:[#allocation4 + $0x138] sm:$0xff]
    %v101 = vld [vmem:[#allocation4 + $0x140] sm:$0xff]
    %v102 = vld [vmem:[#allocation4 + $0x148] sm:$0xff]
    %v103 = vld [vmem:[#allocation4 + $0x150] sm:$0xff]
    %v104 = vld [vmem:[#allocation4 + $0x158] sm:$0xff]
    %v105 = vld [vmem:[#allocation4 + $0x160] sm:$0xff]
    %v106 = vld [vmem:[#allocation4 + $0x168] sm:$0xff]
    %v107 = vld [vmem:[#allocation4 + $0x170] sm:$0xff]
    %v108 = vld [vmem:[#allocation4 + $0x178] sm:$0xff]
    %v109 = vld [vmem:[#allocation4 + $0x180] sm:$0xff]
    %v110 = vld [vmem:[#allocation4 + $0x188] sm:$0xff]
    %v111 = vld [vmem:[#allocation4 + $0x190] sm:$0xff]
    %v112 = vld [vmem:[#allocation4 + $0x198] sm:$0xff]
    %v113 = vld [vmem:[#allocation4 + $0x1a0] sm:$0xff]
    %v114 = vld [vmem:[#allocation4 + $0x1a8] sm:$0xff]
    %v115 = vld [vmem:[#allocation4 + $0x1b0] sm:$0xff]
    %v116 = vld [vmem:[#allocation4 + $0x1b8] sm:$0xff]
    %v117 = vld [vmem:[#allocation4 + $0x1c0] sm:$0xff]
    %v118 = vld [vmem:[#allocation4 + $0x1c8] sm:$0xff]
    %v119 = vld [vmem:[#allocation4 + $0x1d0] sm:$0xff]
    %v120 = vld [vmem:[#allocation4 + $0x1d8] sm:$0xff]
    %v121 = vld [vmem:[#allocation4 + $0x1e0] sm:$0xff]
    %v122 = vld [vmem:[#allocation4 + $0x1e8] sm:$0xff]
    %v123 = vld [vmem:[#allocation4 + $0x1f0] sm:$0xff]
    %v124 = vld [vmem:[#allocation4 + $0x1f8] sm:$0xff]
    %v125 = vld [vmem:[#allocation4 + $0x200] sm:$0xff]
    %v126 = vld [vmem:[#allocation4 + $0x208] sm:$0xff]
    %v127 = vld [vmem:[#allocation4 + $0x210] sm:$0xff]
    %v128 = vld [vmem:[#allocation4 + $0x218] sm:$0xff]
    %v129 = vld [vmem:[#allocation4 + $0x220] sm:$0xff]
    %v130 = vld [vmem:[#allocation4 + $0x228] sm:$0xff]
    %v131 = vld [vmem:[#allocation4 + $0x230] sm:$0xff]
    %v132 = vld [vmem:[#allocation4 + $0x238] sm:$0xff]
    %v133 = vld [vmem:[#allocation4 + $0x240] sm:$0xff]
    %v134 = vld [vmem:[#allocation4 + $0x248] sm:$0xff]
    %v135 = vld [vmem:[#allocation4 + $0x250] sm:$0xff]
    %v136 = vld [vmem:[#allocation4 + $0x258] sm:$0xff]
    %v137 = vld [vmem:[#allocation4 + $0x260] sm:$0xff]
    %v138 = vld [vmem:[#allocation4 + $0x268] sm:$0xff]
    %v139 = vld [vmem:[#allocation4 + $0x270] sm:$0xff]
    %v140 = vld [vmem:[#allocation4 + $0x278] sm:$0xff]
    %v141 = vld [vmem:[#allocation4 + $0x280] sm:$0xff]
    %v142 = vld [vmem:[#allocation4 + $0x288] sm:$0xff]
    %v143 = vld [vmem:[#allocation4 + $0x290] sm:$0xff]
    %v144 = vld [vmem:[#allocation4 + $0x298] sm:$0xff]
    %v145 = vld [vmem:[#allocation4 + $0x2a0] sm:$0xff]
    %v146 = vld [vmem:[#allocation4 + $0x2a8] sm:$0xff]
    %v147 = vld [vmem:[#allocation4 + $0x2b0] sm:$0xff]
    %v148 = vld [vmem:[#allocation4 + $0x2b8] sm:$0xff]
    %v149 = vld [vmem:[#allocation4 + $0x2c0] sm:$0xff]
    %v150 = vld [vmem:[#allocation4 + $0x2c8] sm:$0xff]
    %v151 = vld [vmem:[#allocation4 + $0x2d0] sm:$0xff]
    %v152 = vld [vmem:[#allocation4 + $0x2d8] sm:$0xff]
    %v153 = vld [vmem:[#allocation4 + $0x2e0] sm:$0xff]
    %v154 = vld [vmem:[#allocation4 + $0x2e8] sm:$0xff]
    %v155 = vld [vmem:[#allocation4 + $0x2f0] sm:$0xff]
    %v156 = vld [vmem:[#allocation4 + $0x2f8] sm:$0xff]
    %v253 = vunpack.c.l.b16 %v61
    %v254 = vunpack.c.h.b16 %v61
    %v255 = vunpack.c.l.b16 %v62
    %v256 = vunpack.c.h.b16 %v62
    %v257 = vunpack.c.l.b16 %v63
    %v258 = vunpack.c.h.b16 %v63
    %v259 = vunpack.c.l.b16 %v64
    %v260 = vunpack.c.h.b16 %v64
    %v261 = vunpack.c.l.b16 %v65
    %v262 = vunpack.c.h.b16 %v65
    %v263 = vunpack.c.l.b16 %v66
    %v264 = vunpack.c.h.b16 %v66
    %v265 = vunpack.c.l.b16 %v67
    %v266 = vunpack.c.h.b16 %v67
    %v267 = vunpack.c.l.b16 %v68
    %v268 = vunpack.c.h.b16 %v68
    %v269 = vunpack.c.l.b16 %v69
    %v270 = vunpack.c.h.b16 %v69
    %v271 = vunpack.c.l.b16 %v70
    %v272 = vunpack.c.h.b16 %v70
    %v273 = vunpack.c.l.b16 %v71
    %v274 = vunpack.c.h.b16 %v71
    %v275 = vunpack.c.l.b16 %v72
    %v276 = vunpack.c.h.b16 %v72
    %v277 = vunpack.c.l.b16 %v73
    %v278 = vunpack.c.h.b16 %v73
    %v279 = vunpack.c.l.b16 %v74
    %v280 = vunpack.c.h.b16 %v74
    %v281 = vunpack.c.l.b16 %v75
    %v282 = vunpack.c.h.b16 %v75
    %v283 = vunpack.c.l.b16 %v76
    %v284 = vunpack.c.h.b16 %v76
    %v285 = vunpack.c.l.b16 %v77
    %v286 = vunpack.c.h.b16 %v77
    %v287 = vunpack.c.l.b16 %v78
    %v288 = vunpack.c.h.b16 %v78
    %v289 = vunpack.c.l.b16 %v79
    %v290 = vunpack.c.h.b16 %v79
    %v291 = vunpack.c.l.b16 %v80
    %v292 = vunpack.c.h.b16 %v80
    %v293 = vunpack.c.l.b16 %v81
    %v294 = vunpack.c.h.b16 %v81
    %v295 = vunpack.c.l.b16 %v82
    %v296 = vunpack.c.h.b16 %v82
    %v297 = vunpack.c.l.b16 %v83
    %v298 = vunpack.c.h.b16 %v83
    %v299 = vunpack.c.l.b16 %v84
    %v300 = vunpack.c.h.b16 %v84
    %v301 = vunpack.c.l.b16 %v85
    %v302 = vunpack.c.h.b16 %v85
    %v303 = vunpack.c.l.b16 %v86
    %v304 = vunpack.c.h.b16 %v86
    %v305 = vunpack.c.l.b16 %v87
    %v306 = vunpack.c.h.b16 %v87
    %v307 = vunpack.c.l.b16 %v88
    %v308 = vunpack.c.h.b16 %v88
    %v309 = vunpack.c.l.b16 %v89
    %v310 = vunpack.c.h.b16 %v89
    %v311 = vunpack.c.l.b16 %v90
    %v312 = vunpack.c.h.b16 %v90
    %v313 = vunpack.c.l.b16 %v91
    %v314 = vunpack.c.h.b16 %v91
    %v315 = vunpack.c.l.b16 %v92
    %v316 = vunpack.c.h.b16 %v92
    %v317 = vunpack.c.l.b16 %v93
    %v318 = vunpack.c.h.b16 %v93
    %v319 = vunpack.c.l.b16 %v94
    %v320 = vunpack.c.h.b16 %v94
    %v321 = vunpack.c.l.b16 %v95
    %v322 = vunpack.c.h.b16 %v95
    %v323 = vunpack.c.l.b16 %v96
    %v324 = vunpack.c.h.b16 %v96
    %v325 = vunpack.c.l.b16 %v97
    %v326 = vunpack.c.h.b16 %v97
    %v327 = vunpack.c.l.b16 %v98
    %v328 = vunpack.c.h.b16 %v98
    %v329 = vunpack.c.l.b16 %v99
    %v330 = vunpack.c.h.b16 %v99
    %v331 = vunpack.c.l.b16 %v100
    %v332 = vunpack.c.h.b16 %v100
    %v333 = vunpack.c.l.b16 %v101
    %v334 = vunpack.c.h.b16 %v101
    %v335 = vunpack.c.l.b16 %v102
    %v336 = vunpack.c.h.b16 %v102
    %v337 = vunpack.c.l.b16 %v103
    %v338 = vunpack.c.h.b16 %v103
    %v339 = vunpack.c.l.b16 %v104
    %v340 = vunpack.c.h.b16 %v104
    %v341 = vunpack.c.l.b16 %v105
    %v342 = vunpack.c.h.b16 %v105
    %v343 = vunpack.c.l.b16 %v106
    %v344 = vunpack.c.h.b16 %v106
    %v345 = vunpack.c.l.b16 %v107
    %v346 = vunpack.c.h.b16 %v107
    %v347 = vunpack.c.l.b16 %v108
    %v348 = vunpack.c.h.b16 %v108
    %v349 = vunpack.c.l.b16 %v109
    %v350 = vunpack.c.h.b16 %v109
    %v351 = vunpack.c.l.b16 %v110
    %v352 = vunpack.c.h.b16 %v110
    %v353 = vunpack.c.l.b16 %v111
    %v354 = vunpack.c.h.b16 %v111
    %v355 = vunpack.c.l.b16 %v112
    %v356 = vunpack.c.h.b16 %v112
    %v357 = vunpack.c.l.b16 %v113
    %v358 = vunpack.c.h.b16 %v113
    %v359 = vunpack.c.l.b16 %v114
    %v360 = vunpack.c.h.b16 %v114
    %v361 = vunpack.c.l.b16 %v115
    %v362 = vunpack.c.h.b16 %v115
    %v363 = vunpack.c.l.b16 %v116
    %v364 = vunpack.c.h.b16 %v116
    %v365 = vunpack.c.l.b16 %v117
    %v366 = vunpack.c.h.b16 %v117
    %v367 = vunpack.c.l.b16 %v118
    %v368 = vunpack.c.h.b16 %v118
    %v369 = vunpack.c.l.b16 %v119
    %v370 = vunpack.c.h.b16 %v119
    %v371 = vunpack.c.l.b16 %v120
    %v372 = vunpack.c.h.b16 %v120
    %v373 = vunpack.c.l.b16 %v121
    %v374 = vunpack.c.h.b16 %v121
    %v375 = vunpack.c.l.b16 %v122
    %v376 = vunpack.c.h.b16 %v122
    %v377 = vunpack.c.l.b16 %v123
    %v378 = vunpack.c.h.b16 %v123
    %v379 = vunpack.c.l.b16 %v124
    %v380 = vunpack.c.h.b16 %v124
    %v381 = vunpack.c.l.b16 %v125
    %v382 = vunpack.c.h.b16 %v125
    %v383 = vunpack.c.l.b16 %v126
    %v384 = vunpack.c.h.b16 %v126
    %v385 = vunpack.c.l.b16 %v127
    %v386 = vunpack.c.h.b16 %v127
    %v387 = vunpack.c.l.b16 %v128
    %v388 = vunpack.c.h.b16 %v128
    %v389 = vunpack.c.l.b16 %v129
    %v390 = vunpack.c.h.b16 %v129
    %v391 = vunpack.c.l.b16 %v130
    %v392 = vunpack.c.h.b16 %v130
    %v393 = vunpack.c.l.b16 %v131
    %v394 = vunpack.c.h.b16 %v131
    %v395 = vunpack.c.l.b16 %v132
    %v396 = vunpack.c.h.b16 %v132
    %v397 = vunpack.c.l.b16 %v133
    %v398 = vunpack.c.h.b16 %v133
    %v399 = vunpack.c.l.b16 %v134
    %v400 = vunpack.c.h.b16 %v134
    %v401 = vunpack.c.l.b16 %v135
    %v402 = vunpack.c.h.b16 %v135
    %v403 = vunpack.c.l.b16 %v136
    %v404 = vunpack.c.h.b16 %v136
    %v405 = vunpack.c.l.b16 %v137
    %v406 = vunpack.c.h.b16 %v137
    %v407 = vunpack.c.l.b16 %v138
    %v408 = vunpack.c.h.b16 %v138
    %v409 = vunpack.c.l.b16 %v139
    %v410 = vunpack.c.h.b16 %v139
    %v411 = vunpack.c.l.b16 %v140
    %v412 = vunpack.c.h.b16 %v140
    %v413 = vunpack.c.l.b16 %v141
    %v414 = vunpack.c.h.b16 %v141
    %v415 = vunpack.c.l.b16 %v142
    %v416 = vunpack.c.h.b16 %v142
    %v417 = vunpack.c.l.b16 %v143
    %v418 = vunpack.c.h.b16 %v143
    %v419 = vunpack.c.l.b16 %v144
    %v420 = vunpack.c.h.b16 %v144
    %v421 = vunpack.c.l.b16 %v145
    %v422 = vunpack.c.h.b16 %v145
    %v423 = vunpack.c.l.b16 %v146
    %v424 = vunpack.c.h.b16 %v146
    %v425 = vunpack.c.l.b16 %v147
    %v426 = vunpack.c.h.b16 %v147
    %v427 = vunpack.c.l.b16 %v148
    %v428 = vunpack.c.h.b16 %v148
    %v429 = vunpack.c.l.b16 %v149
    %v430 = vunpack.c.h.b16 %v149
    %v431 = vunpack.c.l.b16 %v150
    %v432 = vunpack.c.h.b16 %v150
    %v433 = vunpack.c.l.b16 %v151
    %v434 = vunpack.c.h.b16 %v151
    %v435 = vunpack.c.l.b16 %v152
    %v436 = vunpack.c.h.b16 %v152
    %v437 = vunpack.c.l.b16 %v153
    %v438 = vunpack.c.h.b16 %v153
    %v439 = vunpack.c.l.b16 %v154
    %v440 = vunpack.c.h.b16 %v154
    %v441 = vunpack.c.l.b16 %v155
    %v442 = vunpack.c.h.b16 %v155
    %v443 = vunpack.c.l.b16 %v156
    %v444 = vunpack.c.h.b16 %v156
    %v445 = vpack.c.b16 %v259, %v253
    %v446 = vpack.c.b16 %v260, %v254
    %v447 = vpack.c.b16 %v261, %v255
    %v448 = vpack.c.b16 %v262, %v256
    %v449 = vpack.c.b16 %v263, %v257
    %v450 = vpack.c.b16 %v264, %v258
    %v451 = vpack.c.b16 %v271, %v265
    %v452 = vpack.c.b16 %v272, %v266
    %v453 = vpack.c.b16 %v273, %v267
    %v454 = vpack.c.b16 %v274, %v268
    %v455 = vpack.c.b16 %v275, %v269
    %v456 = vpack.c.b16 %v276, %v270
    %v457 = vpack.c.b16 %v283, %v277
    %v458 = vpack.c.b16 %v284, %v278
    %v459 = vpack.c.b16 %v285, %v279
    %v460 = vpack.c.b16 %v286, %v280
    %v461 = vpack.c.b16 %v287, %v281
    %v462 = vpack.c.b16 %v288, %v282
    %v463 = vpack.c.b16 %v295, %v289
    %v464 = vpack.c.b16 %v296, %v290
    %v465 = vpack.c.b16 %v297, %v291
    %v466 = vpack.c.b16 %v298, %v292
    %v467 = vpack.c.b16 %v299, %v293
    %v468 = vpack.c.b16 %v300, %v294
    %v469 = vpack.c.b16 %v307, %v301
    %v470 = vpack.c.b16 %v308, %v302
    %v471 = vpack.c.b16 %v309, %v303
    %v472 = vpack.c.b16 %v310, %v304
    %v473 = vpack.c.b16 %v311, %v305
    %v474 = vpack.c.b16 %v312, %v306
    %v475 = vpack.c.b16 %v319, %v313
    %v476 = vpack.c.b16 %v320, %v314
    %v477 = vpack.c.b16 %v321, %v315
    %v478 = vpack.c.b16 %v322, %v316
    %v479 = vpack.c.b16 %v323, %v317
    %v480 = vpack.c.b16 %v324, %v318
    %v481 = vpack.c.b16 %v331, %v325
    %v482 = vpack.c.b16 %v332, %v326
    %v483 = vpack.c.b16 %v333, %v327
    %v484 = vpack.c.b16 %v334, %v328
    %v485 = vpack.c.b16 %v335, %v329
    %v486 = vpack.c.b16 %v336, %v330
    %v487 = vpack.c.b16 %v343, %v337
    %v488 = vpack.c.b16 %v344, %v338
    %v489 = vpack.c.b16 %v345, %v339
    %v490 = vpack.c.b16 %v346, %v340
    %v491 = vpack.c.b16 %v347, %v341
    %v492 = vpack.c.b16 %v348, %v342
    %v493 = vpack.c.b16 %v355, %v349
    %v494 = vpack.c.b16 %v356, %v350
    %v495 = vpack.c.b16 %v357, %v351
    %v496 = vpack.c.b16 %v358, %v352
    %v497 = vpack.c.b16 %v359, %v353
    %v498 = vpack.c.b16 %v360, %v354
    %v499 = vpack.c.b16 %v367, %v361
    %v500 = vpack.c.b16 %v368, %v362
    %v501 = vpack.c.b16 %v369, %v363
    %v502 = vpack.c.b16 %v370, %v364
    %v503 = vpack.c.b16 %v371, %v365
    %v504 = vpack.c.b16 %v372, %v366
    %v505 = vpack.c.b16 %v379, %v373
    %v506 = vpack.c.b16 %v380, %v374
    %v507 = vpack.c.b16 %v381, %v375
    %v508 = vpack.c.b16 %v382, %v376
    %v509 = vpack.c.b16 %v383, %v377
    %v510 = vpack.c.b16 %v384, %v378
    %v511 = vpack.c.b16 %v391, %v385
    %v512 = vpack.c.b16 %v392, %v386
    %v513 = vpack.c.b16 %v393, %v387
    %v514 = vpack.c.b16 %v394, %v388
    %v515 = vpack.c.b16 %v395, %v389
    %v516 = vpack.c.b16 %v396, %v390
    %v517 = vpack.c.b16 %v403, %v397
    %v518 = vpack.c.b16 %v404, %v398
    %v519 = vpack.c.b16 %v405, %v399
    %v520 = vpack.c.b16 %v406, %v400
    %v521 = vpack.c.b16 %v407, %v401
    %v522 = vpack.c.b16 %v408, %v402
    %v523 = vpack.c.b16 %v415, %v409
    %v524 = vpack.c.b16 %v416, %v410
    %v525 = vpack.c.b16 %v417, %v411
    %v526 = vpack.c.b16 %v418, %v412
    %v527 = vpack.c.b16 %v419, %v413
    %v528 = vpack.c.b16 %v420, %v414
    %v529 = vpack.c.b16 %v427, %v421
    %v530 = vpack.c.b16 %v428, %v422
    %v531 = vpack.c.b16 %v429, %v423
    %v532 = vpack.c.b16 %v430, %v424
    %v533 = vpack.c.b16 %v431, %v425
    %v534 = vpack.c.b16 %v432, %v426
    %v535 = vpack.c.b16 %v439, %v433
    %v536 = vpack.c.b16 %v440, %v434
    %v537 = vpack.c.b16 %v441, %v435
    %v538 = vpack.c.b16 %v442, %v436
    %v539 = vpack.c.b16 %v443, %v437
    %v540 = vpack.c.b16 %v444, %v438
    %637 = vmatprep.subr.bf16.mxu0 %v446
    %638 = vmatpush1.bf16.msra.mxu0 %v445
    %639 = vmatprep.subr.bf16.mxu0 %v452
    %640 = vmatpush1.bf16.msra.mxu0 %v451
    %641 = vmatprep.subr.bf16.mxu0 %v458
    %642 = vmatpush1.bf16.msra.mxu0 %v457
    %643 = vmatprep.subr.bf16.mxu0 %v464
    %644 = vmatpush1.bf16.msra.mxu0 %v463
    %645 = vmatprep.subr.bf16.mxu0 %v470
    %646 = vmatpush1.bf16.msra.mxu0 %v469
    %647 = vmatprep.subr.bf16.mxu0 %v476
    %648 = vmatpush1.bf16.msra.mxu0 %v475
    %649 = vmatprep.subr.bf16.mxu0 %v482
    %650 = vmatpush1.bf16.msra.mxu0 %v481
    %651 = vmatprep.subr.bf16.mxu0 %v488
    %652 = vmatpush1.bf16.msra.mxu0 %v487
    %653 = vmatprep.subr.bf16.mxu0 %v494
    %654 = vmatpush1.bf16.msra.mxu0 %v493
    %655 = vmatprep.subr.bf16.mxu0 %v500
    %656 = vmatpush1.bf16.msra.mxu0 %v499
    %657 = vmatprep.subr.bf16.mxu0 %v506
    %658 = vmatpush1.bf16.msra.mxu0 %v505
    %659 = vmatprep.subr.bf16.mxu0 %v512
    %660 = vmatpush1.bf16.msra.mxu0 %v511
    %661 = vmatprep.subr.bf16.mxu0 %v518
    %662 = vmatpush1.bf16.msra.mxu0 %v517
    %663 = vmatprep.subr.bf16.mxu0 %v524
    %664 = vmatpush1.bf16.msra.mxu0 %v523
    %665 = vmatprep.subr.bf16.mxu0 %v530
    %666 = vmatpush1.bf16.msra.mxu0 %v529
    %667 = vmatprep.subr.bf16.mxu0 %v536
    %668 = vmatpush1.bf16.msra.mxu0 %v535
    %669 = vmatprep.mubr.bf16.mxu0 %v60
    %670 = vmatmul.mubr.bf16.gmra.mrb[0].mxu0 %v59
    %v671 = vpop.f32.mrb[0].mxu0
    %v672 = vadd.f32 0.0, %v671
    %v673 = vpop.f32.mrb[0].mxu0
    %v674 = vadd.f32 0.0, %v673
    %v675 = vpop.f32.mrb[0].mxu0
    %v676 = vadd.f32 0.0, %v675
    %v677 = vpop.f32.mrb[0].mxu0
    %v678 = vadd.f32 0.0, %v677
    %679 = vdwg.mxu0
    %680 = vmatprep.subr.bf16.mxu0 %v448
    %681 = vmatpush1.bf16.msra.mxu0 %v447
    %682 = vmatprep.subr.bf16.mxu0 %v454
    %683 = vmatpush1.bf16.msra.mxu0 %v453
    %684 = vmatprep.subr.bf16.mxu0 %v460
    %685 = vmatpush1.bf16.msra.mxu0 %v459
    %686 = vmatprep.subr.bf16.mxu0 %v466
    %687 = vmatpush1.bf16.msra.mxu0 %v465
    %688 = vmatprep.subr.bf16.mxu0 %v472
    %689 = vmatpush1.bf16.msra.mxu0 %v471
    %690 = vmatprep.subr.bf16.mxu0 %v478
    %691 = vmatpush1.bf16.msra.mxu0 %v477
    %692 = vmatprep.subr.bf16.mxu0 %v484
    %693 = vmatpush1.bf16.msra.mxu0 %v483
    %694 = vmatprep.subr.bf16.mxu0 %v490
    %695 = vmatpush1.bf16.msra.mxu0 %v489
    %696 = vmatprep.subr.bf16.mxu0 %v496
    %697 = vmatpush1.bf16.msra.mxu0 %v495
    %698 = vmatprep.subr.bf16.mxu0 %v502
    %699 = vmatpush1.bf16.msra.mxu0 %v501
    %700 = vmatprep.subr.bf16.mxu0 %v508
    %701 = vmatpush1.bf16.msra.mxu0 %v507
    %702 = vmatprep.subr.bf16.mxu0 %v514
    %703 = vmatpush1.bf16.msra.mxu0 %v513
    %704 = vmatprep.subr.bf16.mxu0 %v520
    %705 = vmatpush1.bf16.msra.mxu0 %v519
    %706 = vmatprep.subr.bf16.mxu0 %v526
    %707 = vmatpush1.bf16.msra.mxu0 %v525
    %708 = vmatprep.subr.bf16.mxu0 %v532
    %709 = vmatpush1.bf16.msra.mxu0 %v531
    %710 = vmatprep.subr.bf16.mxu0 %v538
    %711 = vmatpush1.bf16.msra.mxu0 %v537
    %712 = vmatprep.mubr.bf16.mxu0 %v60
    %713 = vmatmul.mubr.bf16.gmra.mrb[0].mxu0 %v59
    %v714 = vpop.f32.mrb[0].mxu0
    %v715 = vadd.f32 0.0, %v714
    %v716 = vpop.f32.mrb[0].mxu0
    %v717 = vadd.f32 0.0, %v716
    %v718 = vpop.f32.mrb[0].mxu0
    %v719 = vadd.f32 0.0, %v718
    %v720 = vpop.f32.mrb[0].mxu0
    %v721 = vadd.f32 0.0, %v720
    %722 = vdwg.mxu0
    %723 = vmatprep.subr.bf16.mxu0 %v450
    %724 = vmatpush1.bf16.msra.mxu0 %v449
    %725 = vmatprep.subr.bf16.mxu0 %v456
    %726 = vmatpush1.bf16.msra.mxu0 %v455
    %727 = vmatprep.subr.bf16.mxu0 %v462
    %728 = vmatpush1.bf16.msra.mxu0 %v461
    %729 = vmatprep.subr.bf16.mxu0 %v468
    %730 = vmatpush1.bf16.msra.mxu0 %v467
    %731 = vmatprep.subr.bf16.mxu0 %v474
    %732 = vmatpush1.bf16.msra.mxu0 %v473
    %733 = vmatprep.subr.bf16.mxu0 %v480
    %734 = vmatpush1.bf16.msra.mxu0 %v479
    %735 = vmatprep.subr.bf16.mxu0 %v486
    %736 = vmatpush1.bf16.msra.mxu0 %v485
    %737 = vmatprep.subr.bf16.mxu0 %v492
    %738 = vmatpush1.bf16.msra.mxu0 %v491
    %739 = vmatprep.subr.bf16.mxu0 %v498
    %740 = vmatpush1.bf16.msra.mxu0 %v497
    %741 = vmatprep.subr.bf16.mxu0 %v504
    %742 = vmatpush1.bf16.msra.mxu0 %v503
    %743 = vmatprep.subr.bf16.mxu0 %v510
    %744 = vmatpush1.bf16.msra.mxu0 %v509
    %745 = vmatprep.subr.bf16.mxu0 %v516
    %746 = vmatpush1.bf16.msra.mxu0 %v515
    %747 = vmatprep.subr.bf16.mxu0 %v522
    %748 = vmatpush1.bf16.msra.mxu0 %v521
    %749 = vmatprep.subr.bf16.mxu0 %v528
    %750 = vmatpush1.bf16.msra.mxu0 %v527
    %751 = vmatprep.subr.bf16.mxu0 %v534
    %752 = vmatpush1.bf16.msra.mxu0 %v533
    %753 = vmatprep.subr.bf16.mxu0 %v540
    %754 = vmatpush1.bf16.msra.mxu0 %v539
    %755 = vmatprep.mubr.bf16.mxu0 %v60
    %756 = vmatmul.mubr.bf16.gmra.mrb[0].mxu0 %v59
    %v757 = vpop.f32.mrb[0].mxu0
    %v758 = vadd.f32 0.0, %v757
    %v759 = vpop.f32.mrb[0].mxu0
    %v760 = vadd.f32 0.0, %v759
    %v761 = vpop.f32.mrb[0].mxu0
    %v762 = vadd.f32 0.0, %v761
    %v763 = vpop.f32.mrb[0].mxu0
    %v764 = vadd.f32 0.0, %v763
    %765 = vdwg.mxu0
    %vm766 = vcmp.gt.f32.partialorder %v672, 0.0
    %vm767 = vcmp.gt.f32.partialorder %v674, 0.0
    %vm768 = vcmp.gt.f32.partialorder %v715, 0.0
    %vm769 = vcmp.gt.f32.partialorder %v717, 0.0
    %vm770 = vcmp.gt.f32.partialorder %v758, 0.0
    %vm771 = vcmp.gt.f32.partialorder %v760, 0.0
    %vm772 = vcmp.gt.f32.partialorder %v676, 0.0
    %vm773 = vcmp.gt.f32.partialorder %v678, 0.0
    %vm774 = vcmp.gt.f32.partialorder %v719, 0.0
    %vm775 = vcmp.gt.f32.partialorder %v721, 0.0
    %vm776 = vcmp.gt.f32.partialorder %v762, 0.0
    %vm777 = vcmp.gt.f32.partialorder %v764, 0.0
    %v778 = vmin.f32 %v672, 0.0
    %v779 = vmin.f32 %v674, 0.0
    %v780 = vmin.f32 %v715, 0.0
    %v781 = vmin.f32 %v717, 0.0
    %v782 = vmin.f32 %v758, 0.0
    %v783 = vmin.f32 %v760, 0.0
    %v784 = vmin.f32 %v676, 0.0
    %v785 = vmin.f32 %v678, 0.0
    %v786 = vmin.f32 %v719, 0.0
    %v787 = vmin.f32 %v721, 0.0
    %v788 = vmin.f32 %v762, 0.0
    %v789 = vmin.f32 %v764, 0.0
    %v790 = vmul.f32 %v778, 1.442695
    %v791 = vpow.pop %v790
    %v792 = vmul.f32 %v779, 1.442695
    %v793 = vpow.pop %v792
    %v794 = vmul.f32 %v780, 1.442695
    %v795 = vpow.pop %v794
    %v796 = vmul.f32 %v781, 1.442695
    %v797 = vpow.pop %v796
    %v798 = vmul.f32 %v782, 1.442695
    %v799 = vpow.pop %v798
    %v800 = vmul.f32 %v783, 1.442695
    %v801 = vpow.pop %v800
    %v802 = vmul.f32 %v784, 1.442695
    %v803 = vpow.pop %v802
    %v804 = vmul.f32 %v785, 1.442695
    %v805 = vpow.pop %v804
    %v806 = vmul.f32 %v786, 1.442695
    %v807 = vpow.pop %v806
    %v808 = vmul.f32 %v787, 1.442695
    %v809 = vpow.pop %v808
    %v810 = vmul.f32 %v788, 1.442695
    %v811 = vpow.pop %v810
    %v812 = vmul.f32 %v789, 1.442695
    %v813 = vpow.pop %v812
    %v814 = vsub.f32 %v791, 1.0
    %v815 = vsub.f32 %v793, 1.0
    %v816 = vsub.f32 %v795, 1.0
    %v817 = vsub.f32 %v797, 1.0
    %v818 = vsub.f32 %v799, 1.0
    %v819 = vsub.f32 %v801, 1.0
    %v820 = vsub.f32 %v803, 1.0
    %v821 = vsub.f32 %v805, 1.0
    %v822 = vsub.f32 %v807, 1.0
    %v823 = vsub.f32 %v809, 1.0
    %v824 = vsub.f32 %v811, 1.0
    %v825 = vsub.f32 %v813, 1.0
    %v826 = vsel %vm766, %v672, %v814
    %v827 = vsel %vm767, %v674, %v815
    %v828 = vsel %vm768, %v715, %v816
    %v829 = vsel %vm769, %v717, %v817
    %v830 = vsel %vm770, %v758, %v818
    %v831 = vsel %vm771, %v760, %v819
    %v832 = vsel %vm772, %v676, %v820
    %v833 = vsel %vm773, %v678, %v821
    %v834 = vsel %vm774, %v719, %v822
    %v835 = vsel %vm775, %v721, %v823
    %v836 = vsel %vm776, %v762, %v824
    %v837 = vsel %vm777, %v764, %v825
    %838 = vst [vmem:[#allocation3] sm:$0x11] 0
    %839 = vst [vmem:[#allocation3 + $0x8] sm:$0x11] 0
    %840 = vst [vmem:[#allocation3 + $0x10] sm:$0x11] 0
    %841 = vst [vmem:[#allocation3 + $0x30] sm:$0x22] 0
    %842 = vst [vmem:[#allocation3 + $0x38] sm:$0x22] 0
    %843 = vst [vmem:[#allocation3 + $0x40] sm:$0x22] 0
    %v844 = vpack.c.bf16 %v832, %v826
    %v845 = vpack.c.bf16 %v833, %v827
    %v846 = vpack.c.bf16 %v834, %v828
    %v847 = vpack.c.bf16 %v835, %v829
    %v848 = vpack.c.bf16 %v836, %v830
    %v849 = vpack.c.bf16 %v837, %v831
    %v856 = vunpack.c.l.b16 %v844
    %v857 = vunpack.c.l.b16 %v845
    %v858 = vunpack.c.l.b16 %v846
    %v859 = vunpack.c.l.b16 %v847
    %v860 = vunpack.c.l.b16 %v848
    %v861 = vunpack.c.l.b16 %v849
    %v862 = vunpack.c.h.b16 %v844
    %v863 = vunpack.c.h.b16 %v845
    %v864 = vunpack.c.h.b16 %v846
    %v865 = vunpack.c.h.b16 %v847
    %v866 = vunpack.c.h.b16 %v848
    %v867 = vunpack.c.h.b16 %v849
    %v868 = vpack.c.b16 %v857, %v856
    %v869 = vpack.c.b16 %v859, %v858
    %v870 = vpack.c.b16 %v861, %v860
    %v871 = vpack.c.b16 %v863, %v862
    %v872 = vpack.c.b16 %v865, %v864
    %v873 = vpack.c.b16 %v867, %v866
    %vm874 = vcmask 1040384
    %vm875 = vcmask 1044484
    %vm876 = vmor %vm874, %vm875
    %v877 = vrot.slane %v868, 7
    %v878 = vrot.slane %v869, 7
    %v879 = vrot.slane %v870, 7
    %v880 = vrot.slane %v877, 4
    %v881 = vrot.slane %v871, 7
    %v882 = vsel %vm876, %v880, %v881
    %v883 = vrot.slane %v878, 4
    %v884 = vrot.slane %v872, 7
    %v885 = vsel %vm876, %v883, %v884
    %v886 = vrot.slane %v879, 4
    %v887 = vrot.slane %v873, 7
    %v888 = vsel %vm876, %v886, %v887
    %v889 = vrot.slane %v881, 4
    %v890 = vrot.slane %v884, 4
    %v891 = vrot.slane %v887, 4
    %901 = vst [vmem:[#allocation3] sm:$0xee] %v877
    %902 = vst [vmem:[#allocation3 + $0x8] sm:$0xee] %v878
    %903 = vst [vmem:[#allocation3 + $0x10] sm:$0xee] %v879
    %904 = vst [vmem:[#allocation3 + $0x18] sm:$0xff] %v882
    %905 = vst [vmem:[#allocation3 + $0x20] sm:$0xff] %v885
    %906 = vst [vmem:[#allocation3 + $0x28] sm:$0xff] %v888
    %907 = vst [vmem:[#allocation3 + $0x30] sm:$0x11] %v889
    %908 = vst [vmem:[#allocation3 + $0x38] sm:$0x11] %v890
    %909 = vst [vmem:[#allocation3 + $0x40] sm:$0x11] %v891
    %v910 = vld [vmem:[#allocation3] sm:$0xff]
    %v911 = vld [vmem:[#allocation3 + $0x8] sm:$0xf]
    %v912 = vld [vmem:[#allocation3 + $0x18] sm:$0xff]
    %v913 = vld [vmem:[#allocation3 + $0x20] sm:$0xf]
    %v914 = vld [vmem:[#allocation6] sm:$0xff]
    %v915 = vld [vmem:[#allocation6 + $0x8] sm:$0xf]
    %v916 = vld [vmem:[#allocation6 + $0xc] sm:$0xff]
    %v917 = vld [vmem:[#allocation6 + $0x14] sm:$0xf]
    %v918 = vld [vmem:[#allocation6 + $0x18] sm:$0xff]
    %v919 = vld [vmem:[#allocation6 + $0x20] sm:$0xf]
    %v920 = vld [vmem:[#allocation6 + $0x24] sm:$0xff]
    %v921 = vld [vmem:[#allocation6 + $0x2c] sm:$0xf]
    %v922 = vld [vmem:[#allocation6 + $0x30] sm:$0xff]
    %v923 = vld [vmem:[#allocation6 + $0x38] sm:$0xf]
    %v924 = vld [vmem:[#allocation6 + $0x3c] sm:$0xff]
    %v925 = vld [vmem:[#allocation6 + $0x44] sm:$0xf]
    %v926 = vld [vmem:[#allocation6 + $0x48] sm:$0xff]
    %v927 = vld [vmem:[#allocation6 + $0x50] sm:$0xf]
    %v928 = vld [vmem:[#allocation6 + $0x54] sm:$0xff]
    %v929 = vld [vmem:[#allocation6 + $0x5c] sm:$0xf]
    %v930 = vld [vmem:[#allocation6 + $0x60] sm:$0xff]
    %v931 = vld [vmem:[#allocation6 + $0x68] sm:$0xf]
    %v932 = vld [vmem:[#allocation6 + $0x6c] sm:$0xff]
    %v933 = vld [vmem:[#allocation6 + $0x74] sm:$0xf]
    %v934 = vld [vmem:[#allocation6 + $0x78] sm:$0xff]
    %v935 = vld [vmem:[#allocation6 + $0x80] sm:$0xf]
    %v936 = vld [vmem:[#allocation6 + $0x84] sm:$0xff]
    %v937 = vld [vmem:[#allocation6 + $0x8c] sm:$0xf]
    %v938 = vld [vmem:[#allocation6 + $0x90] sm:$0xff]
    %v939 = vld [vmem:[#allocation6 + $0x98] sm:$0xf]
    %v940 = vld [vmem:[#allocation6 + $0x9c] sm:$0xff]
    %v941 = vld [vmem:[#allocation6 + $0xa4] sm:$0xf]
    %v942 = vld [vmem:[#allocation6 + $0xa8] sm:$0xff]
    %v943 = vld [vmem:[#allocation6 + $0xb0] sm:$0xf]
    %v944 = vld [vmem:[#allocation6 + $0xb4] sm:$0xff]
    %v945 = vld [vmem:[#allocation6 + $0xbc] sm:$0xf]
    %v946 = vld [vmem:[#allocation6 + $0xc0] sm:$0xff]
    %v947 = vld [vmem:[#allocation6 + $0xc8] sm:$0xf]
    %v948 = vld [vmem:[#allocation6 + $0xcc] sm:$0xff]
    %v949 = vld [vmem:[#allocation6 + $0xd4] sm:$0xf]
    %v950 = vld [vmem:[#allocation6 + $0xd8] sm:$0xff]
    %v951 = vld [vmem:[#allocation6 + $0xe0] sm:$0xf]
    %v952 = vld [vmem:[#allocation6 + $0xe4] sm:$0xff]
    %v953 = vld [vmem:[#allocation6 + $0xec] sm:$0xf]
    %v954 = vld [vmem:[#allocation6 + $0xf0] sm:$0xff]
    %v955 = vld [vmem:[#allocation6 + $0xf8] sm:$0xf]
    %v956 = vld [vmem:[#allocation6 + $0xfc] sm:$0xff]
    %v957 = vld [vmem:[#allocation6 + $0x104] sm:$0xf]
    %v958 = vld [vmem:[#allocation6 + $0x108] sm:$0xff]
    %v959 = vld [vmem:[#allocation6 + $0x110] sm:$0xf]
    %v960 = vld [vmem:[#allocation6 + $0x114] sm:$0xff]
    %v961 = vld [vmem:[#allocation6 + $0x11c] sm:$0xf]
    %v962 = vld [vmem:[#allocation6 + $0x120] sm:$0xff]
    %v963 = vld [vmem:[#allocation6 + $0x128] sm:$0xf]
    %v964 = vld [vmem:[#allocation6 + $0x12c] sm:$0xff]
    %v965 = vld [vmem:[#allocation6 + $0x134] sm:$0xf]
    %v966 = vld [vmem:[#allocation6 + $0x138] sm:$0xff]
    %v967 = vld [vmem:[#allocation6 + $0x140] sm:$0xf]
    %v968 = vld [vmem:[#allocation6 + $0x144] sm:$0xff]
    %v969 = vld [vmem:[#allocation6 + $0x14c] sm:$0xf]
    %v970 = vld [vmem:[#allocation6 + $0x150] sm:$0xff]
    %v971 = vld [vmem:[#allocation6 + $0x158] sm:$0xf]
    %v972 = vld [vmem:[#allocation6 + $0x15c] sm:$0xff]
    %v973 = vld [vmem:[#allocation6 + $0x164] sm:$0xf]
    %v974 = vld [vmem:[#allocation6 + $0x168] sm:$0xff]
    %v975 = vld [vmem:[#allocation6 + $0x170] sm:$0xf]
    %v976 = vld [vmem:[#allocation6 + $0x174] sm:$0xff]
    %v977 = vld [vmem:[#allocation6 + $0x17c] sm:$0xf]
    %v978 = vld [vmem:[#allocation6 + $0x180] sm:$0xff]
    %v979 = vld [vmem:[#allocation6 + $0x188] sm:$0xf]
    %v980 = vld [vmem:[#allocation6 + $0x18c] sm:$0xff]
    %v981 = vld [vmem:[#allocation6 + $0x194] sm:$0xf]
    %v982 = vld [vmem:[#allocation6 + $0x198] sm:$0xff]
    %v983 = vld [vmem:[#allocation6 + $0x1a0] sm:$0xf]
    %v984 = vld [vmem:[#allocation6 + $0x1a4] sm:$0xff]
    %v985 = vld [vmem:[#allocation6 + $0x1ac] sm:$0xf]
    %v986 = vld [vmem:[#allocation6 + $0x1b0] sm:$0xff]
    %v987 = vld [vmem:[#allocation6 + $0x1b8] sm:$0xf]
    %v988 = vld [vmem:[#allocation6 + $0x1bc] sm:$0xff]
    %v989 = vld [vmem:[#allocation6 + $0x1c4] sm:$0xf]
    %v990 = vld [vmem:[#allocation6 + $0x1c8] sm:$0xff]
    %v991 = vld [vmem:[#allocation6 + $0x1d0] sm:$0xf]
    %v992 = vld [vmem:[#allocation6 + $0x1d4] sm:$0xff]
    %v993 = vld [vmem:[#allocation6 + $0x1dc] sm:$0xf]
    %v994 = vld [vmem:[#allocation6 + $0x1e0] sm:$0xff]
    %v995 = vld [vmem:[#allocation6 + $0x1e8] sm:$0xf]
    %v996 = vld [vmem:[#allocation6 + $0x1ec] sm:$0xff]
    %v997 = vld [vmem:[#allocation6 + $0x1f4] sm:$0xf]
    %v998 = vld [vmem:[#allocation6 + $0x1f8] sm:$0xff]
    %v999 = vld [vmem:[#allocation6 + $0x200] sm:$0xf]
    %v1000 = vld [vmem:[#allocation6 + $0x204] sm:$0xff]
    %v1001 = vld [vmem:[#allocation6 + $0x20c] sm:$0xf]
    %v1002 = vld [vmem:[#allocation6 + $0x210] sm:$0xff]
    %v1003 = vld [vmem:[#allocation6 + $0x218] sm:$0xf]
    %v1004 = vld [vmem:[#allocation6 + $0x21c] sm:$0xff]
    %v1005 = vld [vmem:[#allocation6 + $0x224] sm:$0xf]
    %v1006 = vld [vmem:[#allocation6 + $0x228] sm:$0xff]
    %v1007 = vld [vmem:[#allocation6 + $0x230] sm:$0xf]
    %v1008 = vld [vmem:[#allocation6 + $0x234] sm:$0xff]
    %v1009 = vld [vmem:[#allocation6 + $0x23c] sm:$0xf]
    %v1010 = vld [vmem:[#allocation3 + $0x30] sm:$0x11]
    %v1011 = vld [vmem:[#allocation3 + $0x38] sm:$0x1]
    %s1012 = scalar_lea.vmem [#allocation6], 576
    %v1013 = vld [vmem:[%s1012] sm:$0xff]
    %v1014 = vld [vmem:[%s1012 + $0x8] sm:$0xf]
    %v1015 = vld [vmem:[%s1012 + $0xc] sm:$0xff]
    %v1016 = vld [vmem:[%s1012 + $0x14] sm:$0xf]
    %v1017 = vld [vmem:[%s1012 + $0x18] sm:$0xff]
    %v1018 = vld [vmem:[%s1012 + $0x20] sm:$0xf]
    %v1019 = vld [vmem:[%s1012 + $0x24] sm:$0xff]
    %v1020 = vld [vmem:[%s1012 + $0x2c] sm:$0xf]
    %v1021 = vld [vmem:[%s1012 + $0x30] sm:$0xff]
    %v1022 = vld [vmem:[%s1012 + $0x38] sm:$0xf]
    %v1023 = vld [vmem:[%s1012 + $0x3c] sm:$0xff]
    %v1024 = vld [vmem:[%s1012 + $0x44] sm:$0xf]
    %v1025 = vld [vmem:[%s1012 + $0x48] sm:$0xff]
    %v1026 = vld [vmem:[%s1012 + $0x50] sm:$0xf]
    %v1027 = vld [vmem:[%s1012 + $0x54] sm:$0xff]
    %v1028 = vld [vmem:[%s1012 + $0x5c] sm:$0xf]
    %v1029 = vld [vmem:[%s1012 + $0x60] sm:$0xff]
    %v1030 = vld [vmem:[%s1012 + $0x68] sm:$0xf]
    %v1031 = vld [vmem:[%s1012 + $0x6c] sm:$0xff]
    %v1032 = vld [vmem:[%s1012 + $0x74] sm:$0xf]
    %v1033 = vld [vmem:[%s1012 + $0x78] sm:$0xff]
    %v1034 = vld [vmem:[%s1012 + $0x80] sm:$0xf]
    %v1035 = vld [vmem:[%s1012 + $0x84] sm:$0xff]
    %v1036 = vld [vmem:[%s1012 + $0x8c] sm:$0xf]
    %v1037 = vld [vmem:[%s1012 + $0x90] sm:$0xff]
    %v1038 = vld [vmem:[%s1012 + $0x98] sm:$0xf]
    %v1039 = vld [vmem:[%s1012 + $0x9c] sm:$0xff]
    %v1040 = vld [vmem:[%s1012 + $0xa4] sm:$0xf]
    %v1041 = vld [vmem:[%s1012 + $0xa8] sm:$0xff]
    %v1042 = vld [vmem:[%s1012 + $0xb0] sm:$0xf]
    %v1043 = vld [vmem:[%s1012 + $0xb4] sm:$0xff]
    %v1044 = vld [vmem:[%s1012 + $0xbc] sm:$0xf]
    %v1045 = vld [vmem:[%s1012 + $0xc0] sm:$0xff]
    %v1046 = vld [vmem:[%s1012 + $0xc8] sm:$0xf]
    %v1047 = vld [vmem:[%s1012 + $0xcc] sm:$0xff]
    %v1048 = vld [vmem:[%s1012 + $0xd4] sm:$0xf]
    %v1049 = vld [vmem:[%s1012 + $0xd8] sm:$0xff]
    %v1050 = vld [vmem:[%s1012 + $0xe0] sm:$0xf]
    %v1051 = vld [vmem:[%s1012 + $0xe4] sm:$0xff]
    %v1052 = vld [vmem:[%s1012 + $0xec] sm:$0xf]
    %v1053 = vld [vmem:[%s1012 + $0xf0] sm:$0xff]
    %v1054 = vld [vmem:[%s1012 + $0xf8] sm:$0xf]
    %v1055 = vld [vmem:[%s1012 + $0xfc] sm:$0xff]
    %v1056 = vld [vmem:[%s1012 + $0x104] sm:$0xf]
    %v1057 = vld [vmem:[%s1012 + $0x108] sm:$0xff]
    %v1058 = vld [vmem:[%s1012 + $0x110] sm:$0xf]
    %v1059 = vld [vmem:[%s1012 + $0x114] sm:$0xff]
    %v1060 = vld [vmem:[%s1012 + $0x11c] sm:$0xf]
    %v1061 = vld [vmem:[%s1012 + $0x120] sm:$0xff]
    %v1062 = vld [vmem:[%s1012 + $0x128] sm:$0xf]
    %v1063 = vld [vmem:[%s1012 + $0x12c] sm:$0xff]
    %v1064 = vld [vmem:[%s1012 + $0x134] sm:$0xf]
    %v1065 = vld [vmem:[%s1012 + $0x138] sm:$0xff]
    %v1066 = vld [vmem:[%s1012 + $0x140] sm:$0xf]
    %v1067 = vld [vmem:[%s1012 + $0x144] sm:$0xff]
    %v1068 = vld [vmem:[%s1012 + $0x14c] sm:$0xf]
    %v1069 = vld [vmem:[%s1012 + $0x150] sm:$0xff]
    %v1070 = vld [vmem:[%s1012 + $0x158] sm:$0xf]
    %v1071 = vld [vmem:[%s1012 + $0x15c] sm:$0xff]
    %v1072 = vld [vmem:[%s1012 + $0x164] sm:$0xf]
    %v1073 = vld [vmem:[%s1012 + $0x168] sm:$0xff]
    %v1074 = vld [vmem:[%s1012 + $0x170] sm:$0xf]
    %v1075 = vld [vmem:[%s1012 + $0x174] sm:$0xff]
    %v1076 = vld [vmem:[%s1012 + $0x17c] sm:$0xf]
    %v1077 = vld [vmem:[%s1012 + $0x180] sm:$0xff]
    %v1078 = vld [vmem:[%s1012 + $0x188] sm:$0xf]
    %v1079 = vld [vmem:[%s1012 + $0x18c] sm:$0xff]
    %v1080 = vld [vmem:[%s1012 + $0x194] sm:$0xf]
    %v1081 = vld [vmem:[%s1012 + $0x198] sm:$0xff]
    %v1082 = vld [vmem:[%s1012 + $0x1a0] sm:$0xf]
    %v1083 = vld [vmem:[%s1012 + $0x1a4] sm:$0xff]
    %v1084 = vld [vmem:[%s1012 + $0x1ac] sm:$0xf]
    %v1085 = vld [vmem:[%s1012 + $0x1b0] sm:$0xff]
    %v1086 = vld [vmem:[%s1012 + $0x1b8] sm:$0xf]
    %v1087 = vld [vmem:[%s1012 + $0x1bc] sm:$0xff]
    %v1088 = vld [vmem:[%s1012 + $0x1c4] sm:$0xf]
    %v1089 = vld [vmem:[%s1012 + $0x1c8] sm:$0xff]
    %v1090 = vld [vmem:[%s1012 + $0x1d0] sm:$0xf]
    %v1091 = vld [vmem:[%s1012 + $0x1d4] sm:$0xff]
    %v1092 = vld [vmem:[%s1012 + $0x1dc] sm:$0xf]
    %v1093 = vld [vmem:[%s1012 + $0x1e0] sm:$0xff]
    %v1094 = vld [vmem:[%s1012 + $0x1e8] sm:$0xf]
    %v1095 = vld [vmem:[%s1012 + $0x1ec] sm:$0xff]
    %v1096 = vld [vmem:[%s1012 + $0x1f4] sm:$0xf]
    %v1097 = vld [vmem:[%s1012 + $0x1f8] sm:$0xff]
    %v1098 = vld [vmem:[%s1012 + $0x200] sm:$0xf]
    %v1099 = vld [vmem:[%s1012 + $0x204] sm:$0xff]
    %v1100 = vld [vmem:[%s1012 + $0x20c] sm:$0xf]
    %v1101 = vld [vmem:[%s1012 + $0x210] sm:$0xff]
    %v1102 = vld [vmem:[%s1012 + $0x218] sm:$0xf]
    %v1103 = vld [vmem:[%s1012 + $0x21c] sm:$0xff]
    %v1104 = vld [vmem:[%s1012 + $0x224] sm:$0xf]
    %v1105 = vld [vmem:[%s1012 + $0x228] sm:$0xff]
    %v1106 = vld [vmem:[%s1012 + $0x230] sm:$0xf]
    %v1107 = vld [vmem:[%s1012 + $0x234] sm:$0xff]
    %v1108 = vld [vmem:[%s1012 + $0x23c] sm:$0xf]
    %v1115 = vunpack.c.l.b16 %v910
    %v1116 = vunpack.c.h.b16 %v910
    %v1117 = vunpack.c.l.b16 %v911
    %v1118 = vunpack.c.l.b16 %v912
    %v1119 = vunpack.c.h.b16 %v912
    %v1120 = vunpack.c.l.b16 %v913
    %v1121 = vunpack.c.l.b16 %v1010
    %v1122 = vunpack.c.h.b16 %v1010
    %v1123 = vunpack.c.l.b16 %v1011
    %v1124 = vpack.c.b16 %v1118, %v1115
    %v1125 = vpack.c.b16 %v1119, %v1116
    %v1126 = vpack.c.b16 %v1120, %v1117
    %v1127 = vpack.c.b16 %v1121, %v1121
    %v1128 = vpack.c.b16 %v1122, %v1122
    %v1129 = vpack.c.b16 %v1123, %v1123
    %vm1130 = vsmask.f32 7424
    %v1132 = vshrl.u32 %v1124, 16
    %v1134 = vshll.u32 %v1124, 16
    %v1136 = vrot.slane %v1134, 1
    %v1137 = vor.u32 %v1132, %v1136
    %v1139 = vshll.u32 %v1127, 16
    %v1141 = vrot.slane %v1139, 1
    %v1142 = vsel %vm1130, %v1137, %v1141
    %v1144 = vshrl.u32 %v1125, 16
    %v1146 = vshll.u32 %v1125, 16
    %v1148 = vrot.slane %v1146, 1
    %v1149 = vor.u32 %v1144, %v1148
    %v1151 = vshll.u32 %v1128, 16
    %v1153 = vrot.slane %v1151, 1
    %v1154 = vsel %vm1130, %v1149, %v1153
    %v1156 = vshrl.u32 %v1126, 16
    %v1158 = vshll.u32 %v1126, 16
    %v1160 = vrot.slane %v1158, 1
    %v1161 = vor.u32 %v1156, %v1160
    %v1163 = vshll.u32 %v1129, 16
    %v1165 = vrot.slane %v1163, 1
    %v1166 = vsel %vm1130, %v1161, %v1165
    %v1266 = vunpack.c.l.b16 %v1013
    %v1267 = vunpack.c.h.b16 %v1013
    %v1268 = vunpack.c.l.b16 %v1014
    %v1269 = vunpack.c.l.b16 %v1015
    %v1270 = vunpack.c.h.b16 %v1015
    %v1271 = vunpack.c.l.b16 %v1016
    %v1272 = vunpack.c.l.b16 %v1017
    %v1273 = vunpack.c.h.b16 %v1017
    %v1274 = vunpack.c.l.b16 %v1018
    %v1275 = vunpack.c.l.b16 %v1019
    %v1276 = vunpack.c.h.b16 %v1019
    %v1277 = vunpack.c.l.b16 %v1020
    %v1278 = vunpack.c.l.b16 %v1021
    %v1279 = vunpack.c.h.b16 %v1021
    %v1280 = vunpack.c.l.b16 %v1022
    %v1281 = vunpack.c.l.b16 %v1023
    %v1282 = vunpack.c.h.b16 %v1023
    %v1283 = vunpack.c.l.b16 %v1024
    %v1284 = vunpack.c.l.b16 %v1025
    %v1285 = vunpack.c.h.b16 %v1025
    %v1286 = vunpack.c.l.b16 %v1026
    %v1287 = vunpack.c.l.b16 %v1027
    %v1288 = vunpack.c.h.b16 %v1027
    %v1289 = vunpack.c.l.b16 %v1028
    %v1290 = vunpack.c.l.b16 %v1029
    %v1291 = vunpack.c.h.b16 %v1029
    %v1292 = vunpack.c.l.b16 %v1030
    %v1293 = vunpack.c.l.b16 %v1031
    %v1294 = vunpack.c.h.b16 %v1031
    %v1295 = vunpack.c.l.b16 %v1032
    %v1296 = vunpack.c.l.b16 %v1033
    %v1297 = vunpack.c.h.b16 %v1033
    %v1298 = vunpack.c.l.b16 %v1034
    %v1299 = vunpack.c.l.b16 %v1035
    %v1300 = vunpack.c.h.b16 %v1035
    %v1301 = vunpack.c.l.b16 %v1036
    %v1302 = vunpack.c.l.b16 %v1037
    %v1303 = vunpack.c.h.b16 %v1037
    %v1304 = vunpack.c.l.b16 %v1038
    %v1305 = vunpack.c.l.b16 %v1039
    %v1306 = vunpack.c.h.b16 %v1039
    %v1307 = vunpack.c.l.b16 %v1040
    %v1308 = vunpack.c.l.b16 %v1041
    %v1309 = vunpack.c.h.b16 %v1041
    %v1310 = vunpack.c.l.b16 %v1042
    %v1311 = vunpack.c.l.b16 %v1043
    %v1312 = vunpack.c.h.b16 %v1043
    %v1313 = vunpack.c.l.b16 %v1044
    %v1314 = vunpack.c.l.b16 %v1045
    %v1315 = vunpack.c.h.b16 %v1045
    %v1316 = vunpack.c.l.b16 %v1046
    %v1317 = vunpack.c.l.b16 %v1047
    %v1318 = vunpack.c.h.b16 %v1047
    %v1319 = vunpack.c.l.b16 %v1048
    %v1320 = vunpack.c.l.b16 %v1049
    %v1321 = vunpack.c.h.b16 %v1049
    %v1322 = vunpack.c.l.b16 %v1050
    %v1323 = vunpack.c.l.b16 %v1051
    %v1324 = vunpack.c.h.b16 %v1051
    %v1325 = vunpack.c.l.b16 %v1052
    %v1326 = vunpack.c.l.b16 %v1053
    %v1327 = vunpack.c.h.b16 %v1053
    %v1328 = vunpack.c.l.b16 %v1054
    %v1329 = vunpack.c.l.b16 %v1055
    %v1330 = vunpack.c.h.b16 %v1055
    %v1331 = vunpack.c.l.b16 %v1056
    %v1332 = vunpack.c.l.b16 %v1057
    %v1333 = vunpack.c.h.b16 %v1057
    %v1334 = vunpack.c.l.b16 %v1058
    %v1335 = vunpack.c.l.b16 %v1059
    %v1336 = vunpack.c.h.b16 %v1059
    %v1337 = vunpack.c.l.b16 %v1060
    %v1338 = vunpack.c.l.b16 %v1061
    %v1339 = vunpack.c.h.b16 %v1061
    %v1340 = vunpack.c.l.b16 %v1062
    %v1341 = vunpack.c.l.b16 %v1063
    %v1342 = vunpack.c.h.b16 %v1063
    %v1343 = vunpack.c.l.b16 %v1064
    %v1344 = vunpack.c.l.b16 %v1065
    %v1345 = vunpack.c.h.b16 %v1065
    %v1346 = vunpack.c.l.b16 %v1066
    %v1347 = vunpack.c.l.b16 %v1067
    %v1348 = vunpack.c.h.b16 %v1067
    %v1349 = vunpack.c.l.b16 %v1068
    %v1350 = vunpack.c.l.b16 %v1069
    %v1351 = vunpack.c.h.b16 %v1069
    %v1352 = vunpack.c.l.b16 %v1070
    %v1353 = vunpack.c.l.b16 %v1071
    %v1354 = vunpack.c.h.b16 %v1071
    %v1355 = vunpack.c.l.b16 %v1072
    %v1356 = vunpack.c.l.b16 %v1073
    %v1357 = vunpack.c.h.b16 %v1073
    %v1358 = vunpack.c.l.b16 %v1074
    %v1359 = vunpack.c.l.b16 %v1075
    %v1360 = vunpack.c.h.b16 %v1075
    %v1361 = vunpack.c.l.b16 %v1076
    %v1362 = vunpack.c.l.b16 %v1077
    %v1363 = vunpack.c.h.b16 %v1077
    %v1364 = vunpack.c.l.b16 %v1078
    %v1365 = vunpack.c.l.b16 %v1079
    %v1366 = vunpack.c.h.b16 %v1079
    %v1367 = vunpack.c.l.b16 %v1080
    %v1368 = vunpack.c.l.b16 %v1081
    %v1369 = vunpack.c.h.b16 %v1081
    %v1370 = vunpack.c.l.b16 %v1082
    %v1371 = vunpack.c.l.b16 %v1083
    %v1372 = vunpack.c.h.b16 %v1083
    %v1373 = vunpack.c.l.b16 %v1084
    %v1374 = vunpack.c.l.b16 %v1085
    %v1375 = vunpack.c.h.b16 %v1085
    %v1376 = vunpack.c.l.b16 %v1086
    %v1377 = vunpack.c.l.b16 %v1087
    %v1378 = vunpack.c.h.b16 %v1087
    %v1379 = vunpack.c.l.b16 %v1088
    %v1380 = vunpack.c.l.b16 %v1089
    %v1381 = vunpack.c.h.b16 %v1089
    %v1382 = vunpack.c.l.b16 %v1090
    %v1383 = vunpack.c.l.b16 %v1091
    %v1384 = vunpack.c.h.b16 %v1091
    %v1385 = vunpack.c.l.b16 %v1092
    %v1386 = vunpack.c.l.b16 %v1093
    %v1387 = vunpack.c.h.b16 %v1093
    %v1388 = vunpack.c.l.b16 %v1094
    %v1389 = vunpack.c.l.b16 %v1095
    %v1390 = vunpack.c.h.b16 %v1095
    %v1391 = vunpack.c.l.b16 %v1096
    %v1392 = vunpack.c.l.b16 %v1097
    %v1393 = vunpack.c.h.b16 %v1097
    %v1394 = vunpack.c.l.b16 %v1098
    %v1395 = vunpack.c.l.b16 %v1099
    %v1396 = vunpack.c.h.b16 %v1099
    %v1397 = vunpack.c.l.b16 %v1100
    %v1398 = vunpack.c.l.b16 %v1101
    %v1399 = vunpack.c.h.b16 %v1101
    %v1400 = vunpack.c.l.b16 %v1102
    %v1401 = vunpack.c.l.b16 %v1103
    %v1402 = vunpack.c.h.b16 %v1103
    %v1403 = vunpack.c.l.b16 %v1104
    %v1404 = vunpack.c.l.b16 %v1105
    %v1405 = vunpack.c.h.b16 %v1105
    %v1406 = vunpack.c.l.b16 %v1106
    %v1407 = vunpack.c.l.b16 %v1107
    %v1408 = vunpack.c.h.b16 %v1107
    %v1409 = vunpack.c.l.b16 %v1108
    %v1410 = vpack.c.b16 %v1269, %v1266
    %v1411 = vpack.c.b16 %v1270, %v1267
    %v1412 = vpack.c.b16 %v1271, %v1268
    %v1413 = vpack.c.b16 %v1275, %v1272
    %v1414 = vpack.c.b16 %v1276, %v1273
    %v1415 = vpack.c.b16 %v1277, %v1274
    %v1416 = vpack.c.b16 %v1281, %v1278
    %v1417 = vpack.c.b16 %v1282, %v1279
    %v1418 = vpack.c.b16 %v1283, %v1280
    %v1419 = vpack.c.b16 %v1287, %v1284
    %v1420 = vpack.c.b16 %v1288, %v1285
    %v1421 = vpack.c.b16 %v1289, %v1286
    %v1422 = vpack.c.b16 %v1293, %v1290
    %v1423 = vpack.c.b16 %v1294, %v1291
    %v1424 = vpack.c.b16 %v1295, %v1292
    %v1425 = vpack.c.b16 %v1299, %v1296
    %v1426 = vpack.c.b16 %v1300, %v1297
    %v1427 = vpack.c.b16 %v1301, %v1298
    %v1428 = vpack.c.b16 %v1305, %v1302
    %v1429 = vpack.c.b16 %v1306, %v1303
    %v1430 = vpack.c.b16 %v1307, %v1304
    %v1431 = vpack.c.b16 %v1311, %v1308
    %v1432 = vpack.c.b16 %v1312, %v1309
    %v1433 = vpack.c.b16 %v1313, %v1310
    %v1434 = vpack.c.b16 %v1317, %v1314
    %v1435 = vpack.c.b16 %v1318, %v1315
    %v1436 = vpack.c.b16 %v1319, %v1316
    %v1437 = vpack.c.b16 %v1323, %v1320
    %v1438 = vpack.c.b16 %v1324, %v1321
    %v1439 = vpack.c.b16 %v1325, %v1322
    %v1440 = vpack.c.b16 %v1329, %v1326
    %v1441 = vpack.c.b16 %v1330, %v1327
    %v1442 = vpack.c.b16 %v1331, %v1328
    %v1443 = vpack.c.b16 %v1335, %v1332
    %v1444 = vpack.c.b16 %v1336, %v1333
    %v1445 = vpack.c.b16 %v1337, %v1334
    %v1446 = vpack.c.b16 %v1341, %v1338
    %v1447 = vpack.c.b16 %v1342, %v1339
    %v1448 = vpack.c.b16 %v1343, %v1340
    %v1449 = vpack.c.b16 %v1347, %v1344
    %v1450 = vpack.c.b16 %v1348, %v1345
    %v1451 = vpack.c.b16 %v1349, %v1346
    %v1452 = vpack.c.b16 %v1353, %v1350
    %v1453 = vpack.c.b16 %v1354, %v1351
    %v1454 = vpack.c.b16 %v1355, %v1352
    %v1455 = vpack.c.b16 %v1359, %v1356
    %v1456 = vpack.c.b16 %v1360, %v1357
    %v1457 = vpack.c.b16 %v1361, %v1358
    %v1458 = vpack.c.b16 %v1365, %v1362
    %v1459 = vpack.c.b16 %v1366, %v1363
    %v1460 = vpack.c.b16 %v1367, %v1364
    %v1461 = vpack.c.b16 %v1371, %v1368
    %v1462 = vpack.c.b16 %v1372, %v1369
    %v1463 = vpack.c.b16 %v1373, %v1370
    %v1464 = vpack.c.b16 %v1377, %v1374
    %v1465 = vpack.c.b16 %v1378, %v1375
    %v1466 = vpack.c.b16 %v1379, %v1376
    %v1467 = vpack.c.b16 %v1383, %v1380
    %v1468 = vpack.c.b16 %v1384, %v1381
    %v1469 = vpack.c.b16 %v1385, %v1382
    %v1470 = vpack.c.b16 %v1389, %v1386
    %v1471 = vpack.c.b16 %v1390, %v1387
    %v1472 = vpack.c.b16 %v1391, %v1388
    %v1473 = vpack.c.b16 %v1395, %v1392
    %v1474 = vpack.c.b16 %v1396, %v1393
    %v1475 = vpack.c.b16 %v1397, %v1394
    %v1476 = vpack.c.b16 %v1401, %v1398
    %v1477 = vpack.c.b16 %v1402, %v1399
    %v1478 = vpack.c.b16 %v1403, %v1400
    %v1479 = vpack.c.b16 %v1407, %v1404
    %v1480 = vpack.c.b16 %v1408, %v1405
    %v1481 = vpack.c.b16 %v1409, %v1406
    %1554 = vmatprep.subr.bf16.mxu0 %v1411
    %1555 = vmatpush1.bf16.msra.mxu0 %v1410
    %1556 = vmatprep.subr.bf16.mxu0 %v1414
    %1557 = vmatpush1.bf16.msra.mxu0 %v1413
    %1558 = vmatprep.subr.bf16.mxu0 %v1417
    %1559 = vmatpush1.bf16.msra.mxu0 %v1416
    %1560 = vmatprep.subr.bf16.mxu0 %v1420
    %1561 = vmatpush1.bf16.msra.mxu0 %v1419
    %1562 = vmatprep.subr.bf16.mxu0 %v1423
    %1563 = vmatpush1.bf16.msra.mxu0 %v1422
    %1564 = vmatprep.subr.bf16.mxu0 %v1426
    %1565 = vmatpush1.bf16.msra.mxu0 %v1425
    %1566 = vmatprep.subr.bf16.mxu0 %v1429
    %1567 = vmatpush1.bf16.msra.mxu0 %v1428
    %1568 = vmatprep.subr.bf16.mxu0 %v1432
    %1569 = vmatpush1.bf16.msra.mxu0 %v1431
    %1570 = vmatprep.subr.bf16.mxu0 %v1435
    %1571 = vmatpush1.bf16.msra.mxu0 %v1434
    %1572 = vmatprep.subr.bf16.mxu0 %v1438
    %1573 = vmatpush1.bf16.msra.mxu0 %v1437
    %1574 = vmatprep.subr.bf16.mxu0 %v1441
    %1575 = vmatpush1.bf16.msra.mxu0 %v1440
    %1576 = vmatprep.subr.bf16.mxu0 %v1444
    %1577 = vmatpush1.bf16.msra.mxu0 %v1443
    %1578 = vmatprep.subr.bf16.mxu0 %v1447
    %1579 = vmatpush1.bf16.msra.mxu0 %v1446
    %1580 = vmatprep.subr.bf16.mxu0 %v1450
    %1581 = vmatpush1.bf16.msra.mxu0 %v1449
    %1582 = vmatprep.subr.bf16.mxu0 %v1453
    %1583 = vmatpush1.bf16.msra.mxu0 %v1452
    %1584 = vmatprep.subr.bf16.mxu0 %v1456
    %1585 = vmatpush1.bf16.msra.mxu0 %v1455
    %1586 = vmatprep.mubr.bf16.mxu0 %v1154
    %1587 = vmatmul.mubr.bf16.gmra.mrb[0].mxu0 %v1142
    %v1588 = vpop.f32.mrb[0].mxu0
    %v1589 = vadd.f32 0.0, %v1588
    %v1590 = vpop.f32.mrb[0].mxu0
    %v1591 = vadd.f32 0.0, %v1590
    %v1592 = vpop.f32.mrb[0].mxu0
    %v1593 = vadd.f32 0.0, %v1592
    %v1594 = vpop.f32.mrb[0].mxu0
    %v1595 = vadd.f32 0.0, %v1594
    %1596 = vdwg.mxu0
    %1597 = vmatprep.subr.bf16.mxu0 %v1459
    %1598 = vmatpush1.bf16.msra.mxu0 %v1458
    %1599 = vmatprep.subr.bf16.mxu0 %v1462
    %1600 = vmatpush1.bf16.msra.mxu0 %v1461
    %1601 = vmatprep.subr.bf16.mxu0 %v1465
    %1602 = vmatpush1.bf16.msra.mxu0 %v1464
    %1603 = vmatprep.subr.bf16.mxu0 %v1468
    %1604 = vmatpush1.bf16.msra.mxu0 %v1467
    %1605 = vmatprep.subr.bf16.mxu0 %v1471
    %1606 = vmatpush1.bf16.msra.mxu0 %v1470
    %1607 = vmatprep.subr.bf16.mxu0 %v1474
    %1608 = vmatpush1.bf16.msra.mxu0 %v1473
    %1609 = vmatprep.subr.bf16.mxu0 %v1477
    %1610 = vmatpush1.bf16.msra.mxu0 %v1476
    %1611 = vmatprep.subr.bf16.mxu0 %v1480
    %1612 = vmatpush1.bf16.msra.mxu0 %v1479
    %1613 = vmatprep.subr.bf16.mxu0 0
    %1614 = vmatpush1.bf16.msra.mxu0 0
    %1615 = vmatprep.subr.bf16.mxu0 0
    %1616 = vmatpush1.bf16.msra.mxu0 0
    %1617 = vmatprep.subr.bf16.mxu0 0
    %1618 = vmatpush1.bf16.msra.mxu0 0
    %1619 = vmatprep.subr.bf16.mxu0 0
    %1620 = vmatpush1.bf16.msra.mxu0 0
    %1621 = vmatprep.subr.bf16.mxu0 0
    %1622 = vmatpush1.bf16.msra.mxu0 0
    %1623 = vmatprep.subr.bf16.mxu0 0
    %1624 = vmatpush1.bf16.msra.mxu0 0
    %1625 = vmatprep.subr.bf16.mxu0 0
    %1626 = vmatpush1.bf16.msra.mxu0 0
    %1627 = vmatprep.subr.bf16.mxu0 0
    %1628 = vmatpush1.bf16.msra.mxu0 0
    %1629 = vmatprep.mubr.bf16.mxu0 0
    %1630 = vmatmul.mubr.bf16.gmra.mrb[0].mxu0 %v1166
    %v1631 = vpop.f32.mrb[0].mxu0
    %v1632 = vadd.f32 %v1589, %v1631
    %v1633 = vpop.f32.mrb[0].mxu0
    %v1634 = vadd.f32 %v1591, %v1633
    %v1635 = vpop.f32.mrb[0].mxu0
    %v1636 = vadd.f32 %v1593, %v1635
    %v1637 = vpop.f32.mrb[0].mxu0
    %v1638 = vadd.f32 %v1595, %v1637
    %1639 = vdwg.mxu0
    %1640 = vmatprep.subr.bf16.mxu0 0
    %1641 = vmatpush1.bf16.msra.mxu0 %v1412
    %1642 = vmatprep.subr.bf16.mxu0 0
    %1643 = vmatpush1.bf16.msra.mxu0 %v1415
    %1644 = vmatprep.subr.bf16.mxu0 0
    %1645 = vmatpush1.bf16.msra.mxu0 %v1418
    %1646 = vmatprep.subr.bf16.mxu0 0
    %1647 = vmatpush1.bf16.msra.mxu0 %v1421
    %1648 = vmatprep.subr.bf16.mxu0 0
    %1649 = vmatpush1.bf16.msra.mxu0 %v1424
    %1650 = vmatprep.subr.bf16.mxu0 0
    %1651 = vmatpush1.bf16.msra.mxu0 %v1427
    %1652 = vmatprep.subr.bf16.mxu0 0
    %1653 = vmatpush1.bf16.msra.mxu0 %v1430
    %1654 = vmatprep.subr.bf16.mxu0 0
    %1655 = vmatpush1.bf16.msra.mxu0 %v1433
    %1656 = vmatprep.subr.bf16.mxu0 0
    %1657 = vmatpush1.bf16.msra.mxu0 %v1436
    %1658 = vmatprep.subr.bf16.mxu0 0
    %1659 = vmatpush1.bf16.msra.mxu0 %v1439
    %1660 = vmatprep.subr.bf16.mxu0 0
    %1661 = vmatpush1.bf16.msra.mxu0 %v1442
    %1662 = vmatprep.subr.bf16.mxu0 0
    %1663 = vmatpush1.bf16.msra.mxu0 %v1445
    %1664 = vmatprep.subr.bf16.mxu0 0
    %1665 = vmatpush1.bf16.msra.mxu0 %v1448
    %1666 = vmatprep.subr.bf16.mxu0 0
    %1667 = vmatpush1.bf16.msra.mxu0 %v1451
    %1668 = vmatprep.subr.bf16.mxu0 0
    %1669 = vmatpush1.bf16.msra.mxu0 %v1454
    %1670 = vmatprep.subr.bf16.mxu0 0
    %1671 = vmatpush1.bf16.msra.mxu0 %v1457
    %1672 = vmatprep.mubr.bf16.mxu0 %v1154
    %1673 = vmatmul.mubr.bf16.gmra.mrb[0].mxu0 %v1142
    %v1674 = vpop.f32.mrb[0].mxu0
    %v1675 = vadd.f32 0.0, %v1674
    %v1676 = vpop.f32.mrb[0].mxu0
    %v1677 = vpop.f32.mrb[0].mxu0
    %v1678 = vadd.f32 0.0, %v1677
    %v1679 = vpop.f32.mrb[0].mxu0
    %1680 = vdwg.mxu0
    %1681 = vmatprep.subr.bf16.mxu0 0
    %1682 = vmatpush1.bf16.msra.mxu0 %v1460
    %1683 = vmatprep.subr.bf16.mxu0 0
    %1684 = vmatpush1.bf16.msra.mxu0 %v1463
    %1685 = vmatprep.subr.bf16.mxu0 0
    %1686 = vmatpush1.bf16.msra.mxu0 %v1466
    %1687 = vmatprep.subr.bf16.mxu0 0
    %1688 = vmatpush1.bf16.msra.mxu0 %v1469
    %1689 = vmatprep.subr.bf16.mxu0 0
    %1690 = vmatpush1.bf16.msra.mxu0 %v1472
    %1691 = vmatprep.subr.bf16.mxu0 0
    %1692 = vmatpush1.bf16.msra.mxu0 %v1475
    %1693 = vmatprep.subr.bf16.mxu0 0
    %1694 = vmatpush1.bf16.msra.mxu0 %v1478
    %1695 = vmatprep.subr.bf16.mxu0 0
    %1696 = vmatpush1.bf16.msra.mxu0 %v1481
    %1697 = vmatprep.subr.bf16.mxu0 0
    %1698 = vmatpush1.bf16.msra.mxu0 0
    %1699 = vmatprep.subr.bf16.mxu0 0
    %1700 = vmatpush1.bf16.msra.mxu0 0
    %1701 = vmatprep.subr.bf16.mxu0 0
    %1702 = vmatpush1.bf16.msra.mxu0 0
    %1703 = vmatprep.subr.bf16.mxu0 0
    %1704 = vmatpush1.bf16.msra.mxu0 0
    %1705 = vmatprep.subr.bf16.mxu0 0
    %1706 = vmatpush1.bf16.msra.mxu0 0
    %1707 = vmatprep.subr.bf16.mxu0 0
    %1708 = vmatpush1.bf16.msra.mxu0 0
    %1709 = vmatprep.subr.bf16.mxu0 0
    %1710 = vmatpush1.bf16.msra.mxu0 0
    %1711 = vmatprep.subr.bf16.mxu0 0
    %1712 = vmatpush1.bf16.msra.mxu0 0
    %1713 = vmatprep.mubr.bf16.mxu0 0
    %1714 = vmatmul.mubr.bf16.gmra.mrb[0].mxu0 %v1166
    %v1715 = vpop.f32.mrb[0].mxu0
    %v1716 = vadd.f32 %v1675, %v1715
    %v1717 = vpop.f32.mrb[0].mxu0
    %v1718 = vpop.f32.mrb[0].mxu0
    %v1719 = vadd.f32 %v1678, %v1718
    %v1720 = vpop.f32.mrb[0].mxu0
    %1721 = vdwg.mxu0
    %v1821 = vunpack.c.l.b16 %v914
    %v1822 = vunpack.c.h.b16 %v914
    %v1823 = vunpack.c.l.b16 %v915
    %v1824 = vunpack.c.l.b16 %v916
    %v1825 = vunpack.c.h.b16 %v916
    %v1826 = vunpack.c.l.b16 %v917
    %v1827 = vunpack.c.l.b16 %v918
    %v1828 = vunpack.c.h.b16 %v918
    %v1829 = vunpack.c.l.b16 %v919
    %v1830 = vunpack.c.l.b16 %v920
    %v1831 = vunpack.c.h.b16 %v920
    %v1832 = vunpack.c.l.b16 %v921
    %v1833 = vunpack.c.l.b16 %v922
    %v1834 = vunpack.c.h.b16 %v922
    %v1835 = vunpack.c.l.b16 %v923
    %v1836 = vunpack.c.l.b16 %v924
    %v1837 = vunpack.c.h.b16 %v924
    %v1838 = vunpack.c.l.b16 %v925
    %v1839 = vunpack.c.l.b16 %v926
    %v1840 = vunpack.c.h.b16 %v926
    %v1841 = vunpack.c.l.b16 %v927
    %v1842 = vunpack.c.l.b16 %v928
    %v1843 = vunpack.c.h.b16 %v928
    %v1844 = vunpack.c.l.b16 %v929
    %v1845 = vunpack.c.l.b16 %v930
    %v1846 = vunpack.c.h.b16 %v930
    %v1847 = vunpack.c.l.b16 %v931
    %v1848 = vunpack.c.l.b16 %v932
    %v1849 = vunpack.c.h.b16 %v932
    %v1850 = vunpack.c.l.b16 %v933
    %v1851 = vunpack.c.l.b16 %v934
    %v1852 = vunpack.c.h.b16 %v934
    %v1853 = vunpack.c.l.b16 %v935
    %v1854 = vunpack.c.l.b16 %v936
    %v1855 = vunpack.c.h.b16 %v936
    %v1856 = vunpack.c.l.b16 %v937
    %v1857 = vunpack.c.l.b16 %v938
    %v1858 = vunpack.c.h.b16 %v938
    %v1859 = vunpack.c.l.b16 %v939
    %v1860 = vunpack.c.l.b16 %v940
    %v1861 = vunpack.c.h.b16 %v940
    %v1862 = vunpack.c.l.b16 %v941
    %v1863 = vunpack.c.l.b16 %v942
    %v1864 = vunpack.c.h.b16 %v942
    %v1865 = vunpack.c.l.b16 %v943
    %v1866 = vunpack.c.l.b16 %v944
    %v1867 = vunpack.c.h.b16 %v944
    %v1868 = vunpack.c.l.b16 %v945
    %v1869 = vunpack.c.l.b16 %v946
    %v1870 = vunpack.c.h.b16 %v946
    %v1871 = vunpack.c.l.b16 %v947
    %v1872 = vunpack.c.l.b16 %v948
    %v1873 = vunpack.c.h.b16 %v948
    %v1874 = vunpack.c.l.b16 %v949
    %v1875 = vunpack.c.l.b16 %v950
    %v1876 = vunpack.c.h.b16 %v950
    %v1877 = vunpack.c.l.b16 %v951
    %v1878 = vunpack.c.l.b16 %v952
    %v1879 = vunpack.c.h.b16 %v952
    %v1880 = vunpack.c.l.b16 %v953
    %v1881 = vunpack.c.l.b16 %v954
    %v1882 = vunpack.c.h.b16 %v954
    %v1883 = vunpack.c.l.b16 %v955
    %v1884 = vunpack.c.l.b16 %v956
    %v1885 = vunpack.c.h.b16 %v956
    %v1886 = vunpack.c.l.b16 %v957
    %v1887 = vunpack.c.l.b16 %v958
    %v1888 = vunpack.c.h.b16 %v958
    %v1889 = vunpack.c.l.b16 %v959
    %v1890 = vunpack.c.l.b16 %v960
    %v1891 = vunpack.c.h.b16 %v960
    %v1892 = vunpack.c.l.b16 %v961
    %v1893 = vunpack.c.l.b16 %v962
    %v1894 = vunpack.c.h.b16 %v962
    %v1895 = vunpack.c.l.b16 %v963
    %v1896 = vunpack.c.l.b16 %v964
    %v1897 = vunpack.c.h.b16 %v964
    %v1898 = vunpack.c.l.b16 %v965
    %v1899 = vunpack.c.l.b16 %v966
    %v1900 = vunpack.c.h.b16 %v966
    %v1901 = vunpack.c.l.b16 %v967
    %v1902 = vunpack.c.l.b16 %v968
    %v1903 = vunpack.c.h.b16 %v968
    %v1904 = vunpack.c.l.b16 %v969
    %v1905 = vunpack.c.l.b16 %v970
    %v1906 = vunpack.c.h.b16 %v970
    %v1907 = vunpack.c.l.b16 %v971
    %v1908 = vunpack.c.l.b16 %v972
    %v1909 = vunpack.c.h.b16 %v972
    %v1910 = vunpack.c.l.b16 %v973
    %v1911 = vunpack.c.l.b16 %v974
    %v1912 = vunpack.c.h.b16 %v974
    %v1913 = vunpack.c.l.b16 %v975
    %v1914 = vunpack.c.l.b16 %v976
    %v1915 = vunpack.c.h.b16 %v976
    %v1916 = vunpack.c.l.b16 %v977
    %v1917 = vunpack.c.l.b16 %v978
    %v1918 = vunpack.c.h.b16 %v978
    %v1919 = vunpack.c.l.b16 %v979
    %v1920 = vunpack.c.l.b16 %v980
    %v1921 = vunpack.c.h.b16 %v980
    %v1922 = vunpack.c.l.b16 %v981
    %v1923 = vunpack.c.l.b16 %v982
    %v1924 = vunpack.c.h.b16 %v982
    %v1925 = vunpack.c.l.b16 %v983
    %v1926 = vunpack.c.l.b16 %v984
    %v1927 = vunpack.c.h.b16 %v984
    %v1928 = vunpack.c.l.b16 %v985
    %v1929 = vunpack.c.l.b16 %v986
    %v1930 = vunpack.c.h.b16 %v986
    %v1931 = vunpack.c.l.b16 %v987
    %v1932 = vunpack.c.l.b16 %v988
    %v1933 = vunpack.c.h.b16 %v988
    %v1934 = vunpack.c.l.b16 %v989
    %v1935 = vunpack.c.l.b16 %v990
    %v1936 = vunpack.c.h.b16 %v990
    %v1937 = vunpack.c.l.b16 %v991
    %v1938 = vunpack.c.l.b16 %v992
    %v1939 = vunpack.c.h.b16 %v992
    %v1940 = vunpack.c.l.b16 %v993
    %v1941 = vunpack.c.l.b16 %v994
    %v1942 = vunpack.c.h.b16 %v994
    %v1943 = vunpack.c.l.b16 %v995
    %v1944 = vunpack.c.l.b16 %v996
    %v1945 = vunpack.c.h.b16 %v996
    %v1946 = vunpack.c.l.b16 %v997
    %v1947 = vunpack.c.l.b16 %v998
    %v1948 = vunpack.c.h.b16 %v998
    %v1949 = vunpack.c.l.b16 %v999
    %v1950 = vunpack.c.l.b16 %v1000
    %v1951 = vunpack.c.h.b16 %v1000
    %v1952 = vunpack.c.l.b16 %v1001
    %v1953 = vunpack.c.l.b16 %v1002
    %v1954 = vunpack.c.h.b16 %v1002
    %v1955 = vunpack.c.l.b16 %v1003
    %v1956 = vunpack.c.l.b16 %v1004
    %v1957 = vunpack.c.h.b16 %v1004
    %v1958 = vunpack.c.l.b16 %v1005
    %v1959 = vunpack.c.l.b16 %v1006
    %v1960 = vunpack.c.h.b16 %v1006
    %v1961 = vunpack.c.l.b16 %v1007
    %v1962 = vunpack.c.l.b16 %v1008
    %v1963 = vunpack.c.h.b16 %v1008
    %v1964 = vunpack.c.l.b16 %v1009
    %v1965 = vpack.c.b16 %v1824, %v1821
    %v1966 = vpack.c.b16 %v1825, %v1822
    %v1967 = vpack.c.b16 %v1826, %v1823
    %v1968 = vpack.c.b16 %v1830, %v1827
    %v1969 = vpack.c.b16 %v1831, %v1828
    %v1970 = vpack.c.b16 %v1832, %v1829
    %v1971 = vpack.c.b16 %v1836, %v1833
    %v1972 = vpack.c.b16 %v1837, %v1834
    %v1973 = vpack.c.b16 %v1838, %v1835
    %v1974 = vpack.c.b16 %v1842, %v1839
    %v1975 = vpack.c.b16 %v1843, %v1840
    %v1976 = vpack.c.b16 %v1844, %v1841
    %v1977 = vpack.c.b16 %v1848, %v1845
    %v1978 = vpack.c.b16 %v1849, %v1846
    %v1979 = vpack.c.b16 %v1850, %v1847
    %v1980 = vpack.c.b16 %v1854, %v1851
    %v1981 = vpack.c.b16 %v1855, %v1852
    %v1982 = vpack.c.b16 %v1856, %v1853
    %v1983 = vpack.c.b16 %v1860, %v1857
    %v1984 = vpack.c.b16 %v1861, %v1858
    %v1985 = vpack.c.b16 %v1862, %v1859
    %v1986 = vpack.c.b16 %v1866, %v1863
    %v1987 = vpack.c.b16 %v1867, %v1864
    %v1988 = vpack.c.b16 %v1868, %v1865
    %v1989 = vpack.c.b16 %v1872, %v1869
    %v1990 = vpack.c.b16 %v1873, %v1870
    %v1991 = vpack.c.b16 %v1874, %v1871
    %v1992 = vpack.c.b16 %v1878, %v1875
    %v1993 = vpack.c.b16 %v1879, %v1876
    %v1994 = vpack.c.b16 %v1880, %v1877
    %v1995 = vpack.c.b16 %v1884, %v1881
    %v1996 = vpack.c.b16 %v1885, %v1882
    %v1997 = vpack.c.b16 %v1886, %v1883
    %v1998 = vpack.c.b16 %v1890, %v1887
    %v1999 = vpack.c.b16 %v1891, %v1888
    %v2000 = vpack.c.b16 %v1892, %v1889
    %v2001 = vpack.c.b16 %v1896, %v1893
    %v2002 = vpack.c.b16 %v1897, %v1894
    %v2003 = vpack.c.b16 %v1898, %v1895
    %v2004 = vpack.c.b16 %v1902, %v1899
    %v2005 = vpack.c.b16 %v1903, %v1900
    %v2006 = vpack.c.b16 %v1904, %v1901
    %v2007 = vpack.c.b16 %v1908, %v1905
    %v2008 = vpack.c.b16 %v1909, %v1906
    %v2009 = vpack.c.b16 %v1910, %v1907
    %v2010 = vpack.c.b16 %v1914, %v1911
    %v2011 = vpack.c.b16 %v1915, %v1912
    %v2012 = vpack.c.b16 %v1916, %v1913
    %v2013 = vpack.c.b16 %v1920, %v1917
    %v2014 = vpack.c.b16 %v1921, %v1918
    %v2015 = vpack.c.b16 %v1922, %v1919
    %v2016 = vpack.c.b16 %v1926, %v1923
    %v2017 = vpack.c.b16 %v1927, %v1924
    %v2018 = vpack.c.b16 %v1928, %v1925
    %v2019 = vpack.c.b16 %v1932, %v1929
    %v2020 = vpack.c.b16 %v1933, %v1930
    %v2021 = vpack.c.b16 %v1934, %v1931
    %v2022 = vpack.c.b16 %v1938, %v1935
    %v2023 = vpack.c.b16 %v1939, %v1936
    %v2024 = vpack.c.b16 %v1940, %v1937
    %v2025 = vpack.c.b16 %v1944, %v1941
    %v2026 = vpack.c.b16 %v1945, %v1942
    %v2027 = vpack.c.b16 %v1946, %v1943
    %v2028 = vpack.c.b16 %v1950, %v1947
    %v2029 = vpack.c.b16 %v1951, %v1948
    %v2030 = vpack.c.b16 %v1952, %v1949
    %v2031 = vpack.c.b16 %v1956, %v1953
    %v2032 = vpack.c.b16 %v1957, %v1954
    %v2033 = vpack.c.b16 %v1958, %v1955
    %v2034 = vpack.c.b16 %v1962, %v1959
    %v2035 = vpack.c.b16 %v1963, %v1960
    %v2036 = vpack.c.b16 %v1964, %v1961
    %2109 = vmatprep.subr.bf16.mxu0 %v1966
    %2110 = vmatpush1.bf16.msra.mxu0 %v1965
    %2111 = vmatprep.subr.bf16.mxu0 %v1969
    %2112 = vmatpush1.bf16.msra.mxu0 %v1968
    %2113 = vmatprep.subr.bf16.mxu0 %v1972
    %2114 = vmatpush1.bf16.msra.mxu0 %v1971
    %2115 = vmatprep.subr.bf16.mxu0 %v1975
    %2116 = vmatpush1.bf16.msra.mxu0 %v1974
    %2117 = vmatprep.subr.bf16.mxu0 %v1978
    %2118 = vmatpush1.bf16.msra.mxu0 %v1977
    %2119 = vmatprep.subr.bf16.mxu0 %v1981
    %2120 = vmatpush1.bf16.msra.mxu0 %v1980
    %2121 = vmatprep.subr.bf16.mxu0 %v1984
    %2122 = vmatpush1.bf16.msra.mxu0 %v1983
    %2123 = vmatprep.subr.bf16.mxu0 %v1987
    %2124 = vmatpush1.bf16.msra.mxu0 %v1986
    %2125 = vmatprep.subr.bf16.mxu0 %v1990
    %2126 = vmatpush1.bf16.msra.mxu0 %v1989
    %2127 = vmatprep.subr.bf16.mxu0 %v1993
    %2128 = vmatpush1.bf16.msra.mxu0 %v1992
    %2129 = vmatprep.subr.bf16.mxu0 %v1996
    %2130 = vmatpush1.bf16.msra.mxu0 %v1995
    %2131 = vmatprep.subr.bf16.mxu0 %v1999
    %2132 = vmatpush1.bf16.msra.mxu0 %v1998
    %2133 = vmatprep.subr.bf16.mxu0 %v2002
    %2134 = vmatpush1.bf16.msra.mxu0 %v2001
    %2135 = vmatprep.subr.bf16.mxu0 %v2005
    %2136 = vmatpush1.bf16.msra.mxu0 %v2004
    %2137 = vmatprep.subr.bf16.mxu0 %v2008
    %2138 = vmatpush1.bf16.msra.mxu0 %v2007
    %2139 = vmatprep.subr.bf16.mxu0 %v2011
    %2140 = vmatpush1.bf16.msra.mxu0 %v2010
    %2141 = vmatprep.mubr.bf16.mxu0 %v1125
    %2142 = vmatmul.mubr.bf16.gmra.mrb[0].mxu0 %v1124
    %v2143 = vpop.f32.mrb[0].mxu0
    %v2144 = vadd.f32 %v1632, %v2143
    %v2145 = vpop.f32.mrb[0].mxu0
    %v2146 = vadd.f32 %v1634, %v2145
    %v2147 = vpop.f32.mrb[0].mxu0
    %v2148 = vadd.f32 %v1636, %v2147
    %v2149 = vpop.f32.mrb[0].mxu0
    %v2150 = vadd.f32 %v1638, %v2149
    %2151 = vdwg.mxu0
    %2152 = vmatprep.subr.bf16.mxu0 %v2014
    %2153 = vmatpush1.bf16.msra.mxu0 %v2013
    %2154 = vmatprep.subr.bf16.mxu0 %v2017
    %2155 = vmatpush1.bf16.msra.mxu0 %v2016
    %2156 = vmatprep.subr.bf16.mxu0 %v2020
    %2157 = vmatpush1.bf16.msra.mxu0 %v2019
    %2158 = vmatprep.subr.bf16.mxu0 %v2023
    %2159 = vmatpush1.bf16.msra.mxu0 %v2022
    %2160 = vmatprep.subr.bf16.mxu0 %v2026
    %2161 = vmatpush1.bf16.msra.mxu0 %v2025
    %2162 = vmatprep.subr.bf16.mxu0 %v2029
    %2163 = vmatpush1.bf16.msra.mxu0 %v2028
    %2164 = vmatprep.subr.bf16.mxu0 %v2032
    %2165 = vmatpush1.bf16.msra.mxu0 %v2031
    %2166 = vmatprep.subr.bf16.mxu0 %v2035
    %2167 = vmatpush1.bf16.msra.mxu0 %v2034
    %2168 = vmatprep.subr.bf16.mxu0 0
    %2169 = vmatpush1.bf16.msra.mxu0 0
    %2170 = vmatprep.subr.bf16.mxu0 0
    %2171 = vmatpush1.bf16.msra.mxu0 0
    %2172 = vmatprep.subr.bf16.mxu0 0
    %2173 = vmatpush1.bf16.msra.mxu0 0
    %2174 = vmatprep.subr.bf16.mxu0 0
    %2175 = vmatpush1.bf16.msra.mxu0 0
    %2176 = vmatprep.subr.bf16.mxu0 0
    %2177 = vmatpush1.bf16.msra.mxu0 0
    %2178 = vmatprep.subr.bf16.mxu0 0
    %2179 = vmatpush1.bf16.msra.mxu0 0
    %2180 = vmatprep.subr.bf16.mxu0 0
    %2181 = vmatpush1.bf16.msra.mxu0 0
    %2182 = vmatprep.subr.bf16.mxu0 0
    %2183 = vmatpush1.bf16.msra.mxu0 0
    %2184 = vmatprep.mubr.bf16.mxu0 0
    %2185 = vmatmul.mubr.bf16.gmra.mrb[0].mxu0 %v1126
    %v2186 = vpop.f32.mrb[0].mxu0
    %v2187 = vadd.f32 %v2144, %v2186
    %v2188 = vpop.f32.mrb[0].mxu0
    %v2189 = vadd.f32 %v2146, %v2188
    %v2190 = vpop.f32.mrb[0].mxu0
    %v2191 = vadd.f32 %v2148, %v2190
    %v2192 = vpop.f32.mrb[0].mxu0
    %v2193 = vadd.f32 %v2150, %v2192
    %2194 = vdwg.mxu0
    %2195 = vmatprep.subr.bf16.mxu0 0
    %2196 = vmatpush1.bf16.msra.mxu0 %v1967
    %2197 = vmatprep.subr.bf16.mxu0 0
    %2198 = vmatpush1.bf16.msra.mxu0 %v1970
    %2199 = vmatprep.subr.bf16.mxu0 0
    %2200 = vmatpush1.bf16.msra.mxu0 %v1973
    %2201 = vmatprep.subr.bf16.mxu0 0
    %2202 = vmatpush1.bf16.msra.mxu0 %v1976
    %2203 = vmatprep.subr.bf16.mxu0 0
    %2204 = vmatpush1.bf16.msra.mxu0 %v1979
    %2205 = vmatprep.subr.bf16.mxu0 0
    %2206 = vmatpush1.bf16.msra.mxu0 %v1982
    %2207 = vmatprep.subr.bf16.mxu0 0
    %2208 = vmatpush1.bf16.msra.mxu0 %v1985
    %2209 = vmatprep.subr.bf16.mxu0 0
    %2210 = vmatpush1.bf16.msra.mxu0 %v1988
    %2211 = vmatprep.subr.bf16.mxu0 0
    %2212 = vmatpush1.bf16.msra.mxu0 %v1991
    %2213 = vmatprep.subr.bf16.mxu0 0
    %2214 = vmatpush1.bf16.msra.mxu0 %v1994
    %2215 = vmatprep.subr.bf16.mxu0 0
    %2216 = vmatpush1.bf16.msra.mxu0 %v1997
    %2217 = vmatprep.subr.bf16.mxu0 0
    %2218 = vmatpush1.bf16.msra.mxu0 %v2000
    %2219 = vmatprep.subr.bf16.mxu0 0
    %2220 = vmatpush1.bf16.msra.mxu0 %v2003
    %2221 = vmatprep.subr.bf16.mxu0 0
    %2222 = vmatpush1.bf16.msra.mxu0 %v2006
    %2223 = vmatprep.subr.bf16.mxu0 0
    %2224 = vmatpush1.bf16.msra.mxu0 %v2009
    %2225 = vmatprep.subr.bf16.mxu0 0
    %2226 = vmatpush1.bf16.msra.mxu0 %v2012
    %2227 = vmatprep.mubr.bf16.mxu0 %v1125
    %2228 = vmatmul.mubr.bf16.gmra.mrb[0].mxu0 %v1124
    %v2229 = vpop.f32.mrb[0].mxu0
    %v2230 = vadd.f32 %v1716, %v2229
    %v2231 = vpop.f32.mrb[0].mxu0
    %v2232 = vpop.f32.mrb[0].mxu0
    %v2233 = vadd.f32 %v1719, %v2232
    %v2234 = vpop.f32.mrb[0].mxu0
    %2235 = vdwg.mxu0
    %2236 = vmatprep.subr.bf16.mxu0 0
    %2237 = vmatpush1.bf16.msra.mxu0 %v2015
    %2238 = vmatprep.subr.bf16.mxu0 0
    %2239 = vmatpush1.bf16.msra.mxu0 %v2018
    %2240 = vmatprep.subr.bf16.mxu0 0
    %2241 = vmatpush1.bf16.msra.mxu0 %v2021
    %2242 = vmatprep.subr.bf16.mxu0 0
    %2243 = vmatpush1.bf16.msra.mxu0 %v2024
    %2244 = vmatprep.subr.bf16.mxu0 0
    %2245 = vmatpush1.bf16.msra.mxu0 %v2027
    %2246 = vmatprep.subr.bf16.mxu0 0
    %2247 = vmatpush1.bf16.msra.mxu0 %v2030
    %2248 = vmatprep.subr.bf16.mxu0 0
    %2249 = vmatpush1.bf16.msra.mxu0 %v2033
    %2250 = vmatprep.subr.bf16.mxu0 0
    %2251 = vmatpush1.bf16.msra.mxu0 %v2036
    %2252 = vmatprep.subr.bf16.mxu0 0
    %2253 = vmatpush1.bf16.msra.mxu0 0
    %2254 = vmatprep.subr.bf16.mxu0 0
    %2255 = vmatpush1.bf16.msra.mxu0 0
    %2256 = vmatprep.subr.bf16.mxu0 0
    %2257 = vmatpush1.bf16.msra.mxu0 0
    %2258 = vmatprep.subr.bf16.mxu0 0
    %2259 = vmatpush1.bf16.msra.mxu0 0
    %2260 = vmatprep.subr.bf16.mxu0 0
    %2261 = vmatpush1.bf16.msra.mxu0 0
    %2262 = vmatprep.subr.bf16.mxu0 0
    %2263 = vmatpush1.bf16.msra.mxu0 0
    %2264 = vmatprep.subr.bf16.mxu0 0
    %2265 = vmatpush1.bf16.msra.mxu0 0
    %2266 = vmatprep.subr.bf16.mxu0 0
    %2267 = vmatpush1.bf16.msra.mxu0 0
    %2268 = vmatprep.mubr.bf16.mxu0 0
    %2269 = vmatmul.mubr.bf16.gmra.mrb[0].mxu0 %v1126
    %v2270 = vpop.f32.mrb[0].mxu0
    %v2271 = vadd.f32 %v2230, %v2270
    %v2272 = vpop.f32.mrb[0].mxu0
    %v2273 = vpop.f32.mrb[0].mxu0
    %v2274 = vadd.f32 %v2233, %v2273
    %v2275 = vpop.f32.mrb[0].mxu0
    %2276 = vdwg.mxu0
    %v2277 = vld [vmem:[#allocation3] sm:$0xee]
    %v2278 = vld [vmem:[#allocation3 + $0x8] sm:$0xe]
    %s2279 = scalar_lea.vmem [#allocation6], 1152
    %v2280 = vld [vmem:[%s2279] sm:$0xff]
    %v2281 = vld [vmem:[%s2279 + $0x8] sm:$0xf]
    %v2282 = vld [vmem:[%s2279 + $0xc] sm:$0xff]
    %v2283 = vld [vmem:[%s2279 + $0x14] sm:$0xf]
    %v2284 = vld [vmem:[%s2279 + $0x18] sm:$0xff]
    %v2285 = vld [vmem:[%s2279 + $0x20] sm:$0xf]
    %v2286 = vld [vmem:[%s2279 + $0x24] sm:$0xff]
    %v2287 = vld [vmem:[%s2279 + $0x2c] sm:$0xf]
    %v2288 = vld [vmem:[%s2279 + $0x30] sm:$0xff]
    %v2289 = vld [vmem:[%s2279 + $0x38] sm:$0xf]
    %v2290 = vld [vmem:[%s2279 + $0x3c] sm:$0xff]
    %v2291 = vld [vmem:[%s2279 + $0x44] sm:$0xf]
    %v2292 = vld [vmem:[%s2279 + $0x48] sm:$0xff]
    %v2293 = vld [vmem:[%s2279 + $0x50] sm:$0xf]
    %v2294 = vld [vmem:[%s2279 + $0x54] sm:$0xff]
    %v2295 = vld [vmem:[%s2279 + $0x5c] sm:$0xf]
    %v2296 = vld [vmem:[%s2279 + $0x60] sm:$0xff]
    %v2297 = vld [vmem:[%s2279 + $0x68] sm:$0xf]
    %v2298 = vld [vmem:[%s2279 + $0x6c] sm:$0xff]
    %v2299 = vld [vmem:[%s2279 + $0x74] sm:$0xf]
    %v2300 = vld [vmem:[%s2279 + $0x78] sm:$0xff]
    %v2301 = vld [vmem:[%s2279 + $0x80] sm:$0xf]
    %v2302 = vld [vmem:[%s2279 + $0x84] sm:$0xff]
    %v2303 = vld [vmem:[%s2279 + $0x8c] sm:$0xf]
    %v2304 = vld [vmem:[%s2279 + $0x90] sm:$0xff]
    %v2305 = vld [vmem:[%s2279 + $0x98] sm:$0xf]
    %v2306 = vld [vmem:[%s2279 + $0x9c] sm:$0xff]
    %v2307 = vld [vmem:[%s2279 + $0xa4] sm:$0xf]
    %v2308 = vld [vmem:[%s2279 + $0xa8] sm:$0xff]
    %v2309 = vld [vmem:[%s2279 + $0xb0] sm:$0xf]
    %v2310 = vld [vmem:[%s2279 + $0xb4] sm:$0xff]
    %v2311 = vld [vmem:[%s2279 + $0xbc] sm:$0xf]
    %v2312 = vld [vmem:[%s2279 + $0xc0] sm:$0xff]
    %v2313 = vld [vmem:[%s2279 + $0xc8] sm:$0xf]
    %v2314 = vld [vmem:[%s2279 + $0xcc] sm:$0xff]
    %v2315 = vld [vmem:[%s2279 + $0xd4] sm:$0xf]
    %v2316 = vld [vmem:[%s2279 + $0xd8] sm:$0xff]
    %v2317 = vld [vmem:[%s2279 + $0xe0] sm:$0xf]
    %v2318 = vld [vmem:[%s2279 + $0xe4] sm:$0xff]
    %v2319 = vld [vmem:[%s2279 + $0xec] sm:$0xf]
    %v2320 = vld [vmem:[%s2279 + $0xf0] sm:$0xff]
    %v2321 = vld [vmem:[%s2279 + $0xf8] sm:$0xf]
    %v2322 = vld [vmem:[%s2279 + $0xfc] sm:$0xff]
    %v2323 = vld [vmem:[%s2279 + $0x104] sm:$0xf]
    %v2324 = vld [vmem:[%s2279 + $0x108] sm:$0xff]
    %v2325 = vld [vmem:[%s2279 + $0x110] sm:$0xf]
    %v2326 = vld [vmem:[%s2279 + $0x114] sm:$0xff]
    %v2327 = vld [vmem:[%s2279 + $0x11c] sm:$0xf]
    %v2328 = vld [vmem:[%s2279 + $0x120] sm:$0xff]
    %v2329 = vld [vmem:[%s2279 + $0x128] sm:$0xf]
    %v2330 = vld [vmem:[%s2279 + $0x12c] sm:$0xff]
    %v2331 = vld [vmem:[%s2279 + $0x134] sm:$0xf]
    %v2332 = vld [vmem:[%s2279 + $0x138] sm:$0xff]
    %v2333 = vld [vmem:[%s2279 + $0x140] sm:$0xf]
    %v2334 = vld [vmem:[%s2279 + $0x144] sm:$0xff]
    %v2335 = vld [vmem:[%s2279 + $0x14c] sm:$0xf]
    %v2336 = vld [vmem:[%s2279 + $0x150] sm:$0xff]
    %v2337 = vld [vmem:[%s2279 + $0x158] sm:$0xf]
    %v2338 = vld [vmem:[%s2279 + $0x15c] sm:$0xff]
    %v2339 = vld [vmem:[%s2279 + $0x164] sm:$0xf]
    %v2340 = vld [vmem:[%s2279 + $0x168] sm:$0xff]
    %v2341 = vld [vmem:[%s2279 + $0x170] sm:$0xf]
    %v2342 = vld [vmem:[%s2279 + $0x174] sm:$0xff]
    %v2343 = vld [vmem:[%s2279 + $0x17c] sm:$0xf]
    %v2344 = vld [vmem:[%s2279 + $0x180] sm:$0xff]
    %v2345 = vld [vmem:[%s2279 + $0x188] sm:$0xf]
    %v2346 = vld [vmem:[%s2279 + $0x18c] sm:$0xff]
    %v2347 = vld [vmem:[%s2279 + $0x194] sm:$0xf]
    %v2348 = vld [vmem:[%s2279 + $0x198] sm:$0xff]
    %v2349 = vld [vmem:[%s2279 + $0x1a0] sm:$0xf]
    %v2350 = vld [vmem:[%s2279 + $0x1a4] sm:$0xff]
    %v2351 = vld [vmem:[%s2279 + $0x1ac] sm:$0xf]
    %v2352 = vld [vmem:[%s2279 + $0x1b0] sm:$0xff]
    %v2353 = vld [vmem:[%s2279 + $0x1b8] sm:$0xf]
    %v2354 = vld [vmem:[%s2279 + $0x1bc] sm:$0xff]
    %v2355 = vld [vmem:[%s2279 + $0x1c4] sm:$0xf]
    %v2356 = vld [vmem:[%s2279 + $0x1c8] sm:$0xff]
    %v2357 = vld [vmem:[%s2279 + $0x1d0] sm:$0xf]
    %v2358 = vld [vmem:[%s2279 + $0x1d4] sm:$0xff]
    %v2359 = vld [vmem:[%s2279 + $0x1dc] sm:$0xf]
    %v2360 = vld [vmem:[%s2279 + $0x1e0] sm:$0xff]
    %v2361 = vld [vmem:[%s2279 + $0x1e8] sm:$0xf]
    %v2362 = vld [vmem:[%s2279 + $0x1ec] sm:$0xff]
    %v2363 = vld [vmem:[%s2279 + $0x1f4] sm:$0xf]
    %v2364 = vld [vmem:[%s2279 + $0x1f8] sm:$0xff]
    %v2365 = vld [vmem:[%s2279 + $0x200] sm:$0xf]
    %v2366 = vld [vmem:[%s2279 + $0x204] sm:$0xff]
    %v2367 = vld [vmem:[%s2279 + $0x20c] sm:$0xf]
    %v2368 = vld [vmem:[%s2279 + $0x210] sm:$0xff]
    %v2369 = vld [vmem:[%s2279 + $0x218] sm:$0xf]
    %v2370 = vld [vmem:[%s2279 + $0x21c] sm:$0xff]
    %v2371 = vld [vmem:[%s2279 + $0x224] sm:$0xf]
    %v2372 = vld [vmem:[%s2279 + $0x228] sm:$0xff]
    %v2373 = vld [vmem:[%s2279 + $0x230] sm:$0xf]
    %v2374 = vld [vmem:[%s2279 + $0x234] sm:$0xff]
    %v2375 = vld [vmem:[%s2279 + $0x23c] sm:$0xf]
    %v2378 = vunpack.c.l.b16 %v2277
    %v2379 = vunpack.c.h.b16 %v2277
    %v2380 = vunpack.c.l.b16 %v2278
    %v2381 = vpack.c.b16 %v1118, %v2378
    %v2382 = vpack.c.b16 %v1119, %v2379
    %v2383 = vpack.c.b16 %v1120, %v2380
    %vm2384 = vcmask 1046528
    %v2385 = vrot.slane %v2381, 1
    %v2386 = vrot.slane %v1127, 1
    %v2387 = vsel %vm2384, %v2385, %v2386
    %v2388 = vrot.slane %v2382, 1
    %v2389 = vrot.slane %v1128, 1
    %v2390 = vsel %vm2384, %v2388, %v2389
    %v2391 = vrot.slane %v2383, 1
    %v2392 = vrot.slane %v1129, 1
    %v2393 = vsel %vm2384, %v2391, %v2392
    %v2493 = vunpack.c.l.b16 %v2280
    %v2494 = vunpack.c.h.b16 %v2280
    %v2495 = vunpack.c.l.b16 %v2281
    %v2496 = vunpack.c.l.b16 %v2282
    %v2497 = vunpack.c.h.b16 %v2282
    %v2498 = vunpack.c.l.b16 %v2283
    %v2499 = vunpack.c.l.b16 %v2284
    %v2500 = vunpack.c.h.b16 %v2284
    %v2501 = vunpack.c.l.b16 %v2285
    %v2502 = vunpack.c.l.b16 %v2286
    %v2503 = vunpack.c.h.b16 %v2286
    %v2504 = vunpack.c.l.b16 %v2287
    %v2505 = vunpack.c.l.b16 %v2288
    %v2506 = vunpack.c.h.b16 %v2288
    %v2507 = vunpack.c.l.b16 %v2289
    %v2508 = vunpack.c.l.b16 %v2290
    %v2509 = vunpack.c.h.b16 %v2290
    %v2510 = vunpack.c.l.b16 %v2291
    %v2511 = vunpack.c.l.b16 %v2292
    %v2512 = vunpack.c.h.b16 %v2292
    %v2513 = vunpack.c.l.b16 %v2293
    %v2514 = vunpack.c.l.b16 %v2294
    %v2515 = vunpack.c.h.b16 %v2294
    %v2516 = vunpack.c.l.b16 %v2295
    %v2517 = vunpack.c.l.b16 %v2296
    %v2518 = vunpack.c.h.b16 %v2296
    %v2519 = vunpack.c.l.b16 %v2297
    %v2520 = vunpack.c.l.b16 %v2298
    %v2521 = vunpack.c.h.b16 %v2298
    %v2522 = vunpack.c.l.b16 %v2299
    %v2523 = vunpack.c.l.b16 %v2300
    %v2524 = vunpack.c.h.b16 %v2300
    %v2525 = vunpack.c.l.b16 %v2301
    %v2526 = vunpack.c.l.b16 %v2302
    %v2527 = vunpack.c.h.b16 %v2302
    %v2528 = vunpack.c.l.b16 %v2303
    %v2529 = vunpack.c.l.b16 %v2304
    %v2530 = vunpack.c.h.b16 %v2304
    %v2531 = vunpack.c.l.b16 %v2305
    %v2532 = vunpack.c.l.b16 %v2306
    %v2533 = vunpack.c.h.b16 %v2306
    %v2534 = vunpack.c.l.b16 %v2307
    %v2535 = vunpack.c.l.b16 %v2308
    %v2536 = vunpack.c.h.b16 %v2308
    %v2537 = vunpack.c.l.b16 %v2309
    %v2538 = vunpack.c.l.b16 %v2310
    %v2539 = vunpack.c.h.b16 %v2310
    %v2540 = vunpack.c.l.b16 %v2311
    %v2541 = vunpack.c.l.b16 %v2312
    %v2542 = vunpack.c.h.b16 %v2312
    %v2543 = vunpack.c.l.b16 %v2313
    %v2544 = vunpack.c.l.b16 %v2314
    %v2545 = vunpack.c.h.b16 %v2314
    %v2546 = vunpack.c.l.b16 %v2315
    %v2547 = vunpack.c.l.b16 %v2316
    %v2548 = vunpack.c.h.b16 %v2316
    %v2549 = vunpack.c.l.b16 %v2317
    %v2550 = vunpack.c.l.b16 %v2318
    %v2551 = vunpack.c.h.b16 %v2318
    %v2552 = vunpack.c.l.b16 %v2319
    %v2553 = vunpack.c.l.b16 %v2320
    %v2554 = vunpack.c.h.b16 %v2320
    %v2555 = vunpack.c.l.b16 %v2321
    %v2556 = vunpack.c.l.b16 %v2322
    %v2557 = vunpack.c.h.b16 %v2322
    %v2558 = vunpack.c.l.b16 %v2323
    %v2559 = vunpack.c.l.b16 %v2324
    %v2560 = vunpack.c.h.b16 %v2324
    %v2561 = vunpack.c.l.b16 %v2325
    %v2562 = vunpack.c.l.b16 %v2326
    %v2563 = vunpack.c.h.b16 %v2326
    %v2564 = vunpack.c.l.b16 %v2327
    %v2565 = vunpack.c.l.b16 %v2328
    %v2566 = vunpack.c.h.b16 %v2328
    %v2567 = vunpack.c.l.b16 %v2329
    %v2568 = vunpack.c.l.b16 %v2330
    %v2569 = vunpack.c.h.b16 %v2330
    %v2570 = vunpack.c.l.b16 %v2331
    %v2571 = vunpack.c.l.b16 %v2332
    %v2572 = vunpack.c.h.b16 %v2332
    %v2573 = vunpack.c.l.b16 %v2333
    %v2574 = vunpack.c.l.b16 %v2334
    %v2575 = vunpack.c.h.b16 %v2334
    %v2576 = vunpack.c.l.b16 %v2335
    %v2577 = vunpack.c.l.b16 %v2336
    %v2578 = vunpack.c.h.b16 %v2336
    %v2579 = vunpack.c.l.b16 %v2337
    %v2580 = vunpack.c.l.b16 %v2338
    %v2581 = vunpack.c.h.b16 %v2338
    %v2582 = vunpack.c.l.b16 %v2339
    %v2583 = vunpack.c.l.b16 %v2340
    %v2584 = vunpack.c.h.b16 %v2340
    %v2585 = vunpack.c.l.b16 %v2341
    %v2586 = vunpack.c.l.b16 %v2342
    %v2587 = vunpack.c.h.b16 %v2342
    %v2588 = vunpack.c.l.b16 %v2343
    %v2589 = vunpack.c.l.b16 %v2344
    %v2590 = vunpack.c.h.b16 %v2344
    %v2591 = vunpack.c.l.b16 %v2345
    %v2592 = vunpack.c.l.b16 %v2346
    %v2593 = vunpack.c.h.b16 %v2346
    %v2594 = vunpack.c.l.b16 %v2347
    %v2595 = vunpack.c.l.b16 %v2348
    %v2596 = vunpack.c.h.b16 %v2348
    %v2597 = vunpack.c.l.b16 %v2349
    %v2598 = vunpack.c.l.b16 %v2350
    %v2599 = vunpack.c.h.b16 %v2350
    %v2600 = vunpack.c.l.b16 %v2351
    %v2601 = vunpack.c.l.b16 %v2352
    %v2602 = vunpack.c.h.b16 %v2352
    %v2603 = vunpack.c.l.b16 %v2353
    %v2604 = vunpack.c.l.b16 %v2354
    %v2605 = vunpack.c.h.b16 %v2354
    %v2606 = vunpack.c.l.b16 %v2355
    %v2607 = vunpack.c.l.b16 %v2356
    %v2608 = vunpack.c.h.b16 %v2356
    %v2609 = vunpack.c.l.b16 %v2357
    %v2610 = vunpack.c.l.b16 %v2358
    %v2611 = vunpack.c.h.b16 %v2358
    %v2612 = vunpack.c.l.b16 %v2359
    %v2613 = vunpack.c.l.b16 %v2360
    %v2614 = vunpack.c.h.b16 %v2360
    %v2615 = vunpack.c.l.b16 %v2361
    %v2616 = vunpack.c.l.b16 %v2362
    %v2617 = vunpack.c.h.b16 %v2362
    %v2618 = vunpack.c.l.b16 %v2363
    %v2619 = vunpack.c.l.b16 %v2364
    %v2620 = vunpack.c.h.b16 %v2364
    %v2621 = vunpack.c.l.b16 %v2365
    %v2622 = vunpack.c.l.b16 %v2366
    %v2623 = vunpack.c.h.b16 %v2366
    %v2624 = vunpack.c.l.b16 %v2367
    %v2625 = vunpack.c.l.b16 %v2368
    %v2626 = vunpack.c.h.b16 %v2368
    %v2627 = vunpack.c.l.b16 %v2369
    %v2628 = vunpack.c.l.b16 %v2370
    %v2629 = vunpack.c.h.b16 %v2370
    %v2630 = vunpack.c.l.b16 %v2371
    %v2631 = vunpack.c.l.b16 %v2372
    %v2632 = vunpack.c.h.b16 %v2372
    %v2633 = vunpack.c.l.b16 %v2373
    %v2634 = vunpack.c.l.b16 %v2374
    %v2635 = vunpack.c.h.b16 %v2374
    %v2636 = vunpack.c.l.b16 %v2375
    %v2637 = vpack.c.b16 %v2496, %v2493
    %v2638 = vpack.c.b16 %v2497, %v2494
    %v2639 = vpack.c.b16 %v2498, %v2495
    %v2640 = vpack.c.b16 %v2502, %v2499
    %v2641 = vpack.c.b16 %v2503, %v2500
    %v2642 = vpack.c.b16 %v2504, %v2501
    %v2643 = vpack.c.b16 %v2508, %v2505
    %v2644 = vpack.c.b16 %v2509, %v2506
    %v2645 = vpack.c.b16 %v2510, %v2507
    %v2646 = vpack.c.b16 %v2514, %v2511
    %v2647 = vpack.c.b16 %v2515, %v2512
    %v2648 = vpack.c.b16 %v2516, %v2513
    %v2649 = vpack.c.b16 %v2520, %v2517
    %v2650 = vpack.c.b16 %v2521, %v2518
    %v2651 = vpack.c.b16 %v2522, %v2519
    %v2652 = vpack.c.b16 %v2526, %v2523
    %v2653 = vpack.c.b16 %v2527, %v2524
    %v2654 = vpack.c.b16 %v2528, %v2525
    %v2655 = vpack.c.b16 %v2532, %v2529
    %v2656 = vpack.c.b16 %v2533, %v2530
    %v2657 = vpack.c.b16 %v2534, %v2531
    %v2658 = vpack.c.b16 %v2538, %v2535
    %v2659 = vpack.c.b16 %v2539, %v2536
    %v2660 = vpack.c.b16 %v2540, %v2537
    %v2661 = vpack.c.b16 %v2544, %v2541
    %v2662 = vpack.c.b16 %v2545, %v2542
    %v2663 = vpack.c.b16 %v2546, %v2543
    %v2664 = vpack.c.b16 %v2550, %v2547
    %v2665 = vpack.c.b16 %v2551, %v2548
    %v2666 = vpack.c.b16 %v2552, %v2549
    %v2667 = vpack.c.b16 %v2556, %v2553
    %v2668 = vpack.c.b16 %v2557, %v2554
    %v2669 = vpack.c.b16 %v2558, %v2555
    %v2670 = vpack.c.b16 %v2562, %v2559
    %v2671 = vpack.c.b16 %v2563, %v2560
    %v2672 = vpack.c.b16 %v2564, %v2561
    %v2673 = vpack.c.b16 %v2568, %v2565
    %v2674 = vpack.c.b16 %v2569, %v2566
    %v2675 = vpack.c.b16 %v2570, %v2567
    %v2676 = vpack.c.b16 %v2574, %v2571
    %v2677 = vpack.c.b16 %v2575, %v2572
    %v2678 = vpack.c.b16 %v2576, %v2573
    %v2679 = vpack.c.b16 %v2580, %v2577
    %v2680 = vpack.c.b16 %v2581, %v2578
    %v2681 = vpack.c.b16 %v2582, %v2579
    %v2682 = vpack.c.b16 %v2586, %v2583
    %v2683 = vpack.c.b16 %v2587, %v2584
    %v2684 = vpack.c.b16 %v2588, %v2585
    %v2685 = vpack.c.b16 %v2592, %v2589
    %v2686 = vpack.c.b16 %v2593, %v2590
    %v2687 = vpack.c.b16 %v2594, %v2591
    %v2688 = vpack.c.b16 %v2598, %v2595
    %v2689 = vpack.c.b16 %v2599, %v2596
    %v2690 = vpack.c.b16 %v2600, %v2597
    %v2691 = vpack.c.b16 %v2604, %v2601
    %v2692 = vpack.c.b16 %v2605, %v2602
    %v2693 = vpack.c.b16 %v2606, %v2603
    %v2694 = vpack.c.b16 %v2610, %v2607
    %v2695 = vpack.c.b16 %v2611, %v2608
    %v2696 = vpack.c.b16 %v2612, %v2609
    %v2697 = vpack.c.b16 %v2616, %v2613
    %v2698 = vpack.c.b16 %v2617, %v2614
    %v2699 = vpack.c.b16 %v2618, %v2615
    %v2700 = vpack.c.b16 %v2622, %v2619
    %v2701 = vpack.c.b16 %v2623, %v2620
    %v2702 = vpack.c.b16 %v2624, %v2621
    %v2703 = vpack.c.b16 %v2628, %v2625
    %v2704 = vpack.c.b16 %v2629, %v2626
    %v2705 = vpack.c.b16 %v2630, %v2627
    %v2706 = vpack.c.b16 %v2634, %v2631
    %v2707 = vpack.c.b16 %v2635, %v2632
    %v2708 = vpack.c.b16 %v2636, %v2633
    %2781 = vmatprep.subr.bf16.mxu0 %v2638
    %2782 = vmatpush1.bf16.msra.mxu0 %v2637
    %2783 = vmatprep.subr.bf16.mxu0 %v2641
    %2784 = vmatpush1.bf16.msra.mxu0 %v2640
    %2785 = vmatprep.subr.bf16.mxu0 %v2644
    %2786 = vmatpush1.bf16.msra.mxu0 %v2643
    %2787 = vmatprep.subr.bf16.mxu0 %v2647
    %2788 = vmatpush1.bf16.msra.mxu0 %v2646
    %2789 = vmatprep.subr.bf16.mxu0 %v2650
    %2790 = vmatpush1.bf16.msra.mxu0 %v2649
    %2791 = vmatprep.subr.bf16.mxu0 %v2653
    %2792 = vmatpush1.bf16.msra.mxu0 %v2652
    %2793 = vmatprep.subr.bf16.mxu0 %v2656
    %2794 = vmatpush1.bf16.msra.mxu0 %v2655
    %2795 = vmatprep.subr.bf16.mxu0 %v2659
    %2796 = vmatpush1.bf16.msra.mxu0 %v2658
    %2797 = vmatprep.subr.bf16.mxu0 %v2662
    %2798 = vmatpush1.bf16.msra.mxu0 %v2661
    %2799 = vmatprep.subr.bf16.mxu0 %v2665
    %2800 = vmatpush1.bf16.msra.mxu0 %v2664
    %2801 = vmatprep.subr.bf16.mxu0 %v2668
    %2802 = vmatpush1.bf16.msra.mxu0 %v2667
    %2803 = vmatprep.subr.bf16.mxu0 %v2671
    %2804 = vmatpush1.bf16.msra.mxu0 %v2670
    %2805 = vmatprep.subr.bf16.mxu0 %v2674
    %2806 = vmatpush1.bf16.msra.mxu0 %v2673
    %2807 = vmatprep.subr.bf16.mxu0 %v2677
    %2808 = vmatpush1.bf16.msra.mxu0 %v2676
    %2809 = vmatprep.subr.bf16.mxu0 %v2680
    %2810 = vmatpush1.bf16.msra.mxu0 %v2679
    %2811 = vmatprep.subr.bf16.mxu0 %v2683
    %2812 = vmatpush1.bf16.msra.mxu0 %v2682
    %2813 = vmatprep.mubr.bf16.mxu0 %v2390
    %2814 = vmatmul.mubr.bf16.gmra.mrb[0].mxu0 %v2387
    %v2815 = vpop.f32.mrb[0].mxu0
    %v2816 = vadd.f32 0.0, %v2815
    %v2817 = vpop.f32.mrb[0].mxu0
    %v2818 = vadd.f32 0.0, %v2817
    %v2819 = vpop.f32.mrb[0].mxu0
    %v2820 = vadd.f32 0.0, %v2819
    %v2821 = vpop.f32.mrb[0].mxu0
    %v2822 = vadd.f32 0.0, %v2821
    %2823 = vdwg.mxu0
    %2824 = vmatprep.subr.bf16.mxu0 %v2686
    %2825 = vmatpush1.bf16.msra.mxu0 %v2685
    %2826 = vmatprep.subr.bf16.mxu0 %v2689
    %2827 = vmatpush1.bf16.msra.mxu0 %v2688
    %2828 = vmatprep.subr.bf16.mxu0 %v2692
    %2829 = vmatpush1.bf16.msra.mxu0 %v2691
    %2830 = vmatprep.subr.bf16.mxu0 %v2695
    %2831 = vmatpush1.bf16.msra.mxu0 %v2694
    %2832 = vmatprep.subr.bf16.mxu0 %v2698
    %2833 = vmatpush1.bf16.msra.mxu0 %v2697
    %2834 = vmatprep.subr.bf16.mxu0 %v2701
    %2835 = vmatpush1.bf16.msra.mxu0 %v2700
    %2836 = vmatprep.subr.bf16.mxu0 %v2704
    %2837 = vmatpush1.bf16.msra.mxu0 %v2703
    %2838 = vmatprep.subr.bf16.mxu0 %v2707
    %2839 = vmatpush1.bf16.msra.mxu0 %v2706
    %2840 = vmatprep.subr.bf16.mxu0 0
    %2841 = vmatpush1.bf16.msra.mxu0 0
    %2842 = vmatprep.subr.bf16.mxu0 0
    %2843 = vmatpush1.bf16.msra.mxu0 0
    %2844 = vmatprep.subr.bf16.mxu0 0
    %2845 = vmatpush1.bf16.msra.mxu0 0
    %2846 = vmatprep.subr.bf16.mxu0 0
    %2847 = vmatpush1.bf16.msra.mxu0 0
    %2848 = vmatprep.subr.bf16.mxu0 0
    %2849 = vmatpush1.bf16.msra.mxu0 0
    %2850 = vmatprep.subr.bf16.mxu0 0
    %2851 = vmatpush1.bf16.msra.mxu0 0
    %2852 = vmatprep.subr.bf16.mxu0 0
    %2853 = vmatpush1.bf16.msra.mxu0 0
    %2854 = vmatprep.subr.bf16.mxu0 0
    %2855 = vmatpush1.bf16.msra.mxu0 0
    %2856 = vmatprep.mubr.bf16.mxu0 0
    %2857 = vmatmul.mubr.bf16.gmra.mrb[0].mxu0 %v2393
    %v2858 = vpop.f32.mrb[0].mxu0
    %v2859 = vadd.f32 %v2816, %v2858
    %v2860 = vpop.f32.mrb[0].mxu0
    %v2861 = vadd.f32 %v2818, %v2860
    %v2862 = vpop.f32.mrb[0].mxu0
    %v2863 = vadd.f32 %v2820, %v2862
    %v2864 = vpop.f32.mrb[0].mxu0
    %v2865 = vadd.f32 %v2822, %v2864
    %2866 = vdwg.mxu0
    %2867 = vmatprep.subr.bf16.mxu0 0
    %2868 = vmatpush1.bf16.msra.mxu0 %v2639
    %2869 = vmatprep.subr.bf16.mxu0 0
    %2870 = vmatpush1.bf16.msra.mxu0 %v2642
    %2871 = vmatprep.subr.bf16.mxu0 0
    %2872 = vmatpush1.bf16.msra.mxu0 %v2645
    %2873 = vmatprep.subr.bf16.mxu0 0
    %2874 = vmatpush1.bf16.msra.mxu0 %v2648
    %2875 = vmatprep.subr.bf16.mxu0 0
    %2876 = vmatpush1.bf16.msra.mxu0 %v2651
    %2877 = vmatprep.subr.bf16.mxu0 0
    %2878 = vmatpush1.bf16.msra.mxu0 %v2654
    %2879 = vmatprep.subr.bf16.mxu0 0
    %2880 = vmatpush1.bf16.msra.mxu0 %v2657
    %2881 = vmatprep.subr.bf16.mxu0 0
    %2882 = vmatpush1.bf16.msra.mxu0 %v2660
    %2883 = vmatprep.subr.bf16.mxu0 0
    %2884 = vmatpush1.bf16.msra.mxu0 %v2663
    %2885 = vmatprep.subr.bf16.mxu0 0
    %2886 = vmatpush1.bf16.msra.mxu0 %v2666
    %2887 = vmatprep.subr.bf16.mxu0 0
    %2888 = vmatpush1.bf16.msra.mxu0 %v2669
    %2889 = vmatprep.subr.bf16.mxu0 0
    %2890 = vmatpush1.bf16.msra.mxu0 %v2672
    %2891 = vmatprep.subr.bf16.mxu0 0
    %2892 = vmatpush1.bf16.msra.mxu0 %v2675
    %2893 = vmatprep.subr.bf16.mxu0 0
    %2894 = vmatpush1.bf16.msra.mxu0 %v2678
    %2895 = vmatprep.subr.bf16.mxu0 0
    %2896 = vmatpush1.bf16.msra.mxu0 %v2681
    %2897 = vmatprep.subr.bf16.mxu0 0
    %2898 = vmatpush1.bf16.msra.mxu0 %v2684
    %2899 = vmatprep.mubr.bf16.mxu0 %v2390
    %2900 = vmatmul.mubr.bf16.gmra.mrb[0].mxu0 %v2387
    %v2901 = vpop.f32.mrb[0].mxu0
    %v2902 = vadd.f32 0.0, %v2901
    %v2903 = vpop.f32.mrb[0].mxu0
    %v2904 = vpop.f32.mrb[0].mxu0
    %v2905 = vadd.f32 0.0, %v2904
    %v2906 = vpop.f32.mrb[0].mxu0
    %2907 = vdwg.mxu0
    %2908 = vmatprep.subr.bf16.mxu0 0
    %2909 = vmatpush1.bf16.msra.mxu0 %v2687
    %2910 = vmatprep.subr.bf16.mxu0 0
    %2911 = vmatpush1.bf16.msra.mxu0 %v2690
    %2912 = vmatprep.subr.bf16.mxu0 0
    %2913 = vmatpush1.bf16.msra.mxu0 %v2693
    %2914 = vmatprep.subr.bf16.mxu0 0
    %2915 = vmatpush1.bf16.msra.mxu0 %v2696
    %2916 = vmatprep.subr.bf16.mxu0 0
    %2917 = vmatpush1.bf16.msra.mxu0 %v2699
    %2918 = vmatprep.subr.bf16.mxu0 0
    %2919 = vmatpush1.bf16.msra.mxu0 %v2702
    %2920 = vmatprep.subr.bf16.mxu0 0
    %2921 = vmatpush1.bf16.msra.mxu0 %v2705
    %2922 = vmatprep.subr.bf16.mxu0 0
    %2923 = vmatpush1.bf16.msra.mxu0 %v2708
    %2924 = vmatprep.subr.bf16.mxu0 0
    %2925 = vmatpush1.bf16.msra.mxu0 0
    %2926 = vmatprep.subr.bf16.mxu0 0
    %2927 = vmatpush1.bf16.msra.mxu0 0
    %2928 = vmatprep.subr.bf16.mxu0 0
    %2929 = vmatpush1.bf16.msra.mxu0 0
    %2930 = vmatprep.subr.bf16.mxu0 0
    %2931 = vmatpush1.bf16.msra.mxu0 0
    %2932 = vmatprep.subr.bf16.mxu0 0
    %2933 = vmatpush1.bf16.msra.mxu0 0
    %2934 = vmatprep.subr.bf16.mxu0 0
    %2935 = vmatpush1.bf16.msra.mxu0 0
    %2936 = vmatprep.subr.bf16.mxu0 0
    %2937 = vmatpush1.bf16.msra.mxu0 0
    %2938 = vmatprep.subr.bf16.mxu0 0
    %2939 = vmatpush1.bf16.msra.mxu0 0
    %2940 = vmatprep.mubr.bf16.mxu0 0
    %2941 = vmatmul.mubr.bf16.gmra.mrb[0].mxu0 %v2393
    %v2942 = vpop.f32.mrb[0].mxu0
    %v2943 = vadd.f32 %v2902, %v2942
    %v2944 = vpop.f32.mrb[0].mxu0
    %v2945 = vpop.f32.mrb[0].mxu0
    %v2946 = vadd.f32 %v2905, %v2945
    %v2947 = vpop.f32.mrb[0].mxu0
    %2948 = vdwg.mxu0
    %v2949 = vadd.f32 %v2187, %v2859
    %v2950 = vadd.f32 %v2189, %v2861
    %v2951 = vadd.f32 %v2271, %v2943
    %v2952 = vadd.f32 %v2191, %v2863
    %v2953 = vadd.f32 %v2193, %v2865
    %v2954 = vadd.f32 %v2274, %v2946
    %vm2955 = vcmp.gt.f32.partialorder %v2949, 0.0
    %vm2956 = vcmp.gt.f32.partialorder %v2950, 0.0
    %vm2957 = vcmp.gt.f32.partialorder %v2951, 0.0
    %vm2958 = vcmp.gt.f32.partialorder %v2952, 0.0
    %vm2959 = vcmp.gt.f32.partialorder %v2953, 0.0
    %vm2960 = vcmp.gt.f32.partialorder %v2954, 0.0
    %v2961 = vmin.f32 %v2949, 0.0
    %v2962 = vmin.f32 %v2950, 0.0
    %v2963 = vmin.f32 %v2951, 0.0
    %v2964 = vmin.f32 %v2952, 0.0
    %v2965 = vmin.f32 %v2953, 0.0
    %v2966 = vmin.f32 %v2954, 0.0
    %v2967 = vmul.f32 %v2961, 1.442695
    %v2968 = vpow.pop %v2967
    %v2969 = vmul.f32 %v2962, 1.442695
    %v2970 = vpow.pop %v2969
    %v2971 = vmul.f32 %v2963, 1.442695
    %v2972 = vpow.pop %v2971
    %v2973 = vmul.f32 %v2964, 1.442695
    %v2974 = vpow.pop %v2973
    %v2975 = vmul.f32 %v2965, 1.442695
    %v2976 = vpow.pop %v2975
    %v2977 = vmul.f32 %v2966, 1.442695
    %v2978 = vpow.pop %v2977
    %v2979 = vsub.f32 %v2968, 1.0
    %v2980 = vsub.f32 %v2970, 1.0
    %v2981 = vsub.f32 %v2972, 1.0
    %v2982 = vsub.f32 %v2974, 1.0
    %v2983 = vsub.f32 %v2976, 1.0
    %v2984 = vsub.f32 %v2978, 1.0
    %v2985 = vsel %vm2955, %v2949, %v2979
    %v2986 = vsel %vm2956, %v2950, %v2980
    %v2987 = vsel %vm2957, %v2951, %v2981
    %v2988 = vsel %vm2958, %v2952, %v2982
    %v2989 = vsel %vm2959, %v2953, %v2983
    %v2990 = vsel %vm2960, %v2954, %v2984
    %vm2991 = vcmp.gt.f32.partialorder %v2985, 0.0
    %vm2992 = vcmp.gt.f32.partialorder %v2986, 0.0
    %vm2993 = vcmp.gt.f32.partialorder %v2987, 0.0
    %vm2994 = vcmp.gt.f32.partialorder %v2988, 0.0
    %vm2995 = vcmp.gt.f32.partialorder %v2989, 0.0
    %vm2996 = vcmp.gt.f32.partialorder %v2990, 0.0
    %v2997 = vmin.f32 %v2985, 0.0
    %v2998 = vmin.f32 %v2986, 0.0
    %v2999 = vmin.f32 %v2987, 0.0
    %v3000 = vmin.f32 %v2988, 0.0
    %v3001 = vmin.f32 %v2989, 0.0
    %v3002 = vmin.f32 %v2990, 0.0
    %v3003 = vmul.f32 %v2997, 1.442695
    %v3004 = vpow.pop %v3003
    %v3005 = vmul.f32 %v2998, 1.442695
    %v3006 = vpow.pop %v3005
    %v3007 = vmul.f32 %v2999, 1.442695
    %v3008 = vpow.pop %v3007
    %v3009 = vmul.f32 %v3000, 1.442695
    %v3010 = vpow.pop %v3009
    %v3011 = vmul.f32 %v3001, 1.442695
    %v3012 = vpow.pop %v3011
    %v3013 = vmul.f32 %v3002, 1.442695
    %v3014 = vpow.pop %v3013
    %v3015 = vsub.f32 %v3004, 1.0
    %v3016 = vsub.f32 %v3006, 1.0
    %v3017 = vsub.f32 %v3008, 1.0
    %v3018 = vsub.f32 %v3010, 1.0
    %v3019 = vsub.f32 %v3012, 1.0
    %v3020 = vsub.f32 %v3014, 1.0
    %v3021 = vsel %vm2991, %v2985, %v3015
    %v3022 = vsel %vm2992, %v2986, %v3016
    %v3023 = vsel %vm2993, %v2987, %v3017
    %v3024 = vsel %vm2994, %v2988, %v3018
    %v3025 = vsel %vm2995, %v2989, %v3019
    %v3026 = vsel %vm2996, %v2990, %v3020
    %v3027 = vpack.c.bf16 %v3024, %v3021
    %v3028 = vpack.c.bf16 %v3025, %v3022
    %v3029 = vpack.c.bf16 %v3026, %v3023
    %v3030 = vld [vmem:[#allocation3 + $0xc] sm:$0xff]
    %v3031 = vld [vmem:[#allocation3 + $0x14] sm:$0xf]
    %v3032 = vld [vmem:[#allocation3 + $0x24] sm:$0xff]
    %v3033 = vld [vmem:[#allocation3 + $0x2c] sm:$0xf]
    %v3034 = vld [vmem:[#allocation3 + $0x3c] sm:$0x11]
    %v3035 = vld [vmem:[#allocation3 + $0x44] sm:$0x1]
    %v3042 = vunpack.c.l.b16 %v3030
    %v3043 = vunpack.c.h.b16 %v3030
    %v3044 = vunpack.c.l.b16 %v3031
    %v3045 = vunpack.c.l.b16 %v3032
    %v3046 = vunpack.c.h.b16 %v3032
    %v3047 = vunpack.c.l.b16 %v3033
    %v3048 = vunpack.c.l.b16 %v3034
    %v3049 = vunpack.c.h.b16 %v3034
    %v3050 = vunpack.c.l.b16 %v3035
    %v3051 = vpack.c.b16 %v3045, %v3042
    %v3052 = vpack.c.b16 %v3046, %v3043
    %v3053 = vpack.c.b16 %v3047, %v3044
    %v3054 = vpack.c.b16 %v3048, %v3048
    %v3055 = vpack.c.b16 %v3049, %v3049
    %v3056 = vpack.c.b16 %v3050, %v3050
    %v3058 = vshrl.u32 %v3051, 16
    %v3060 = vshll.u32 %v3051, 16
    %v3062 = vrot.slane %v3060, 1
    %v3063 = vor.u32 %v3058, %v3062
    %v3065 = vshll.u32 %v3054, 16
    %v3067 = vrot.slane %v3065, 1
    %v3068 = vsel %vm1130, %v3063, %v3067
    %v3070 = vshrl.u32 %v3052, 16
    %v3072 = vshll.u32 %v3052, 16
    %v3074 = vrot.slane %v3072, 1
    %v3075 = vor.u32 %v3070, %v3074
    %v3077 = vshll.u32 %v3055, 16
    %v3079 = vrot.slane %v3077, 1
    %v3080 = vsel %vm1130, %v3075, %v3079
    %v3082 = vshrl.u32 %v3053, 16
    %v3084 = vshll.u32 %v3053, 16
    %v3086 = vrot.slane %v3084, 1
    %v3087 = vor.u32 %v3082, %v3086
    %v3089 = vshll.u32 %v3056, 16
    %v3091 = vrot.slane %v3089, 1
    %v3092 = vsel %vm1130, %v3087, %v3091
    %3096 = vmatprep.subr.bf16.mxu0 %v1411
    %3097 = vmatpush1.bf16.msra.mxu0 %v1410
    %3098 = vmatprep.subr.bf16.mxu0 %v1414
    %3099 = vmatpush1.bf16.msra.mxu0 %v1413
    %3100 = vmatprep.subr.bf16.mxu0 %v1417
    %3101 = vmatpush1.bf16.msra.mxu0 %v1416
    %3102 = vmatprep.subr.bf16.mxu0 %v1420
    %3103 = vmatpush1.bf16.msra.mxu0 %v1419
    %3104 = vmatprep.subr.bf16.mxu0 %v1423
    %3105 = vmatpush1.bf16.msra.mxu0 %v1422
    %3106 = vmatprep.subr.bf16.mxu0 %v1426
    %3107 = vmatpush1.bf16.msra.mxu0 %v1425
    %3108 = vmatprep.subr.bf16.mxu0 %v1429
    %3109 = vmatpush1.bf16.msra.mxu0 %v1428
    %3110 = vmatprep.subr.bf16.mxu0 %v1432
    %3111 = vmatpush1.bf16.msra.mxu0 %v1431
    %3112 = vmatprep.subr.bf16.mxu0 %v1435
    %3113 = vmatpush1.bf16.msra.mxu0 %v1434
    %3114 = vmatprep.subr.bf16.mxu0 %v1438
    %3115 = vmatpush1.bf16.msra.mxu0 %v1437
    %3116 = vmatprep.subr.bf16.mxu0 %v1441
    %3117 = vmatpush1.bf16.msra.mxu0 %v1440
    %3118 = vmatprep.subr.bf16.mxu0 %v1444
    %3119 = vmatpush1.bf16.msra.mxu0 %v1443
    %3120 = vmatprep.subr.bf16.mxu0 %v1447
    %3121 = vmatpush1.bf16.msra.mxu0 %v1446
    %3122 = vmatprep.subr.bf16.mxu0 %v1450
    %3123 = vmatpush1.bf16.msra.mxu0 %v1449
    %3124 = vmatprep.subr.bf16.mxu0 %v1453
    %3125 = vmatpush1.bf16.msra.mxu0 %v1452
    %3126 = vmatprep.subr.bf16.mxu0 %v1456
    %3127 = vmatpush1.bf16.msra.mxu0 %v1455
    %3128 = vmatprep.mubr.bf16.mxu0 %v3080
    %3129 = vmatmul.mubr.bf16.gmra.mrb[0].mxu0 %v3068
    %v3130 = vpop.f32.mrb[0].mxu0
    %v3131 = vadd.f32 0.0, %v3130
    %v3132 = vpop.f32.mrb[0].mxu0
    %v3133 = vadd.f32 0.0, %v3132
    %v3134 = vpop.f32.mrb[0].mxu0
    %v3135 = vadd.f32 0.0, %v3134
    %v3136 = vpop.f32.mrb[0].mxu0
    %v3137 = vadd.f32 0.0, %v3136
    %3138 = vdwg.mxu0
    %3139 = vmatprep.subr.bf16.mxu0 %v1459
    %3140 = vmatpush1.bf16.msra.mxu0 %v1458
    %3141 = vmatprep.subr.bf16.mxu0 %v1462
    %3142 = vmatpush1.bf16.msra.mxu0 %v1461
    %3143 = vmatprep.subr.bf16.mxu0 %v1465
    %3144 = vmatpush1.bf16.msra.mxu0 %v1464
    %3145 = vmatprep.subr.bf16.mxu0 %v1468
    %3146 = vmatpush1.bf16.msra.mxu0 %v1467
    %3147 = vmatprep.subr.bf16.mxu0 %v1471
    %3148 = vmatpush1.bf16.msra.mxu0 %v1470
    %3149 = vmatprep.subr.bf16.mxu0 %v1474
    %3150 = vmatpush1.bf16.msra.mxu0 %v1473
    %3151 = vmatprep.subr.bf16.mxu0 %v1477
    %3152 = vmatpush1.bf16.msra.mxu0 %v1476
    %3153 = vmatprep.subr.bf16.mxu0 %v1480
    %3154 = vmatpush1.bf16.msra.mxu0 %v1479
    %3155 = vmatprep.subr.bf16.mxu0 0
    %3156 = vmatpush1.bf16.msra.mxu0 0
    %3157 = vmatprep.subr.bf16.mxu0 0
    %3158 = vmatpush1.bf16.msra.mxu0 0
    %3159 = vmatprep.subr.bf16.mxu0 0
    %3160 = vmatpush1.bf16.msra.mxu0 0
    %3161 = vmatprep.subr.bf16.mxu0 0
    %3162 = vmatpush1.bf16.msra.mxu0 0
    %3163 = vmatprep.subr.bf16.mxu0 0
    %3164 = vmatpush1.bf16.msra.mxu0 0
    %3165 = vmatprep.subr.bf16.mxu0 0
    %3166 = vmatpush1.bf16.msra.mxu0 0
    %3167 = vmatprep.subr.bf16.mxu0 0
    %3168 = vmatpush1.bf16.msra.mxu0 0
    %3169 = vmatprep.subr.bf16.mxu0 0
    %3170 = vmatpush1.bf16.msra.mxu0 0
    %3171 = vmatprep.mubr.bf16.mxu0 0
    %3172 = vmatmul.mubr.bf16.gmra.mrb[0].mxu0 %v3092
    %v3173 = vpop.f32.mrb[0].mxu0
    %v3174 = vadd.f32 %v3131, %v3173
    %v3175 = vpop.f32.mrb[0].mxu0
    %v3176 = vadd.f32 %v3133, %v3175
    %v3177 = vpop.f32.mrb[0].mxu0
    %v3178 = vadd.f32 %v3135, %v3177
    %v3179 = vpop.f32.mrb[0].mxu0
    %v3180 = vadd.f32 %v3137, %v3179
    %3181 = vdwg.mxu0
    %3182 = vmatprep.subr.bf16.mxu0 0
    %3183 = vmatpush1.bf16.msra.mxu0 %v1412
    %3184 = vmatprep.subr.bf16.mxu0 0
    %3185 = vmatpush1.bf16.msra.mxu0 %v1415
    %3186 = vmatprep.subr.bf16.mxu0 0
    %3187 = vmatpush1.bf16.msra.mxu0 %v1418
    %3188 = vmatprep.subr.bf16.mxu0 0
    %3189 = vmatpush1.bf16.msra.mxu0 %v1421
    %3190 = vmatprep.subr.bf16.mxu0 0
    %3191 = vmatpush1.bf16.msra.mxu0 %v1424
    %3192 = vmatprep.subr.bf16.mxu0 0
    %3193 = vmatpush1.bf16.msra.mxu0 %v1427
    %3194 = vmatprep.subr.bf16.mxu0 0
    %3195 = vmatpush1.bf16.msra.mxu0 %v1430
    %3196 = vmatprep.subr.bf16.mxu0 0
    %3197 = vmatpush1.bf16.msra.mxu0 %v1433
    %3198 = vmatprep.subr.bf16.mxu0 0
    %3199 = vmatpush1.bf16.msra.mxu0 %v1436
    %3200 = vmatprep.subr.bf16.mxu0 0
    %3201 = vmatpush1.bf16.msra.mxu0 %v1439
    %3202 = vmatprep.subr.bf16.mxu0 0
    %3203 = vmatpush1.bf16.msra.mxu0 %v1442
    %3204 = vmatprep.subr.bf16.mxu0 0
    %3205 = vmatpush1.bf16.msra.mxu0 %v1445
    %3206 = vmatprep.subr.bf16.mxu0 0
    %3207 = vmatpush1.bf16.msra.mxu0 %v1448
    %3208 = vmatprep.subr.bf16.mxu0 0
    %3209 = vmatpush1.bf16.msra.mxu0 %v1451
    %3210 = vmatprep.subr.bf16.mxu0 0
    %3211 = vmatpush1.bf16.msra.mxu0 %v1454
    %3212 = vmatprep.subr.bf16.mxu0 0
    %3213 = vmatpush1.bf16.msra.mxu0 %v1457
    %3214 = vmatprep.mubr.bf16.mxu0 %v3080
    %3215 = vmatmul.mubr.bf16.gmra.mrb[0].mxu0 %v3068
    %v3216 = vpop.f32.mrb[0].mxu0
    %v3217 = vadd.f32 0.0, %v3216
    %v3218 = vpop.f32.mrb[0].mxu0
    %v3219 = vpop.f32.mrb[0].mxu0
    %v3220 = vadd.f32 0.0, %v3219
    %v3221 = vpop.f32.mrb[0].mxu0
    %3222 = vdwg.mxu0
    %3223 = vmatprep.subr.bf16.mxu0 0
    %3224 = vmatpush1.bf16.msra.mxu0 %v1460
    %3225 = vmatprep.subr.bf16.mxu0 0
    %3226 = vmatpush1.bf16.msra.mxu0 %v1463
    %3227 = vmatprep.subr.bf16.mxu0 0
    %3228 = vmatpush1.bf16.msra.mxu0 %v1466
    %3229 = vmatprep.subr.bf16.mxu0 0
    %3230 = vmatpush1.bf16.msra.mxu0 %v1469
    %3231 = vmatprep.subr.bf16.mxu0 0
    %3232 = vmatpush1.bf16.msra.mxu0 %v1472
    %3233 = vmatprep.subr.bf16.mxu0 0
    %3234 = vmatpush1.bf16.msra.mxu0 %v1475
    %3235 = vmatprep.subr.bf16.mxu0 0
    %3236 = vmatpush1.bf16.msra.mxu0 %v1478
    %3237 = vmatprep.subr.bf16.mxu0 0
    %3238 = vmatpush1.bf16.msra.mxu0 %v1481
    %3239 = vmatprep.subr.bf16.mxu0 0
    %3240 = vmatpush1.bf16.msra.mxu0 0
    %3241 = vmatprep.subr.bf16.mxu0 0
    %3242 = vmatpush1.bf16.msra.mxu0 0
    %3243 = vmatprep.subr.bf16.mxu0 0
    %3244 = vmatpush1.bf16.msra.mxu0 0
    %3245 = vmatprep.subr.bf16.mxu0 0
    %3246 = vmatpush1.bf16.msra.mxu0 0
    %3247 = vmatprep.subr.bf16.mxu0 0
    %3248 = vmatpush1.bf16.msra.mxu0 0
    %3249 = vmatprep.subr.bf16.mxu0 0
    %3250 = vmatpush1.bf16.msra.mxu0 0
    %3251 = vmatprep.subr.bf16.mxu0 0
    %3252 = vmatpush1.bf16.msra.mxu0 0
    %3253 = vmatprep.subr.bf16.mxu0 0
    %3254 = vmatpush1.bf16.msra.mxu0 0
    %3255 = vmatprep.mubr.bf16.mxu0 0
    %3256 = vmatmul.mubr.bf16.gmra.mrb[0].mxu0 %v3092
    %v3257 = vpop.f32.mrb[0].mxu0
    %v3258 = vadd.f32 %v3217, %v3257
    %v3259 = vpop.f32.mrb[0].mxu0
    %v3260 = vpop.f32.mrb[0].mxu0
    %v3261 = vadd.f32 %v3220, %v3260
    %v3262 = vpop.f32.mrb[0].mxu0
    %3263 = vdwg.mxu0
    %3267 = vmatprep.subr.bf16.mxu0 %v1966
    %3268 = vmatpush1.bf16.msra.mxu0 %v1965
    %3269 = vmatprep.subr.bf16.mxu0 %v1969
    %3270 = vmatpush1.bf16.msra.mxu0 %v1968
    %3271 = vmatprep.subr.bf16.mxu0 %v1972
    %3272 = vmatpush1.bf16.msra.mxu0 %v1971
    %3273 = vmatprep.subr.bf16.mxu0 %v1975
    %3274 = vmatpush1.bf16.msra.mxu0 %v1974
    %3275 = vmatprep.subr.bf16.mxu0 %v1978
    %3276 = vmatpush1.bf16.msra.mxu0 %v1977
    %3277 = vmatprep.subr.bf16.mxu0 %v1981
    %3278 = vmatpush1.bf16.msra.mxu0 %v1980
    %3279 = vmatprep.subr.bf16.mxu0 %v1984
    %3280 = vmatpush1.bf16.msra.mxu0 %v1983
    %3281 = vmatprep.subr.bf16.mxu0 %v1987
    %3282 = vmatpush1.bf16.msra.mxu0 %v1986
    %3283 = vmatprep.subr.bf16.mxu0 %v1990
    %3284 = vmatpush1.bf16.msra.mxu0 %v1989
    %3285 = vmatprep.subr.bf16.mxu0 %v1993
    %3286 = vmatpush1.bf16.msra.mxu0 %v1992
    %3287 = vmatprep.subr.bf16.mxu0 %v1996
    %3288 = vmatpush1.bf16.msra.mxu0 %v1995
    %3289 = vmatprep.subr.bf16.mxu0 %v1999
    %3290 = vmatpush1.bf16.msra.mxu0 %v1998
    %3291 = vmatprep.subr.bf16.mxu0 %v2002
    %3292 = vmatpush1.bf16.msra.mxu0 %v2001
    %3293 = vmatprep.subr.bf16.mxu0 %v2005
    %3294 = vmatpush1.bf16.msra.mxu0 %v2004
    %3295 = vmatprep.subr.bf16.mxu0 %v2008
    %3296 = vmatpush1.bf16.msra.mxu0 %v2007
    %3297 = vmatprep.subr.bf16.mxu0 %v2011
    %3298 = vmatpush1.bf16.msra.mxu0 %v2010
    %3299 = vmatprep.mubr.bf16.mxu0 %v3052
    %3300 = vmatmul.mubr.bf16.gmra.mrb[0].mxu0 %v3051
    %v3301 = vpop.f32.mrb[0].mxu0
    %v3302 = vadd.f32 %v3174, %v3301
    %v3303 = vpop.f32.mrb[0].mxu0
    %v3304 = vadd.f32 %v3176, %v3303
    %v3305 = vpop.f32.mrb[0].mxu0
    %v3306 = vadd.f32 %v3178, %v3305
    %v3307 = vpop.f32.mrb[0].mxu0
    %v3308 = vadd.f32 %v3180, %v3307
    %3309 = vdwg.mxu0
    %3310 = vmatprep.subr.bf16.mxu0 %v2014
    %3311 = vmatpush1.bf16.msra.mxu0 %v2013
    %3312 = vmatprep.subr.bf16.mxu0 %v2017
    %3313 = vmatpush1.bf16.msra.mxu0 %v2016
    %3314 = vmatprep.subr.bf16.mxu0 %v2020
    %3315 = vmatpush1.bf16.msra.mxu0 %v2019
    %3316 = vmatprep.subr.bf16.mxu0 %v2023
    %3317 = vmatpush1.bf16.msra.mxu0 %v2022
    %3318 = vmatprep.subr.bf16.mxu0 %v2026
    %3319 = vmatpush1.bf16.msra.mxu0 %v2025
    %3320 = vmatprep.subr.bf16.mxu0 %v2029
    %3321 = vmatpush1.bf16.msra.mxu0 %v2028
    %3322 = vmatprep.subr.bf16.mxu0 %v2032
    %3323 = vmatpush1.bf16.msra.mxu0 %v2031
    %3324 = vmatprep.subr.bf16.mxu0 %v2035
    %3325 = vmatpush1.bf16.msra.mxu0 %v2034
    %3326 = vmatprep.subr.bf16.mxu0 0
    %3327 = vmatpush1.bf16.msra.mxu0 0
    %3328 = vmatprep.subr.bf16.mxu0 0
    %3329 = vmatpush1.bf16.msra.mxu0 0
    %3330 = vmatprep.subr.bf16.mxu0 0
    %3331 = vmatpush1.bf16.msra.mxu0 0
    %3332 = vmatprep.subr.bf16.mxu0 0
    %3333 = vmatpush1.bf16.msra.mxu0 0
    %3334 = vmatprep.subr.bf16.mxu0 0
    %3335 = vmatpush1.bf16.msra.mxu0 0
    %3336 = vmatprep.subr.bf16.mxu0 0
    %3337 = vmatpush1.bf16.msra.mxu0 0
    %3338 = vmatprep.subr.bf16.mxu0 0
    %3339 = vmatpush1.bf16.msra.mxu0 0
    %3340 = vmatprep.subr.bf16.mxu0 0
    %3341 = vmatpush1.bf16.msra.mxu0 0
    %3342 = vmatprep.mubr.bf16.mxu0 0
    %3343 = vmatmul.mubr.bf16.gmra.mrb[0].mxu0 %v3053
    %v3344 = vpop.f32.mrb[0].mxu0
    %v3345 = vadd.f32 %v3302, %v3344
    %v3346 = vpop.f32.mrb[0].mxu0
    %v3347 = vadd.f32 %v3304, %v3346
    %v3348 = vpop.f32.mrb[0].mxu0
    %v3349 = vadd.f32 %v3306, %v3348
    %v3350 = vpop.f32.mrb[0].mxu0
    %v3351 = vadd.f32 %v3308, %v3350
    %3352 = vdwg.mxu0
    %3353 = vmatprep.subr.bf16.mxu0 0
    %3354 = vmatpush1.bf16.msra.mxu0 %v1967
    %3355 = vmatprep.subr.bf16.mxu0 0
    %3356 = vmatpush1.bf16.msra.mxu0 %v1970
    %3357 = vmatprep.subr.bf16.mxu0 0
    %3358 = vmatpush1.bf16.msra.mxu0 %v1973
    %3359 = vmatprep.subr.bf16.mxu0 0
    %3360 = vmatpush1.bf16.msra.mxu0 %v1976
    %3361 = vmatprep.subr.bf16.mxu0 0
    %3362 = vmatpush1.bf16.msra.mxu0 %v1979
    %3363 = vmatprep.subr.bf16.mxu0 0
    %3364 = vmatpush1.bf16.msra.mxu0 %v1982
    %3365 = vmatprep.subr.bf16.mxu0 0
    %3366 = vmatpush1.bf16.msra.mxu0 %v1985
    %3367 = vmatprep.subr.bf16.mxu0 0
    %3368 = vmatpush1.bf16.msra.mxu0 %v1988
    %3369 = vmatprep.subr.bf16.mxu0 0
    %3370 = vmatpush1.bf16.msra.mxu0 %v1991
    %3371 = vmatprep.subr.bf16.mxu0 0
    %3372 = vmatpush1.bf16.msra.mxu0 %v1994
    %3373 = vmatprep.subr.bf16.mxu0 0
    %3374 = vmatpush1.bf16.msra.mxu0 %v1997
    %3375 = vmatprep.subr.bf16.mxu0 0
    %3376 = vmatpush1.bf16.msra.mxu0 %v2000
    %3377 = vmatprep.subr.bf16.mxu0 0
    %3378 = vmatpush1.bf16.msra.mxu0 %v2003
    %3379 = vmatprep.subr.bf16.mxu0 0
    %3380 = vmatpush1.bf16.msra.mxu0 %v2006
    %3381 = vmatprep.subr.bf16.mxu0 0
    %3382 = vmatpush1.bf16.msra.mxu0 %v2009
    %3383 = vmatprep.subr.bf16.mxu0 0
    %3384 = vmatpush1.bf16.msra.mxu0 %v2012
    %3385 = vmatprep.mubr.bf16.mxu0 %v3052
    %3386 = vmatmul.mubr.bf16.gmra.mrb[0].mxu0 %v3051
    %v3387 = vpop.f32.mrb[0].mxu0
    %v3388 = vadd.f32 %v3258, %v3387
    %v3389 = vpop.f32.mrb[0].mxu0
    %v3390 = vpop.f32.mrb[0].mxu0
    %v3391 = vadd.f32 %v3261, %v3390
    %v3392 = vpop.f32.mrb[0].mxu0
    %3393 = vdwg.mxu0
    %3394 = vmatprep.subr.bf16.mxu0 0
    %3395 = vmatpush1.bf16.msra.mxu0 %v2015
    %3396 = vmatprep.subr.bf16.mxu0 0
    %3397 = vmatpush1.bf16.msra.mxu0 %v2018
    %3398 = vmatprep.subr.bf16.mxu0 0
    %3399 = vmatpush1.bf16.msra.mxu0 %v2021
    %3400 = vmatprep.subr.bf16.mxu0 0
    %3401 = vmatpush1.bf16.msra.mxu0 %v2024
    %3402 = vmatprep.subr.bf16.mxu0 0
    %3403 = vmatpush1.bf16.msra.mxu0 %v2027
    %3404 = vmatprep.subr.bf16.mxu0 0
    %3405 = vmatpush1.bf16.msra.mxu0 %v2030
    %3406 = vmatprep.subr.bf16.mxu0 0
    %3407 = vmatpush1.bf16.msra.mxu0 %v2033
    %3408 = vmatprep.subr.bf16.mxu0 0
    %3409 = vmatpush1.bf16.msra.mxu0 %v2036
    %3410 = vmatprep.subr.bf16.mxu0 0
    %3411 = vmatpush1.bf16.msra.mxu0 0
    %3412 = vmatprep.subr.bf16.mxu0 0
    %3413 = vmatpush1.bf16.msra.mxu0 0
    %3414 = vmatprep.subr.bf16.mxu0 0
    %3415 = vmatpush1.bf16.msra.mxu0 0
    %3416 = vmatprep.subr.bf16.mxu0 0
    %3417 = vmatpush1.bf16.msra.mxu0 0
    %3418 = vmatprep.subr.bf16.mxu0 0
    %3419 = vmatpush1.bf16.msra.mxu0 0
    %3420 = vmatprep.subr.bf16.mxu0 0
    %3421 = vmatpush1.bf16.msra.mxu0 0
    %3422 = vmatprep.subr.bf16.mxu0 0
    %3423 = vmatpush1.bf16.msra.mxu0 0
    %3424 = vmatprep.subr.bf16.mxu0 0
    %3425 = vmatpush1.bf16.msra.mxu0 0
    %3426 = vmatprep.mubr.bf16.mxu0 0
    %3427 = vmatmul.mubr.bf16.gmra.mrb[0].mxu0 %v3053
    %v3428 = vpop.f32.mrb[0].mxu0
    %v3429 = vadd.f32 %v3388, %v3428
    %v3430 = vpop.f32.mrb[0].mxu0
    %v3431 = vpop.f32.mrb[0].mxu0
    %v3432 = vadd.f32 %v3391, %v3431
    %v3433 = vpop.f32.mrb[0].mxu0
    %3434 = vdwg.mxu0
    %v3435 = vld [vmem:[#allocation3 + $0xc] sm:$0xee]
    %v3436 = vld [vmem:[#allocation3 + $0x14] sm:$0xe]
    %v3439 = vunpack.c.l.b16 %v3435
    %v3440 = vunpack.c.h.b16 %v3435
    %v3441 = vunpack.c.l.b16 %v3436
    %v3442 = vpack.c.b16 %v3045, %v3439
    %v3443 = vpack.c.b16 %v3046, %v3440
    %v3444 = vpack.c.b16 %v3047, %v3441
    %v3445 = vrot.slane %v3442, 1
    %v3446 = vrot.slane %v3054, 1
    %v3447 = vsel %vm2384, %v3445, %v3446
    %v3448 = vrot.slane %v3443, 1
    %v3449 = vrot.slane %v3055, 1
    %v3450 = vsel %vm2384, %v3448, %v3449
    %v3451 = vrot.slane %v3444, 1
    %v3452 = vrot.slane %v3056, 1
    %v3453 = vsel %vm2384, %v3451, %v3452
    %3457 = vmatprep.subr.bf16.mxu0 %v2638
    %3458 = vmatpush1.bf16.msra.mxu0 %v2637
    %3459 = vmatprep.subr.bf16.mxu0 %v2641
    %3460 = vmatpush1.bf16.msra.mxu0 %v2640
    %3461 = vmatprep.subr.bf16.mxu0 %v2644
    %3462 = vmatpush1.bf16.msra.mxu0 %v2643
    %3463 = vmatprep.subr.bf16.mxu0 %v2647
    %3464 = vmatpush1.bf16.msra.mxu0 %v2646
    %3465 = vmatprep.subr.bf16.mxu0 %v2650
    %3466 = vmatpush1.bf16.msra.mxu0 %v2649
    %3467 = vmatprep.subr.bf16.mxu0 %v2653
    %3468 = vmatpush1.bf16.msra.mxu0 %v2652
    %3469 = vmatprep.subr.bf16.mxu0 %v2656
    %3470 = vmatpush1.bf16.msra.mxu0 %v2655
    %3471 = vmatprep.subr.bf16.mxu0 %v2659
    %3472 = vmatpush1.bf16.msra.mxu0 %v2658
    %3473 = vmatprep.subr.bf16.mxu0 %v2662
    %3474 = vmatpush1.bf16.msra.mxu0 %v2661
    %3475 = vmatprep.subr.bf16.mxu0 %v2665
    %3476 = vmatpush1.bf16.msra.mxu0 %v2664
    %3477 = vmatprep.subr.bf16.mxu0 %v2668
    %3478 = vmatpush1.bf16.msra.mxu0 %v2667
    %3479 = vmatprep.subr.bf16.mxu0 %v2671
    %3480 = vmatpush1.bf16.msra.mxu0 %v2670
    %3481 = vmatprep.subr.bf16.mxu0 %v2674
    %3482 = vmatpush1.bf16.msra.mxu0 %v2673
    %3483 = vmatprep.subr.bf16.mxu0 %v2677
    %3484 = vmatpush1.bf16.msra.mxu0 %v2676
    %3485 = vmatprep.subr.bf16.mxu0 %v2680
    %3486 = vmatpush1.bf16.msra.mxu0 %v2679
    %3487 = vmatprep.subr.bf16.mxu0 %v2683
    %3488 = vmatpush1.bf16.msra.mxu0 %v2682
    %3489 = vmatprep.mubr.bf16.mxu0 %v3450
    %3490 = vmatmul.mubr.bf16.gmra.mrb[0].mxu0 %v3447
    %v3491 = vpop.f32.mrb[0].mxu0
    %v3492 = vadd.f32 0.0, %v3491
    %v3493 = vpop.f32.mrb[0].mxu0
    %v3494 = vadd.f32 0.0, %v3493
    %v3495 = vpop.f32.mrb[0].mxu0
    %v3496 = vadd.f32 0.0, %v3495
    %v3497 = vpop.f32.mrb[0].mxu0
    %v3498 = vadd.f32 0.0, %v3497
    %3499 = vdwg.mxu0
    %3500 = vmatprep.subr.bf16.mxu0 %v2686
    %3501 = vmatpush1.bf16.msra.mxu0 %v2685
    %3502 = vmatprep.subr.bf16.mxu0 %v2689
    %3503 = vmatpush1.bf16.msra.mxu0 %v2688
    %3504 = vmatprep.subr.bf16.mxu0 %v2692
    %3505 = vmatpush1.bf16.msra.mxu0 %v2691
    %3506 = vmatprep.subr.bf16.mxu0 %v2695
    %3507 = vmatpush1.bf16.msra.mxu0 %v2694
    %3508 = vmatprep.subr.bf16.mxu0 %v2698
    %3509 = vmatpush1.bf16.msra.mxu0 %v2697
    %3510 = vmatprep.subr.bf16.mxu0 %v2701
    %3511 = vmatpush1.bf16.msra.mxu0 %v2700
    %3512 = vmatprep.subr.bf16.mxu0 %v2704
    %3513 = vmatpush1.bf16.msra.mxu0 %v2703
    %3514 = vmatprep.subr.bf16.mxu0 %v2707
    %3515 = vmatpush1.bf16.msra.mxu0 %v2706
    %3516 = vmatprep.subr.bf16.mxu0 0
    %3517 = vmatpush1.bf16.msra.mxu0 0
    %3518 = vmatprep.subr.bf16.mxu0 0
    %3519 = vmatpush1.bf16.msra.mxu0 0
    %3520 = vmatprep.subr.bf16.mxu0 0
    %3521 = vmatpush1.bf16.msra.mxu0 0
    %3522 = vmatprep.subr.bf16.mxu0 0
    %3523 = vmatpush1.bf16.msra.mxu0 0
    %3524 = vmatprep.subr.bf16.mxu0 0
    %3525 = vmatpush1.bf16.msra.mxu0 0
    %3526 = vmatprep.subr.bf16.mxu0 0
    %3527 = vmatpush1.bf16.msra.mxu0 0
    %3528 = vmatprep.subr.bf16.mxu0 0
    %3529 = vmatpush1.bf16.msra.mxu0 0
    %3530 = vmatprep.subr.bf16.mxu0 0
    %3531 = vmatpush1.bf16.msra.mxu0 0
    %3532 = vmatprep.mubr.bf16.mxu0 0
    %3533 = vmatmul.mubr.bf16.gmra.mrb[0].mxu0 %v3453
    %v3534 = vpop.f32.mrb[0].mxu0
    %v3535 = vadd.f32 %v3492, %v3534
    %v3536 = vpop.f32.mrb[0].mxu0
    %v3537 = vadd.f32 %v3494, %v3536
    %v3538 = vpop.f32.mrb[0].mxu0
    %v3539 = vadd.f32 %v3496, %v3538
    %v3540 = vpop.f32.mrb[0].mxu0
    %v3541 = vadd.f32 %v3498, %v3540
    %3542 = vdwg.mxu0
    %3543 = vmatprep.subr.bf16.mxu0 0
    %3544 = vmatpush1.bf16.msra.mxu0 %v2639
    %3545 = vmatprep.subr.bf16.mxu0 0
    %3546 = vmatpush1.bf16.msra.mxu0 %v2642
    %3547 = vmatprep.subr.bf16.mxu0 0
    %3548 = vmatpush1.bf16.msra.mxu0 %v2645
    %3549 = vmatprep.subr.bf16.mxu0 0
    %3550 = vmatpush1.bf16.msra.mxu0 %v2648
    %3551 = vmatprep.subr.bf16.mxu0 0
    %3552 = vmatpush1.bf16.msra.mxu0 %v2651
    %3553 = vmatprep.subr.bf16.mxu0 0
    %3554 = vmatpush1.bf16.msra.mxu0 %v2654
    %3555 = vmatprep.subr.bf16.mxu0 0
    %3556 = vmatpush1.bf16.msra.mxu0 %v2657
    %3557 = vmatprep.subr.bf16.mxu0 0
    %3558 = vmatpush1.bf16.msra.mxu0 %v2660
    %3559 = vmatprep.subr.bf16.mxu0 0
    %3560 = vmatpush1.bf16.msra.mxu0 %v2663
    %3561 = vmatprep.subr.bf16.mxu0 0
    %3562 = vmatpush1.bf16.msra.mxu0 %v2666
    %3563 = vmatprep.subr.bf16.mxu0 0
    %3564 = vmatpush1.bf16.msra.mxu0 %v2669
    %3565 = vmatprep.subr.bf16.mxu0 0
    %3566 = vmatpush1.bf16.msra.mxu0 %v2672
    %3567 = vmatprep.subr.bf16.mxu0 0
    %3568 = vmatpush1.bf16.msra.mxu0 %v2675
    %3569 = vmatprep.subr.bf16.mxu0 0
    %3570 = vmatpush1.bf16.msra.mxu0 %v2678
    %3571 = vmatprep.subr.bf16.mxu0 0
    %3572 = vmatpush1.bf16.msra.mxu0 %v2681
    %3573 = vmatprep.subr.bf16.mxu0 0
    %3574 = vmatpush1.bf16.msra.mxu0 %v2684
    %3575 = vmatprep.mubr.bf16.mxu0 %v3450
    %3576 = vmatmul.mubr.bf16.gmra.mrb[0].mxu0 %v3447
    %v3577 = vpop.f32.mrb[0].mxu0
    %v3578 = vadd.f32 0.0, %v3577
    %v3579 = vpop.f32.mrb[0].mxu0
    %v3580 = vpop.f32.mrb[0].mxu0
    %v3581 = vadd.f32 0.0, %v3580
    %v3582 = vpop.f32.mrb[0].mxu0
    %3583 = vdwg.mxu0
    %3584 = vmatprep.subr.bf16.mxu0 0
    %3585 = vmatpush1.bf16.msra.mxu0 %v2687
    %3586 = vmatprep.subr.bf16.mxu0 0
    %3587 = vmatpush1.bf16.msra.mxu0 %v2690
    %3588 = vmatprep.subr.bf16.mxu0 0
    %3589 = vmatpush1.bf16.msra.mxu0 %v2693
    %3590 = vmatprep.subr.bf16.mxu0 0
    %3591 = vmatpush1.bf16.msra.mxu0 %v2696
    %3592 = vmatprep.subr.bf16.mxu0 0
    %3593 = vmatpush1.bf16.msra.mxu0 %v2699
    %3594 = vmatprep.subr.bf16.mxu0 0
    %3595 = vmatpush1.bf16.msra.mxu0 %v2702
    %3596 = vmatprep.subr.bf16.mxu0 0
    %3597 = vmatpush1.bf16.msra.mxu0 %v2705
    %3598 = vmatprep.subr.bf16.mxu0 0
    %3599 = vmatpush1.bf16.msra.mxu0 %v2708
    %3600 = vmatprep.subr.bf16.mxu0 0
    %3601 = vmatpush1.bf16.msra.mxu0 0
    %3602 = vmatprep.subr.bf16.mxu0 0
    %3603 = vmatpush1.bf16.msra.mxu0 0
    %3604 = vmatprep.subr.bf16.mxu0 0
    %3605 = vmatpush1.bf16.msra.mxu0 0
    %3606 = vmatprep.subr.bf16.mxu0 0
    %3607 = vmatpush1.bf16.msra.mxu0 0
    %3608 = vmatprep.subr.bf16.mxu0 0
    %3609 = vmatpush1.bf16.msra.mxu0 0
    %3610 = vmatprep.subr.bf16.mxu0 0
    %3611 = vmatpush1.bf16.msra.mxu0 0
    %3612 = vmatprep.subr.bf16.mxu0 0
    %3613 = vmatpush1.bf16.msra.mxu0 0
    %3614 = vmatprep.subr.bf16.mxu0 0
    %3615 = vmatpush1.bf16.msra.mxu0 0
    %3616 = vmatprep.mubr.bf16.mxu0 0
    %3617 = vmatmul.mubr.bf16.gmra.mrb[0].mxu0 %v3453
    %v3618 = vpop.f32.mrb[0].mxu0
    %v3619 = vadd.f32 %v3578, %v3618
    %v3620 = vpop.f32.mrb[0].mxu0
    %v3621 = vpop.f32.mrb[0].mxu0
    %v3622 = vadd.f32 %v3581, %v3621
    %v3623 = vpop.f32.mrb[0].mxu0
    %3624 = vdwg.mxu0
    %v3625 = vadd.f32 %v3345, %v3535
    %v3626 = vadd.f32 %v3347, %v3537
    %v3627 = vadd.f32 %v3429, %v3619
    %v3628 = vadd.f32 %v3349, %v3539
    %v3629 = vadd.f32 %v3351, %v3541
    %v3630 = vadd.f32 %v3432, %v3622
    %vm3631 = vcmp.gt.f32.partialorder %v3625, 0.0
    %vm3632 = vcmp.gt.f32.partialorder %v3626, 0.0
    %vm3633 = vcmp.gt.f32.partialorder %v3627, 0.0
    %vm3634 = vcmp.gt.f32.partialorder %v3628, 0.0
    %vm3635 = vcmp.gt.f32.partialorder %v3629, 0.0
    %vm3636 = vcmp.gt.f32.partialorder %v3630, 0.0
    %v3637 = vmin.f32 %v3625, 0.0
    %v3638 = vmin.f32 %v3626, 0.0
    %v3639 = vmin.f32 %v3627, 0.0
    %v3640 = vmin.f32 %v3628, 0.0
    %v3641 = vmin.f32 %v3629, 0.0
    %v3642 = vmin.f32 %v3630, 0.0
    %v3643 = vmul.f32 %v3637, 1.442695
    %v3644 = vpow.pop %v3643
    %v3645 = vmul.f32 %v3638, 1.442695
    %v3646 = vpow.pop %v3645
    %v3647 = vmul.f32 %v3639, 1.442695
    %v3648 = vpow.pop %v3647
    %v3649 = vmul.f32 %v3640, 1.442695
    %v3650 = vpow.pop %v3649
    %v3651 = vmul.f32 %v3641, 1.442695
    %v3652 = vpow.pop %v3651
    %v3653 = vmul.f32 %v3642, 1.442695
    %v3654 = vpow.pop %v3653
    %v3655 = vsub.f32 %v3644, 1.0
    %v3656 = vsub.f32 %v3646, 1.0
    %v3657 = vsub.f32 %v3648, 1.0
    %v3658 = vsub.f32 %v3650, 1.0
    %v3659 = vsub.f32 %v3652, 1.0
    %v3660 = vsub.f32 %v3654, 1.0
    %v3661 = vsel %vm3631, %v3625, %v3655
    %v3662 = vsel %vm3632, %v3626, %v3656
    %v3663 = vsel %vm3633, %v3627, %v3657
    %v3664 = vsel %vm3634, %v3628, %v3658
    %v3665 = vsel %vm3635, %v3629, %v3659
    %v3666 = vsel %vm3636, %v3630, %v3660
    %vm3667 = vcmp.gt.f32.partialorder %v3661, 0.0
    %vm3668 = vcmp.gt.f32.partialorder %v3662, 0.0
    %vm3669 = vcmp.gt.f32.partialorder %v3663, 0.0
    %vm3670 = vcmp.gt.f32.partialorder %v3664, 0.0
    %vm3671 = vcmp.gt.f32.partialorder %v3665, 0.0
    %vm3672 = vcmp.gt.f32.partialorder %v3666, 0.0
    %v3673 = vmin.f32 %v3661, 0.0
    %v3674 = vmin.f32 %v3662, 0.0
    %v3675 = vmin.f32 %v3663, 0.0
    %v3676 = vmin.f32 %v3664, 0.0
    %v3677 = vmin.f32 %v3665, 0.0
    %v3678 = vmin.f32 %v3666, 0.0
    %v3679 = vmul.f32 %v3673, 1.442695
    %v3680 = vpow.pop %v3679
    %v3681 = vmul.f32 %v3674, 1.442695
    %v3682 = vpow.pop %v3681
    %v3683 = vmul.f32 %v3675, 1.442695
    %v3684 = vpow.pop %v3683
    %v3685 = vmul.f32 %v3676, 1.442695
    %v3686 = vpow.pop %v3685
    %v3687 = vmul.f32 %v3677, 1.442695
    %v3688 = vpow.pop %v3687
    %v3689 = vmul.f32 %v3678, 1.442695
    %v3690 = vpow.pop %v3689
    %v3691 = vsub.f32 %v3680, 1.0
    %v3692 = vsub.f32 %v3682, 1.0
    %v3693 = vsub.f32 %v3684, 1.0
    %v3694 = vsub.f32 %v3686, 1.0
    %v3695 = vsub.f32 %v3688, 1.0
    %v3696 = vsub.f32 %v3690, 1.0
    %v3697 = vsel %vm3667, %v3661, %v3691
    %v3698 = vsel %vm3668, %v3662, %v3692
    %v3699 = vsel %vm3669, %v3663, %v3693
    %v3700 = vsel %vm3670, %v3664, %v3694
    %v3701 = vsel %vm3671, %v3665, %v3695
    %v3702 = vsel %vm3672, %v3666, %v3696
    %v3703 = vpack.c.bf16 %v3700, %v3697
    %v3704 = vpack.c.bf16 %v3701, %v3698
    %v3705 = vpack.c.bf16 %v3702, %v3699
    %v3706 = vld [vmem:[%s3] sm:$0xf]
    %v3707 = vld [vmem:[%s3 + $0x4] sm:$0xf]
    %v3708 = vld [vmem:[%s3 + $0x8] sm:$0xf]
    %v3709 = vld [vmem:[%s3 + $0xc] sm:$0xf]
    %v3710 = vld [vmem:[%s3 + $0x10] sm:$0xf]
    %v3711 = vld [vmem:[%s3 + $0x14] sm:$0xf]
    %v3712 = vld [vmem:[%s3 + $0x18] sm:$0xf]
    %v3713 = vld [vmem:[%s3 + $0x1c] sm:$0xf]
    %v3714 = vld [vmem:[%s3 + $0x20] sm:$0xf]
    %v3715 = vld [vmem:[%s3 + $0x24] sm:$0xf]
    %v3716 = vld [vmem:[%s3 + $0x28] sm:$0xf]
    %v3717 = vld [vmem:[%s3 + $0x2c] sm:$0xf]
    %v3718 = vld [vmem:[%s3 + $0x30] sm:$0xf]
    %v3719 = vld [vmem:[%s3 + $0x34] sm:$0xf]
    %v3720 = vld [vmem:[%s3 + $0x38] sm:$0xf]
    %v3721 = vld [vmem:[%s3 + $0x3c] sm:$0xf]
    %v3722 = vld [vmem:[%s3 + $0x40] sm:$0xf]
    %v3723 = vld [vmem:[%s3 + $0x44] sm:$0xf]
    %v3724 = vld [vmem:[%s3 + $0x48] sm:$0xf]
    %v3725 = vld [vmem:[%s3 + $0x4c] sm:$0xf]
    %v3726 = vld [vmem:[%s3 + $0x50] sm:$0xf]
    %v3727 = vld [vmem:[%s3 + $0x54] sm:$0xf]
    %v3728 = vld [vmem:[%s3 + $0x58] sm:$0xf]
    %v3729 = vld [vmem:[%s3 + $0x5c] sm:$0xf]
    %v3730 = vld [vmem:[%s3 + $0x60] sm:$0xf]
    %v3731 = vld [vmem:[%s3 + $0x64] sm:$0xf]
    %v3732 = vld [vmem:[%s3 + $0x68] sm:$0xf]
    %v3733 = vld [vmem:[%s3 + $0x6c] sm:$0xf]
    %v3734 = vld [vmem:[%s3 + $0x70] sm:$0xf]
    %v3735 = vld [vmem:[%s3 + $0x74] sm:$0xf]
    %v3736 = vld [vmem:[%s3 + $0x78] sm:$0xf]
    %v3737 = vld [vmem:[%s3 + $0x7c] sm:$0xf]
    %v3738 = vld [vmem:[%s3 + $0x80] sm:$0xf]
    %v3739 = vld [vmem:[%s3 + $0x84] sm:$0xf]
    %v3740 = vld [vmem:[%s3 + $0x88] sm:$0xf]
    %v3741 = vld [vmem:[%s3 + $0x8c] sm:$0xf]
    %v3742 = vld [vmem:[%s3 + $0x90] sm:$0xf]
    %v3743 = vld [vmem:[%s3 + $0x94] sm:$0xf]
    %v3744 = vld [vmem:[%s3 + $0x98] sm:$0xf]
    %v3745 = vld [vmem:[%s3 + $0x9c] sm:$0xf]
    %v3746 = vld [vmem:[%s3 + $0xa0] sm:$0xf]
    %v3747 = vld [vmem:[%s3 + $0xa4] sm:$0xf]
    %v3748 = vld [vmem:[%s3 + $0xa8] sm:$0xf]
    %v3749 = vld [vmem:[%s3 + $0xac] sm:$0xf]
    %v3750 = vld [vmem:[%s3 + $0xb0] sm:$0xf]
    %v3751 = vld [vmem:[%s3 + $0xb4] sm:$0xf]
    %v3752 = vld [vmem:[%s3 + $0xb8] sm:$0xf]
    %v3753 = vld [vmem:[%s3 + $0xbc] sm:$0xf]
    %v3754 = vld [vmem:[%s3 + $0xc0] sm:$0xf]
    %v3755 = vld [vmem:[%s3 + $0xc4] sm:$0xf]
    %v3756 = vld [vmem:[%s3 + $0xc8] sm:$0xf]
    %v3757 = vld [vmem:[%s3 + $0xcc] sm:$0xf]
    %v3758 = vld [vmem:[%s3 + $0xd0] sm:$0xf]
    %v3759 = vld [vmem:[%s3 + $0xd4] sm:$0xf]
    %v3760 = vld [vmem:[%s3 + $0xd8] sm:$0xf]
    %v3761 = vld [vmem:[%s3 + $0xdc] sm:$0xf]
    %v3762 = vld [vmem:[%s3 + $0xe0] sm:$0xf]
    %v3763 = vld [vmem:[%s3 + $0xe4] sm:$0xf]
    %v3764 = vld [vmem:[%s3 + $0xe8] sm:$0xf]
    %v3765 = vld [vmem:[%s3 + $0xec] sm:$0xf]
    %v3766 = vld [vmem:[%s3 + $0xf0] sm:$0xf]
    %v3767 = vld [vmem:[%s3 + $0xf4] sm:$0xf]
    %v3768 = vld [vmem:[%s3 + $0xf8] sm:$0xf]
    %v3769 = vld [vmem:[%s3 + $0xfc] sm:$0xf]
    %v3770 = vld [vmem:[%s3 + $0x100] sm:$0xf]
    %v3771 = vld [vmem:[%s3 + $0x104] sm:$0xf]
    %v3772 = vld [vmem:[%s3 + $0x108] sm:$0xf]
    %v3773 = vld [vmem:[%s3 + $0x10c] sm:$0xf]
    %v3774 = vld [vmem:[%s3 + $0x110] sm:$0xf]
    %v3775 = vld [vmem:[%s3 + $0x114] sm:$0xf]
    %v3776 = vld [vmem:[%s3 + $0x118] sm:$0xf]
    %v3777 = vld [vmem:[%s3 + $0x11c] sm:$0xf]
    %v3778 = vld [vmem:[%s3 + $0x120] sm:$0xf]
    %v3779 = vld [vmem:[%s3 + $0x124] sm:$0xf]
    %v3780 = vld [vmem:[%s3 + $0x128] sm:$0xf]
    %v3781 = vld [vmem:[%s3 + $0x12c] sm:$0xf]
    %v3782 = vld [vmem:[%s3 + $0x130] sm:$0xf]
    %v3783 = vld [vmem:[%s3 + $0x134] sm:$0xf]
    %v3784 = vld [vmem:[%s3 + $0x138] sm:$0xf]
    %v3785 = vld [vmem:[%s3 + $0x13c] sm:$0xf]
    %v3786 = vld [vmem:[%s3 + $0x140] sm:$0xf]
    %v3787 = vld [vmem:[%s3 + $0x144] sm:$0xf]
    %v3788 = vld [vmem:[%s3 + $0x148] sm:$0xf]
    %v3789 = vld [vmem:[%s3 + $0x14c] sm:$0xf]
    %v3790 = vld [vmem:[%s3 + $0x150] sm:$0xf]
    %v3791 = vld [vmem:[%s3 + $0x154] sm:$0xf]
    %v3792 = vld [vmem:[%s3 + $0x158] sm:$0xf]
    %v3793 = vld [vmem:[%s3 + $0x15c] sm:$0xf]
    %v3794 = vld [vmem:[%s3 + $0x160] sm:$0xf]
    %v3795 = vld [vmem:[%s3 + $0x164] sm:$0xf]
    %v3796 = vld [vmem:[%s3 + $0x168] sm:$0xf]
    %v3797 = vld [vmem:[%s3 + $0x16c] sm:$0xf]
    %v3798 = vld [vmem:[%s3 + $0x170] sm:$0xf]
    %v3799 = vld [vmem:[%s3 + $0x174] sm:$0xf]
    %v3800 = vld [vmem:[%s3 + $0x178] sm:$0xf]
    %v3801 = vld [vmem:[%s3 + $0x17c] sm:$0xf]
    %v3802 = vld [vmem:[%s4] sm:$0x1]
    %v3804 = vlaneseq
    %v3805 = vshrl.u32 %v3804, 7
    %v3806 = vsub.s32 0, %v3805
    %v3807 = vrot.slane %v3802, %v3806
    %v3905 = vunpack.c.l.b16 %v3706
    %v3906 = vunpack.c.l.b16 %v3707
    %v3907 = vunpack.c.l.b16 %v3708
    %v3908 = vunpack.c.l.b16 %v3709
    %v3909 = vunpack.c.l.b16 %v3710
    %v3910 = vunpack.c.l.b16 %v3711
    %v3911 = vunpack.c.l.b16 %v3712
    %v3912 = vunpack.c.l.b16 %v3713
    %v3913 = vunpack.c.l.b16 %v3714
    %v3914 = vunpack.c.l.b16 %v3715
    %v3915 = vunpack.c.l.b16 %v3716
    %v3916 = vunpack.c.l.b16 %v3717
    %v3917 = vunpack.c.l.b16 %v3718
    %v3918 = vunpack.c.l.b16 %v3719
    %v3919 = vunpack.c.l.b16 %v3720
    %v3920 = vunpack.c.l.b16 %v3721
    %v3921 = vunpack.c.l.b16 %v3722
    %v3922 = vunpack.c.l.b16 %v3723
    %v3923 = vunpack.c.l.b16 %v3724
    %v3924 = vunpack.c.l.b16 %v3725
    %v3925 = vunpack.c.l.b16 %v3726
    %v3926 = vunpack.c.l.b16 %v3727
    %v3927 = vunpack.c.l.b16 %v3728
    %v3928 = vunpack.c.l.b16 %v3729
    %v3929 = vunpack.c.l.b16 %v3730
    %v3930 = vunpack.c.l.b16 %v3731
    %v3931 = vunpack.c.l.b16 %v3732
    %v3932 = vunpack.c.l.b16 %v3733
    %v3933 = vunpack.c.l.b16 %v3734
    %v3934 = vunpack.c.l.b16 %v3735
    %v3935 = vunpack.c.l.b16 %v3736
    %v3936 = vunpack.c.l.b16 %v3737
    %v3937 = vunpack.c.l.b16 %v3738
    %v3938 = vunpack.c.l.b16 %v3739
    %v3939 = vunpack.c.l.b16 %v3740
    %v3940 = vunpack.c.l.b16 %v3741
    %v3941 = vunpack.c.l.b16 %v3742
    %v3942 = vunpack.c.l.b16 %v3743
    %v3943 = vunpack.c.l.b16 %v3744
    %v3944 = vunpack.c.l.b16 %v3745
    %v3945 = vunpack.c.l.b16 %v3746
    %v3946 = vunpack.c.l.b16 %v3747
    %v3947 = vunpack.c.l.b16 %v3748
    %v3948 = vunpack.c.l.b16 %v3749
    %v3949 = vunpack.c.l.b16 %v3750
    %v3950 = vunpack.c.l.b16 %v3751
    %v3951 = vunpack.c.l.b16 %v3752
    %v3952 = vunpack.c.l.b16 %v3753
    %v3953 = vunpack.c.l.b16 %v3754
    %v3954 = vunpack.c.l.b16 %v3755
    %v3955 = vunpack.c.l.b16 %v3756
    %v3956 = vunpack.c.l.b16 %v3757
    %v3957 = vunpack.c.l.b16 %v3758
    %v3958 = vunpack.c.l.b16 %v3759
    %v3959 = vunpack.c.l.b16 %v3760
    %v3960 = vunpack.c.l.b16 %v3761
    %v3961 = vunpack.c.l.b16 %v3762
    %v3962 = vunpack.c.l.b16 %v3763
    %v3963 = vunpack.c.l.b16 %v3764
    %v3964 = vunpack.c.l.b16 %v3765
    %v3965 = vunpack.c.l.b16 %v3766
    %v3966 = vunpack.c.l.b16 %v3767
    %v3967 = vunpack.c.l.b16 %v3768
    %v3968 = vunpack.c.l.b16 %v3769
    %v3969 = vunpack.c.l.b16 %v3770
    %v3970 = vunpack.c.l.b16 %v3771
    %v3971 = vunpack.c.l.b16 %v3772
    %v3972 = vunpack.c.l.b16 %v3773
    %v3973 = vunpack.c.l.b16 %v3774
    %v3974 = vunpack.c.l.b16 %v3775
    %v3975 = vunpack.c.l.b16 %v3776
    %v3976 = vunpack.c.l.b16 %v3777
    %v3977 = vunpack.c.l.b16 %v3778
    %v3978 = vunpack.c.l.b16 %v3779
    %v3979 = vunpack.c.l.b16 %v3780
    %v3980 = vunpack.c.l.b16 %v3781
    %v3981 = vunpack.c.l.b16 %v3782
    %v3982 = vunpack.c.l.b16 %v3783
    %v3983 = vunpack.c.l.b16 %v3784
    %v3984 = vunpack.c.l.b16 %v3785
    %v3985 = vunpack.c.l.b16 %v3786
    %v3986 = vunpack.c.l.b16 %v3787
    %v3987 = vunpack.c.l.b16 %v3788
    %v3988 = vunpack.c.l.b16 %v3789
    %v3989 = vunpack.c.l.b16 %v3790
    %v3990 = vunpack.c.l.b16 %v3791
    %v3991 = vunpack.c.l.b16 %v3792
    %v3992 = vunpack.c.l.b16 %v3793
    %v3993 = vunpack.c.l.b16 %v3794
    %v3994 = vunpack.c.l.b16 %v3795
    %v3995 = vunpack.c.l.b16 %v3796
    %v3996 = vunpack.c.l.b16 %v3797
    %v3997 = vunpack.c.l.b16 %v3798
    %v3998 = vunpack.c.l.b16 %v3799
    %v3999 = vunpack.c.l.b16 %v3800
    %v4000 = vunpack.c.l.b16 %v3801
    %v4001 = vpack.c.b16 %v3906, %v3905
    %v4002 = vpack.c.b16 %v3908, %v3907
    %v4003 = vpack.c.b16 %v3910, %v3909
    %v4004 = vpack.c.b16 %v3912, %v3911
    %v4005 = vpack.c.b16 %v3914, %v3913
    %v4006 = vpack.c.b16 %v3916, %v3915
    %v4007 = vpack.c.b16 %v3918, %v3917
    %v4008 = vpack.c.b16 %v3920, %v3919
    %v4009 = vpack.c.b16 %v3922, %v3921
    %v4010 = vpack.c.b16 %v3924, %v3923
    %v4011 = vpack.c.b16 %v3926, %v3925
    %v4012 = vpack.c.b16 %v3928, %v3927
    %v4013 = vpack.c.b16 %v3930, %v3929
    %v4014 = vpack.c.b16 %v3932, %v3931
    %v4015 = vpack.c.b16 %v3934, %v3933
    %v4016 = vpack.c.b16 %v3936, %v3935
    %v4017 = vpack.c.b16 %v3938, %v3937
    %v4018 = vpack.c.b16 %v3940, %v3939
    %v4019 = vpack.c.b16 %v3942, %v3941
    %v4020 = vpack.c.b16 %v3944, %v3943
    %v4021 = vpack.c.b16 %v3946, %v3945
    %v4022 = vpack.c.b16 %v3948, %v3947
    %v4023 = vpack.c.b16 %v3950, %v3949
    %v4024 = vpack.c.b16 %v3952, %v3951
    %v4025 = vpack.c.b16 %v3954, %v3953
    %v4026 = vpack.c.b16 %v3956, %v3955
    %v4027 = vpack.c.b16 %v3958, %v3957
    %v4028 = vpack.c.b16 %v3960, %v3959
    %v4029 = vpack.c.b16 %v3962, %v3961
    %v4030 = vpack.c.b16 %v3964, %v3963
    %v4031 = vpack.c.b16 %v3966, %v3965
    %v4032 = vpack.c.b16 %v3968, %v3967
    %v4033 = vpack.c.b16 %v3970, %v3969
    %v4034 = vpack.c.b16 %v3972, %v3971
    %v4035 = vpack.c.b16 %v3974, %v3973
    %v4036 = vpack.c.b16 %v3976, %v3975
    %v4037 = vpack.c.b16 %v3978, %v3977
    %v4038 = vpack.c.b16 %v3980, %v3979
    %v4039 = vpack.c.b16 %v3982, %v3981
    %v4040 = vpack.c.b16 %v3984, %v3983
    %v4041 = vpack.c.b16 %v3986, %v3985
    %v4042 = vpack.c.b16 %v3988, %v3987
    %v4043 = vpack.c.b16 %v3990, %v3989
    %v4044 = vpack.c.b16 %v3992, %v3991
    %v4045 = vpack.c.b16 %v3994, %v3993
    %v4046 = vpack.c.b16 %v3996, %v3995
    %v4047 = vpack.c.b16 %v3998, %v3997
    %v4048 = vpack.c.b16 %v4000, %v3999
    %4097 = vmatprep.subr.bf16.mxu0 0
    %4098 = vmatpush1.bf16.msra.mxu0 %v4001
    %4099 = vmatprep.subr.bf16.mxu0 0
    %4100 = vmatpush1.bf16.msra.mxu0 %v4002
    %4101 = vmatprep.subr.bf16.mxu0 0
    %4102 = vmatpush1.bf16.msra.mxu0 %v4003
    %4103 = vmatprep.subr.bf16.mxu0 0
    %4104 = vmatpush1.bf16.msra.mxu0 %v4004
    %4105 = vmatprep.subr.bf16.mxu0 0
    %4106 = vmatpush1.bf16.msra.mxu0 %v4005
    %4107 = vmatprep.subr.bf16.mxu0 0
    %4108 = vmatpush1.bf16.msra.mxu0 %v4006
    %4109 = vmatprep.subr.bf16.mxu0 0
    %4110 = vmatpush1.bf16.msra.mxu0 %v4007
    %4111 = vmatprep.subr.bf16.mxu0 0
    %4112 = vmatpush1.bf16.msra.mxu0 %v4008
    %4113 = vmatprep.subr.bf16.mxu0 0
    %4114 = vmatpush1.bf16.msra.mxu0 %v4009
    %4115 = vmatprep.subr.bf16.mxu0 0
    %4116 = vmatpush1.bf16.msra.mxu0 %v4010
    %4117 = vmatprep.subr.bf16.mxu0 0
    %4118 = vmatpush1.bf16.msra.mxu0 %v4011
    %4119 = vmatprep.subr.bf16.mxu0 0
    %4120 = vmatpush1.bf16.msra.mxu0 %v4012
    %4121 = vmatprep.subr.bf16.mxu0 0
    %4122 = vmatpush1.bf16.msra.mxu0 %v4013
    %4123 = vmatprep.subr.bf16.mxu0 0
    %4124 = vmatpush1.bf16.msra.mxu0 %v4014
    %4125 = vmatprep.subr.bf16.mxu0 0
    %4126 = vmatpush1.bf16.msra.mxu0 %v4015
    %4127 = vmatprep.subr.bf16.mxu0 0
    %4128 = vmatpush1.bf16.msra.mxu0 %v4016
    %4129 = vmatprep.mubr.bf16.mxu0 %v3028
    %4130 = vmatmul.mubr.bf16.gmra.mrb[0].mxu0 %v3027
    %v4131 = vpop.f32.mrb[0].mxu0
    %v4132 = vadd.f32 %v3807, %v4131
    %v4133 = vpop.f32.mrb[0].mxu0
    %v4134 = vpop.f32.mrb[0].mxu0
    %v4135 = vadd.f32 %v3807, %v4134
    %v4136 = vpop.f32.mrb[0].mxu0
    %4137 = vdwg.mxu0
    %4138 = vmatprep.subr.bf16.mxu0 0
    %4139 = vmatpush1.bf16.msra.mxu0 %v4017
    %4140 = vmatprep.subr.bf16.mxu0 0
    %4141 = vmatpush1.bf16.msra.mxu0 %v4018
    %4142 = vmatprep.subr.bf16.mxu0 0
    %4143 = vmatpush1.bf16.msra.mxu0 %v4019
    %4144 = vmatprep.subr.bf16.mxu0 0
    %4145 = vmatpush1.bf16.msra.mxu0 %v4020
    %4146 = vmatprep.subr.bf16.mxu0 0
    %4147 = vmatpush1.bf16.msra.mxu0 %v4021
    %4148 = vmatprep.subr.bf16.mxu0 0
    %4149 = vmatpush1.bf16.msra.mxu0 %v4022
    %4150 = vmatprep.subr.bf16.mxu0 0
    %4151 = vmatpush1.bf16.msra.mxu0 %v4023
    %4152 = vmatprep.subr.bf16.mxu0 0
    %4153 = vmatpush1.bf16.msra.mxu0 %v4024
    %4154 = vmatprep.subr.bf16.mxu0 0
    %4155 = vmatpush1.bf16.msra.mxu0 %v4025
    %4156 = vmatprep.subr.bf16.mxu0 0
    %4157 = vmatpush1.bf16.msra.mxu0 %v4026
    %4158 = vmatprep.subr.bf16.mxu0 0
    %4159 = vmatpush1.bf16.msra.mxu0 %v4027
    %4160 = vmatprep.subr.bf16.mxu0 0
    %4161 = vmatpush1.bf16.msra.mxu0 %v4028
    %4162 = vmatprep.subr.bf16.mxu0 0
    %4163 = vmatpush1.bf16.msra.mxu0 %v4029
    %4164 = vmatprep.subr.bf16.mxu0 0
    %4165 = vmatpush1.bf16.msra.mxu0 %v4030
    %4166 = vmatprep.subr.bf16.mxu0 0
    %4167 = vmatpush1.bf16.msra.mxu0 %v4031
    %4168 = vmatprep.subr.bf16.mxu0 0
    %4169 = vmatpush1.bf16.msra.mxu0 %v4032
    %4170 = vmatprep.mubr.bf16.mxu0 %v3703
    %4171 = vmatmul.mubr.bf16.gmra.mrb[0].mxu0 %v3029
    %v4172 = vpop.f32.mrb[0].mxu0
    %v4173 = vadd.f32 %v4132, %v4172
    %v4174 = vpop.f32.mrb[0].mxu0
    %v4175 = vpop.f32.mrb[0].mxu0
    %v4176 = vadd.f32 %v4135, %v4175
    %v4177 = vpop.f32.mrb[0].mxu0
    %4178 = vdwg.mxu0
    %4179 = vmatprep.subr.bf16.mxu0 0
    %4180 = vmatpush1.bf16.msra.mxu0 %v4033
    %4181 = vmatprep.subr.bf16.mxu0 0
    %4182 = vmatpush1.bf16.msra.mxu0 %v4034
    %4183 = vmatprep.subr.bf16.mxu0 0
    %4184 = vmatpush1.bf16.msra.mxu0 %v4035
    %4185 = vmatprep.subr.bf16.mxu0 0
    %4186 = vmatpush1.bf16.msra.mxu0 %v4036
    %4187 = vmatprep.subr.bf16.mxu0 0
    %4188 = vmatpush1.bf16.msra.mxu0 %v4037
    %4189 = vmatprep.subr.bf16.mxu0 0
    %4190 = vmatpush1.bf16.msra.mxu0 %v4038
    %4191 = vmatprep.subr.bf16.mxu0 0
    %4192 = vmatpush1.bf16.msra.mxu0 %v4039
    %4193 = vmatprep.subr.bf16.mxu0 0
    %4194 = vmatpush1.bf16.msra.mxu0 %v4040
    %4195 = vmatprep.subr.bf16.mxu0 0
    %4196 = vmatpush1.bf16.msra.mxu0 %v4041
    %4197 = vmatprep.subr.bf16.mxu0 0
    %4198 = vmatpush1.bf16.msra.mxu0 %v4042
    %4199 = vmatprep.subr.bf16.mxu0 0
    %4200 = vmatpush1.bf16.msra.mxu0 %v4043
    %4201 = vmatprep.subr.bf16.mxu0 0
    %4202 = vmatpush1.bf16.msra.mxu0 %v4044
    %4203 = vmatprep.subr.bf16.mxu0 0
    %4204 = vmatpush1.bf16.msra.mxu0 %v4045
    %4205 = vmatprep.subr.bf16.mxu0 0
    %4206 = vmatpush1.bf16.msra.mxu0 %v4046
    %4207 = vmatprep.subr.bf16.mxu0 0
    %4208 = vmatpush1.bf16.msra.mxu0 %v4047
    %4209 = vmatprep.subr.bf16.mxu0 0
    %4210 = vmatpush1.bf16.msra.mxu0 %v4048
    %4211 = vmatprep.mubr.bf16.mxu0 %v3705
    %4212 = vmatmul.mubr.bf16.gmra.mrb[0].mxu0 %v3704
    %v4213 = vpop.f32.mrb[0].mxu0
    %v4214 = vadd.f32 %v4173, %v4213
    %v4215 = vpop.f32.mrb[0].mxu0
    %v4216 = vpop.f32.mrb[0].mxu0
    %v4217 = vadd.f32 %v4176, %v4216
    %v4218 = vpop.f32.mrb[0].mxu0
    %4219 = vdwg.mxu0
    %v4220 = vld [vmem:[%s0] sm:$0xff]
    %v4221 = vld [vmem:[%s0 + $0x8] sm:$0xff]
    %v4222 = vsub.f32 %v4220, %v4214
    %v4223 = vsub.f32 %v4221, %v4217
    %4224 = vst [vmem:[%s5] sm:$0xff] %v4222
    %4225 = vst [vmem:[%s5 + $0x8] sm:$0xff] %v4223
    // Predicated region
    $region30: #{_cell_ar_call.1} parent=1 // pred_check
      _
    $region31: #{_cell_ar_call.1} parent=1 // pred_check_branch
      %4227 = sbr.rel (0) target = $region33
    $region32: #{_cell_ar_call.1} parent=1 // pred_region
      _
    $region33: #{_cell_ar_call.1} parent=1 // pred_fallthru
      _
    // Predicated region
    $region34: #{_cell_ar_call.1} parent=1 // pred_check
      _
    $region35: #{_cell_ar_call.1} parent=1 // pred_check_branch
      %4229 = sbr.rel (0) target = $region37
    $region36: #{_cell_ar_call.1} parent=1 // pred_region
      _
    $region37: #{_cell_ar_call.1} parent=1 // pred_fallthru
      _
    %4230 = vsyncpa [#allocation5], 1
    %4231 = vsyncpa [#allocation7], 1

</llo_original>
